<compile_context>
chip_gen: v5e
topology: v5e:2x2
jax: 0.10.0
libtpu: 0.0.40
codegen_flags: <defaults>
</compile_context>

<pallas_src>
import jax
import jax.numpy as jnp
import numpy as np
from jax.experimental import pallas as pl
from jax.experimental.pallas import tpu as pltpu


def _round_up(x, m):
    return (x + m - 1) // m * m


def _tpu_vmem_bytes():
    """Per-TensorCore VMEM capacity; conservative fallback if query fails."""
    try:
        return int(pltpu.get_tpu_info().vmem_capacity_bytes)
    except Exception:
        return 64 * 1024 * 1024


def _pick_batch_block(Bp, two_tc):
    # 2-way megacore split only on 2-TC chips (v7x) and only when each half
    # still feeds the MXU well; on single-TC chips splitting is pure overhead.
    if two_tc and Bp % 16 == 0 and Bp // 2 >= 128:
        return Bp // 2
    return Bp


def _pick_time_chunk(S, TB, Hp, y_itemsize, mxu_itemsize, cap, budget_bytes):
    """Largest divisor of S <= cap whose VMEM working set fits the budget."""
    whh = Hp * 4 * Hp * mxu_itemsize                      # single-buffered
    scratch = 2 * TB * Hp * 4                             # f32 h/c state
    state = 2 * (TB * Hp * y_itemsize) * 2                # h0/c0 blocks (x2 buf)
    cout = TB * Hp * y_itemsize * 2
    for tc in range(min(S, cap), 0, -1):
        if S % tc:
            continue
        gates = tc * TB * 4 * Hp * mxu_itemsize * 2       # double-buffered
        y_blk = tc * TB * Hp * y_itemsize * 2
        if gates + y_blk + whh + scratch + state + cout <= budget_bytes:
            return tc
    return 1


def pack_lstm_weights(w_ih, w_hh, mxu_dtype=jnp.bfloat16):
    """One-time weight re-packing (hoisted out of the forward path).

    Gate g of W^T occupies columns [g*Hp, g*Hp + H); padded rows/cols are zero
    so padded hidden lanes stay exactly zero through the recurrence.
    """
    fourH, D = w_ih.shape
    H = fourH // 4
    Hp = _round_up(H, 128)
    # (4H, D) -> (D, 4, H) -> pad H->Hp -> (D, 4*Hp)
    wih_g = jnp.transpose(w_ih.reshape(4, H, D), (2, 0, 1))
    wih_t = jnp.pad(wih_g, ((0, 0), (0, 0), (0, Hp - H))).reshape(D, 4 * Hp)
    # (4H, H) -> (H_in, 4, H_out) -> pad both H->Hp -> (Hp, 4*Hp)
    whh_g = jnp.transpose(w_hh.reshape(4, H, H), (2, 0, 1))
    whh_t = jnp.pad(whh_g, ((0, Hp - H), (0, 0), (0, Hp - H))).reshape(Hp, 4 * Hp)
    return dict(wih_t=wih_t, whh_t=whh_t.astype(mxu_dtype),
                H=H, Hp=Hp, mxu_dtype=jnp.dtype(mxu_dtype))


def lstm_recurrent_kernel(gx_ref, h0_ref, c0_ref, whh_ref,
                          y_ref, c_out_ref, h_sc, c_sc):
    """Grid = (batch blocks [parallel], time chunks [sequential]).

    gx_ref : (TC, TB, 4*Hp) mxu_dtype   precomputed x @ W_ih^T for this chunk
    whh_ref: (Hp, 4*Hp)     mxu_dtype   recurrent weight (constant, resident)
    h_sc/c_sc: (TB, Hp) f32             recurrent state carried across chunks
    """
    t = pl.program_id(1)
    Hp = h_sc.shape[-1]
    TC = gx_ref.shape[0]

    @pl.when(t == 0)
    def _():
        h_sc[...] = h0_ref[0].astype(jnp.float32)
        c_sc[...] = c0_ref[0].astype(jnp.float32)

    def step(i, carry):
        # Only the h @ W_hh matmul is on the sequential path; MXU operands in
        # the weight dtype (bf16), f32 accumulation and f32 gate math.
        gates = gx_ref[i].astype(jnp.float32) + jnp.dot(
            h_sc[...].astype(whh_ref.dtype), whh_ref[...],
            preferred_element_type=jnp.float32)
        i_g = jax.nn.sigmoid(gates[:, 0 * Hp:1 * Hp])
        f_g = jax.nn.sigmoid(gates[:, 1 * Hp:2 * Hp])
        g_g = jnp.tanh(gates[:, 2 * Hp:3 * Hp])
        o_g = jax.nn.sigmoid(gates[:, 3 * Hp:4 * Hp])
        c_new = f_g * c_sc[...] + i_g * g_g
        h_new = o_g * jnp.tanh(c_new)
        h_sc[...] = h_new
        c_sc[...] = c_new
        y_ref[i] = h_new.astype(y_ref.dtype)
        return carry

    jax.lax.fori_loop(0, TC, step, 0, unroll=True)

    # Final-c block index is constant over t -> VMEM-resident; only the write
    # on the last time chunk matters.
    @pl.when(t == pl.num_programs(1) - 1)
    def _():
        c_out_ref[...] = c_sc[...].astype(c_out_ref.dtype)


def depth_forward(x, h0, c0, params, *, time_chunk=None):
    """Equivalent of Depth.forward: y, (h, c) = LSTM(x, (h, c)), bias=False."""
    S, B, D = x.shape
    H, Hp = params["H"], params["Hp"]
    mxu_dtype = params["mxu_dtype"]
    wih_t, whh_t = params["wih_t"], params["whh_t"]

    # Generation-aware budgets: v7x ~64 MiB/TC (2 TCs), v5e/v6e 128 MiB (1 TC).
    vmem_cap = _tpu_vmem_bytes()
    small_vmem = vmem_cap <= 96 * 1024 * 1024
    vmem_limit = (52 if small_vmem else 100) * 1024 * 1024
    tc_cap = 16 if small_vmem else 32

    # Pad batch to a full sublane group (multiple of 8).
    Bp = _round_up(max(B, 1), 8)
    TB = _pick_batch_block(Bp, two_tc=small_vmem)
    nb = Bp // TB

    y_itemsize = jnp.dtype(x.dtype).itemsize
    mxu_itemsize = jnp.dtype(mxu_dtype).itemsize
    TC = time_chunk or _pick_time_chunk(
        S, TB, Hp, y_itemsize, mxu_itemsize, tc_cap,
        vmem_limit - 8 * 1024 * 1024)
    nt = S // TC

    # Hoisted input projection: one big (S*Bp, D) x (D, 4*Hp) matmul in XLA,
    # then the gates_x stream (the dominant HBM traffic) is narrowed to bf16.
    x_p = jnp.pad(x, ((0, 0), (0, Bp - B), (0, 0))) if Bp != B else x
    gates_x = jnp.einsum('sbd,dg->sbg', x_p, wih_t,
                         preferred_element_type=jnp.float32).astype(mxu_dtype)

    h0p = jnp.zeros((1, Bp, Hp), h0.dtype).at[:, :B, :H].set(h0)
    c0p = jnp.zeros((1, Bp, Hp), c0.dtype).at[:, :B, :H].set(c0)

    def run(whh_pipeline_mode):
        if whh_pipeline_mode is None:
            whh_spec = pl.BlockSpec((Hp, 4 * Hp), lambda b, t: (0, 0))
        else:
            whh_spec = pl.BlockSpec((Hp, 4 * Hp), lambda b, t: (0, 0),
                                    pipeline_mode=whh_pipeline_mode)
        return pl.pallas_call(
            lstm_recurrent_kernel,
            out_shape=(jax.ShapeDtypeStruct((S, Bp, Hp), x.dtype),
                       jax.ShapeDtypeStruct((Bp, Hp), x.dtype)),
            grid_spec=pltpu.PrefetchScalarGridSpec(
                num_scalar_prefetch=0,
                grid=(nb, nt),
                in_specs=[
                    pl.BlockSpec((TC, TB, 4 * Hp), lambda b, t: (t, b, 0)),
                    pl.BlockSpec((1, TB, Hp), lambda b, t: (0, b, 0)),
                    pl.BlockSpec((1, TB, Hp), lambda b, t: (0, b, 0)),
                    whh_spec,
                ],
                out_specs=[
                    pl.BlockSpec((TC, TB, Hp), lambda b, t: (t, b, 0)),
                    pl.BlockSpec((TB, Hp), lambda b, t: (b, 0)),
                ],
                scratch_shapes=[pltpu.VMEM((TB, Hp), jnp.float32),
                                pltpu.VMEM((TB, Hp), jnp.float32)],
            ),
            compiler_params=pltpu.CompilerParams(
                dimension_semantics=("parallel", "arbitrary"),
                vmem_limit_bytes=vmem_limit),
        )(gates_x, h0p, c0p, whh_t)

    try:
        # Constant W_hh block: single-buffer it (double-buffering buys nothing).
        y_p, c_p = run(pl.Buffered(1))
    except Exception:
        # Fallback for jax versions where Buffered(1) is rejected.
        y_p, c_p = run(None)

    y = y_p[:, :B, :H]
    hT = y[S - 1:S]                 # final hidden state == last output step
    cT = c_p[:B, :H][None]
    return y, (hT, cT)


def _reference_lstm(x, h0, c0, w_ih, w_hh):
    """Pure-JAX reference (PyTorch LSTM semantics, bias=False)."""
    H = h0.shape[-1]

    def step(carry, x_t):
        h, c = carry
        gates = x_t @ w_ih.T + h @ w_hh.T
        i = jax.nn.sigmoid(gates[:, 0 * H:1 * H])
        f = jax.nn.sigmoid(gates[:, 1 * H:2 * H])
        g = jnp.tanh(gates[:, 2 * H:3 * H])
        o = jax.nn.sigmoid(gates[:, 3 * H:4 * H])
        c = f * c + i * g
        h = o * jnp.tanh(c)
        return (h, c), h

    (hT, cT), ys = jax.lax.scan(step, (h0[0], c0[0]), x)
    return ys, (hT[None], cT[None])


if __name__ == "__main__":
    key = jax.random.PRNGKey(0)
    S, B, D, H = 8, 2, 4, 32          # seq, batch, in_dim, hidden

    k1, k2, k3, k4, k5 = jax.random.split(key, 5)
    bound = 1.0 / np.sqrt(H)          # PyTorch LSTM init: U(-1/sqrt(H), 1/sqrt(H))
    w_ih = jax.random.uniform(k1, (4 * H, D), jnp.float32, -bound, bound)
    w_hh = jax.random.uniform(k2, (4 * H, H), jnp.float32, -bound, bound)

    x = jax.random.normal(k3, (S, B, D), jnp.float32)
    h0 = jax.random.normal(k4, (1, B, H), jnp.float32)
    c0 = jax.random.normal(k5, (1, B, H), jnp.float32)

    y_ref, (h_ref, c_ref) = _reference_lstm(x, h0, c0, w_ih, w_hh)

    # 1) Exact-precision path (f32 MXU operands): tight tolerance.
    params_f32 = pack_lstm_weights(w_ih, w_hh, mxu_dtype=jnp.float32)
    y, (hT, cT) = depth_forward(x, h0, c0, params_f32)
    jax.block_until_ready((y, hT, cT))
    np.testing.assert_allclose(np.asarray(y), np.asarray(y_ref), atol=1e-5, rtol=1e-5)
    np.testing.assert_allclose(np.asarray(hT), np.asarray(h_ref), atol=1e-5, rtol=1e-5)
    np.testing.assert_allclose(np.asarray(cT), np.asarray(c_ref), atol=1e-5, rtol=1e-5)

    # 2) Default fast path (bf16 MXU operands / gates_x stream, per perf review):
    #    gate math and state stay f32, so only bf16-level rounding remains.
    params_bf16 = pack_lstm_weights(w_ih, w_hh)           # bf16 default
    y2, (hT2, cT2) = depth_forward(x, h0, c0, params_bf16)
    jax.block_until_ready((y2, hT2, cT2))
    np.testing.assert_allclose(np.asarray(y2), np.asarray(y_ref), atol=5e-2, rtol=5e-2)
    np.testing.assert_allclose(np.asarray(hT2), np.asarray(h_ref), atol=5e-2, rtol=5e-2)
    np.testing.assert_allclose(np.asarray(cT2), np.asarray(c_ref), atol=5e-2, rtol=5e-2)

    print("KERNEL_OK")
</pallas_src>

<mosaic_0001>
module attributes {stable_mosaic.version = 11 : i64} {
  func.func @lstm_recurrent_kernel(%arg0: i32, %arg1: i32, %arg2: memref<8x8x512xf32, #tpu.memory_space<vmem>>, %arg3: memref<1x8x128xf32, #tpu.memory_space<vmem>>, %arg4: memref<1x8x128xf32, #tpu.memory_space<vmem>>, %arg5: memref<128x512xf32, #tpu.memory_space<vmem>>, %arg6: memref<8x8x128xf32, #tpu.memory_space<vmem>>, %arg7: memref<8x128xf32, #tpu.memory_space<vmem>>, %arg8: memref<8x128xf32, #tpu.memory_space<vmem>>, %arg9: memref<8x128xf32, #tpu.memory_space<vmem>>) attributes {dimension_semantics = [#tpu.dimension_semantics<parallel>, #tpu.dimension_semantics<arbitrary>], iteration_bounds = array<i64: 1, 1>, scalar_prefetch = 0 : i64, scratch_operands = 2 : i64, tpu.core_type = #tpu.core_type<tc>, window_params = [{transform_indices = @transform_0, window_bounds = array<i64: 8, 8, 512>}, {transform_indices = @transform_1, window_bounds = array<i64: 1, 8, 128>}, {transform_indices = @transform_2, window_bounds = array<i64: 1, 8, 128>}, {pipeline_mode = #tpu.pipeline_mode<synchronous>, transform_indices = @transform_3, window_bounds = array<i64: 128, 512>}, {transform_indices = @transform_4, window_bounds = array<i64: 8, 8, 128>}, {transform_indices = @transform_5, window_bounds = array<i64: 8, 128>}]} {
    %c0_i32 = arith.constant 0 : i32
    %0 = arith.cmpi eq, %arg1, %c0_i32 : i32
    %1 = arith.extui %0 : i1 to i32
    %c0_i32_0 = arith.constant 0 : i32
    %2 = arith.cmpi ne, %1, %c0_i32_0 : i32
    scf.if %2 {
      %c0_146 = arith.constant 0 : index
      %c0_147 = arith.constant 0 : index
      %c0_148 = arith.constant 0 : index
      %318 = vector.load %arg3[%c0_146, %c0_147, %c0_148] : memref<1x8x128xf32, #tpu.memory_space<vmem>>, vector<1x8x128xf32>
      %319 = vector.shape_cast %318 : vector<1x8x128xf32> to vector<8x128xf32>
      %c0_149 = arith.constant 0 : index
      %c0_150 = arith.constant 0 : index
      %320 = vector.load %arg8[%c0_149, %c0_150] : memref<8x128xf32, #tpu.memory_space<vmem>>, vector<8x128xf32>
      tpu.vector_store %arg8[%c0_149, %c0_150], %319 {strides = array<i32>} : memref<8x128xf32, #tpu.memory_space<vmem>>, vector<8x128xf32>,
      %c0_151 = arith.constant 0 : index
      %c0_152 = arith.constant 0 : index
      %c0_153 = arith.constant 0 : index
      %321 = vector.load %arg4[%c0_151, %c0_152, %c0_153] : memref<1x8x128xf32, #tpu.memory_space<vmem>>, vector<1x8x128xf32>
      %322 = vector.shape_cast %321 : vector<1x8x128xf32> to vector<8x128xf32>
      %c0_154 = arith.constant 0 : index
      %c0_155 = arith.constant 0 : index
      %323 = vector.load %arg9[%c0_154, %c0_155] : memref<8x128xf32, #tpu.memory_space<vmem>>, vector<8x128xf32>
      tpu.vector_store %arg9[%c0_154, %c0_155], %322 {strides = array<i32>} : memref<8x128xf32, #tpu.memory_space<vmem>>, vector<8x128xf32>,
    } else {
    }
    %c0_i32_1 = arith.constant 0 : i32
    %3 = arith.index_cast %c0_i32_1 : i32 to index
    %c0 = arith.constant 0 : index
    %c0_2 = arith.constant 0 : index
    %4 = vector.load %arg2[%3, %c0, %c0_2] : memref<8x8x512xf32, #tpu.memory_space<vmem>>, vector<1x8x512xf32>
    %5 = vector.shape_cast %4 : vector<1x8x512xf32> to vector<8x512xf32>
    %c0_3 = arith.constant 0 : index
    %c0_4 = arith.constant 0 : index
    %6 = vector.load %arg8[%c0_3, %c0_4] : memref<8x128xf32, #tpu.memory_space<vmem>>, vector<8x128xf32>
    %c0_5 = arith.constant 0 : index
    %c0_6 = arith.constant 0 : index
    %7 = vector.load %arg5[%c0_5, %c0_6] : memref<128x512xf32, #tpu.memory_space<vmem>>, vector<128x512xf32>
    %cst = arith.constant dense<0.000000e+00> : vector<8x512xf32>
    %8 = tpu.matmul %6, %7, %cst {dimension_numbers = #tpu.dot_dimension_numbers<[1], [0], [0], [1], [0, 0, 1, 1], [], []>} : vector<8x128xf32>, vector<128x512xf32>, vector<8x512xf32> -> vector<8x512xf32>
    %9 = arith.addf %5, %8 : vector<8x512xf32>
    %10 = vector.extract_strided_slice %9 {offsets = [0, 0], sizes = [8, 128], strides = [1, 1]} : vector<8x512xf32> to vector<8x128xf32>
    %11 = arith.negf %10 : vector<8x128xf32>
    %12 = math.exp %11 : vector<8x128xf32>
    %cst_7 = arith.constant 1.000000e+00 : f32
    %13 = vector.broadcast %cst_7 : f32 to vector<8x128xf32>
    %14 = arith.addf %13, %12 : vector<8x128xf32>
    %15 = arith.divf %13, %14 : vector<8x128xf32>
    %16 = vector.extract_strided_slice %9 {offsets = [0, 128], sizes = [8, 128], strides = [1, 1]} : vector<8x512xf32> to vector<8x128xf32>
    %17 = arith.negf %16 : vector<8x128xf32>
    %18 = math.exp %17 : vector<8x128xf32>
    %cst_8 = arith.constant 1.000000e+00 : f32
    %19 = vector.broadcast %cst_8 : f32 to vector<8x128xf32>
    %20 = arith.addf %19, %18 : vector<8x128xf32>
    %21 = arith.divf %19, %20 : vector<8x128xf32>
    %22 = vector.extract_strided_slice %9 {offsets = [0, 256], sizes = [8, 128], strides = [1, 1]} : vector<8x512xf32> to vector<8x128xf32>
    %23 = math.tanh %22 : vector<8x128xf32>
    %24 = vector.extract_strided_slice %9 {offsets = [0, 384], sizes = [8, 128], strides = [1, 1]} : vector<8x512xf32> to vector<8x128xf32>
    %25 = arith.negf %24 : vector<8x128xf32>
    %26 = math.exp %25 : vector<8x128xf32>
    %cst_9 = arith.constant 1.000000e+00 : f32
    %27 = vector.broadcast %cst_9 : f32 to vector<8x128xf32>
    %28 = arith.addf %27, %26 : vector<8x128xf32>
    %29 = arith.divf %27, %28 : vector<8x128xf32>
    %c0_10 = arith.constant 0 : index
    %c0_11 = arith.constant 0 : index
    %30 = vector.load %arg9[%c0_10, %c0_11] : memref<8x128xf32, #tpu.memory_space<vmem>>, vector<8x128xf32>
    %31 = arith.mulf %21, %30 : vector<8x128xf32>
    %32 = arith.mulf %15, %23 : vector<8x128xf32>
    %33 = arith.addf %31, %32 : vector<8x128xf32>
    %34 = math.tanh %33 : vector<8x128xf32>
    %35 = arith.mulf %29, %34 : vector<8x128xf32>
    %c0_12 = arith.constant 0 : index
    %c0_13 = arith.constant 0 : index
    %36 = vector.load %arg8[%c0_12, %c0_13] : memref<8x128xf32, #tpu.memory_space<vmem>>, vector<8x128xf32>
    tpu.vector_store %arg8[%c0_12, %c0_13], %35 {strides = array<i32>} : memref<8x128xf32, #tpu.memory_space<vmem>>, vector<8x128xf32>,
    %c0_14 = arith.constant 0 : index
    %c0_15 = arith.constant 0 : index
    %37 = vector.load %arg9[%c0_14, %c0_15] : memref<8x128xf32, #tpu.memory_space<vmem>>, vector<8x128xf32>
    tpu.vector_store %arg9[%c0_14, %c0_15], %33 {strides = array<i32>} : memref<8x128xf32, #tpu.memory_space<vmem>>, vector<8x128xf32>,
    %38 = arith.index_cast %c0_i32_1 : i32 to index
    %c0_16 = arith.constant 0 : index
    %c0_17 = arith.constant 0 : index
    %39 = vector.load %arg6[%38, %c0_16, %c0_17] : memref<8x8x128xf32, #tpu.memory_space<vmem>>, vector<1x8x128xf32>
    %40 = vector.shape_cast %39 : vector<1x8x128xf32> to vector<8x128xf32>
    %41 = vector.shape_cast %35 : vector<8x128xf32> to vector<1x8x128xf32>
    tpu.vector_store %arg6[%38, %c0_16, %c0_17], %41 {strides = array<i32>} : memref<8x8x128xf32, #tpu.memory_space<vmem>>, vector<1x8x128xf32>,
    %c1_i32 = arith.constant 1 : i32
    %42 = arith.index_cast %c1_i32 : i32 to index
    %c0_18 = arith.constant 0 : index
    %c0_19 = arith.constant 0 : index
    %43 = vector.load %arg2[%42, %c0_18, %c0_19] : memref<8x8x512xf32, #tpu.memory_space<vmem>>, vector<1x8x512xf32>
    %44 = vector.shape_cast %43 : vector<1x8x512xf32> to vector<8x512xf32>
    %c0_20 = arith.constant 0 : index
    %c0_21 = arith.constant 0 : index
    %45 = vector.load %arg8[%c0_20, %c0_21] : memref<8x128xf32, #tpu.memory_space<vmem>>, vector<8x128xf32>
    %c0_22 = arith.constant 0 : index
    %c0_23 = arith.constant 0 : index
    %46 = vector.load %arg5[%c0_22, %c0_23] : memref<128x512xf32, #tpu.memory_space<vmem>>, vector<128x512xf32>
    %cst_24 = arith.constant dense<0.000000e+00> : vector<8x512xf32>
    %47 = tpu.matmul %45, %46, %cst_24 {dimension_numbers = #tpu.dot_dimension_numbers<[1], [0], [0], [1], [0, 0, 1, 1], [], []>} : vector<8x128xf32>, vector<128x512xf32>, vector<8x512xf32> -> vector<8x512xf32>
    %48 = arith.addf %44, %47 : vector<8x512xf32>
    %49 = vector.extract_strided_slice %48 {offsets = [0, 0], sizes = [8, 128], strides = [1, 1]} : vector<8x512xf32> to vector<8x128xf32>
    %50 = arith.negf %49 : vector<8x128xf32>
    %51 = math.exp %50 : vector<8x128xf32>
    %cst_25 = arith.constant 1.000000e+00 : f32
    %52 = vector.broadcast %cst_25 : f32 to vector<8x128xf32>
    %53 = arith.addf %52, %51 : vector<8x128xf32>
    %54 = arith.divf %52, %53 : vector<8x128xf32>
    %55 = vector.extract_strided_slice %48 {offsets = [0, 128], sizes = [8, 128], strides = [1, 1]} : vector<8x512xf32> to vector<8x128xf32>
    %56 = arith.negf %55 : vector<8x128xf32>
    %57 = math.exp %56 : vector<8x128xf32>
    %cst_26 = arith.constant 1.000000e+00 : f32
    %58 = vector.broadcast %cst_26 : f32 to vector<8x128xf32>
    %59 = arith.addf %58, %57 : vector<8x128xf32>
    %60 = arith.divf %58, %59 : vector<8x128xf32>
    %61 = vector.extract_strided_slice %48 {offsets = [0, 256], sizes = [8, 128], strides = [1, 1]} : vector<8x512xf32> to vector<8x128xf32>
    %62 = math.tanh %61 : vector<8x128xf32>
    %63 = vector.extract_strided_slice %48 {offsets = [0, 384], sizes = [8, 128], strides = [1, 1]} : vector<8x512xf32> to vector<8x128xf32>
    %64 = arith.negf %63 : vector<8x128xf32>
    %65 = math.exp %64 : vector<8x128xf32>
    %cst_27 = arith.constant 1.000000e+00 : f32
    %66 = vector.broadcast %cst_27 : f32 to vector<8x128xf32>
    %67 = arith.addf %66, %65 : vector<8x128xf32>
    %68 = arith.divf %66, %67 : vector<8x128xf32>
    %c0_28 = arith.constant 0 : index
    %c0_29 = arith.constant 0 : index
    %69 = vector.load %arg9[%c0_28, %c0_29] : memref<8x128xf32, #tpu.memory_space<vmem>>, vector<8x128xf32>
    %70 = arith.mulf %60, %69 : vector<8x128xf32>
    %71 = arith.mulf %54, %62 : vector<8x128xf32>
    %72 = arith.addf %70, %71 : vector<8x128xf32>
    %73 = math.tanh %72 : vector<8x128xf32>
    %74 = arith.mulf %68, %73 : vector<8x128xf32>
    %c0_30 = arith.constant 0 : index
    %c0_31 = arith.constant 0 : index
    %75 = vector.load %arg8[%c0_30, %c0_31] : memref<8x128xf32, #tpu.memory_space<vmem>>, vector<8x128xf32>
    tpu.vector_store %arg8[%c0_30, %c0_31], %74 {strides = array<i32>} : memref<8x128xf32, #tpu.memory_space<vmem>>, vector<8x128xf32>,
    %c0_32 = arith.constant 0 : index
    %c0_33 = arith.constant 0 : index
    %76 = vector.load %arg9[%c0_32, %c0_33] : memref<8x128xf32, #tpu.memory_space<vmem>>, vector<8x128xf32>
    tpu.vector_store %arg9[%c0_32, %c0_33], %72 {strides = array<i32>} : memref<8x128xf32, #tpu.memory_space<vmem>>, vector<8x128xf32>,
    %77 = arith.index_cast %c1_i32 : i32 to index
    %c0_34 = arith.constant 0 : index
    %c0_35 = arith.constant 0 : index
    %78 = vector.load %arg6[%77, %c0_34, %c0_35] : memref<8x8x128xf32, #tpu.memory_space<vmem>>, vector<1x8x128xf32>
    %79 = vector.shape_cast %78 : vector<1x8x128xf32> to vector<8x128xf32>
    %80 = vector.shape_cast %74 : vector<8x128xf32> to vector<1x8x128xf32>
    tpu.vector_store %arg6[%77, %c0_34, %c0_35], %80 {strides = array<i32>} : memref<8x8x128xf32, #tpu.memory_space<vmem>>, vector<1x8x128xf32>,
    %c2_i32 = arith.constant 2 : i32
    %81 = arith.index_cast %c2_i32 : i32 to index
    %c0_36 = arith.constant 0 : index
    %c0_37 = arith.constant 0 : index
    %82 = vector.load %arg2[%81, %c0_36, %c0_37] : memref<8x8x512xf32, #tpu.memory_space<vmem>>, vector<1x8x512xf32>
    %83 = vector.shape_cast %82 : vector<1x8x512xf32> to vector<8x512xf32>
    %c0_38 = arith.constant 0 : index
    %c0_39 = arith.constant 0 : index
    %84 = vector.load %arg8[%c0_38, %c0_39] : memref<8x128xf32, #tpu.memory_space<vmem>>, vector<8x128xf32>
    %c0_40 = arith.constant 0 : index
    %c0_41 = arith.constant 0 : index
    %85 = vector.load %arg5[%c0_40, %c0_41] : memref<128x512xf32, #tpu.memory_space<vmem>>, vector<128x512xf32>
    %cst_42 = arith.constant dense<0.000000e+00> : vector<8x512xf32>
    %86 = tpu.matmul %84, %85, %cst_42 {dimension_numbers = #tpu.dot_dimension_numbers<[1], [0], [0], [1], [0, 0, 1, 1], [], []>} : vector<8x128xf32>, vector<128x512xf32>, vector<8x512xf32> -> vector<8x512xf32>
    %87 = arith.addf %83, %86 : vector<8x512xf32>
    %88 = vector.extract_strided_slice %87 {offsets = [0, 0], sizes = [8, 128], strides = [1, 1]} : vector<8x512xf32> to vector<8x128xf32>
    %89 = arith.negf %88 : vector<8x128xf32>
    %90 = math.exp %89 : vector<8x128xf32>
    %cst_43 = arith.constant 1.000000e+00 : f32
    %91 = vector.broadcast %cst_43 : f32 to vector<8x128xf32>
    %92 = arith.addf %91, %90 : vector<8x128xf32>
    %93 = arith.divf %91, %92 : vector<8x128xf32>
    %94 = vector.extract_strided_slice %87 {offsets = [0, 128], sizes = [8, 128], strides = [1, 1]} : vector<8x512xf32> to vector<8x128xf32>
    %95 = arith.negf %94 : vector<8x128xf32>
    %96 = math.exp %95 : vector<8x128xf32>
    %cst_44 = arith.constant 1.000000e+00 : f32
    %97 = vector.broadcast %cst_44 : f32 to vector<8x128xf32>
    %98 = arith.addf %97, %96 : vector<8x128xf32>
    %99 = arith.divf %97, %98 : vector<8x128xf32>
    %100 = vector.extract_strided_slice %87 {offsets = [0, 256], sizes = [8, 128], strides = [1, 1]} : vector<8x512xf32> to vector<8x128xf32>
    %101 = math.tanh %100 : vector<8x128xf32>
    %102 = vector.extract_strided_slice %87 {offsets = [0, 384], sizes = [8, 128], strides = [1, 1]} : vector<8x512xf32> to vector<8x128xf32>
    %103 = arith.negf %102 : vector<8x128xf32>
    %104 = math.exp %103 : vector<8x128xf32>
    %cst_45 = arith.constant 1.000000e+00 : f32
    %105 = vector.broadcast %cst_45 : f32 to vector<8x128xf32>
    %106 = arith.addf %105, %104 : vector<8x128xf32>
    %107 = arith.divf %105, %106 : vector<8x128xf32>
    %c0_46 = arith.constant 0 : index
    %c0_47 = arith.constant 0 : index
    %108 = vector.load %arg9[%c0_46, %c0_47] : memref<8x128xf32, #tpu.memory_space<vmem>>, vector<8x128xf32>
    %109 = arith.mulf %99, %108 : vector<8x128xf32>
    %110 = arith.mulf %93, %101 : vector<8x128xf32>
    %111 = arith.addf %109, %110 : vector<8x128xf32>
    %112 = math.tanh %111 : vector<8x128xf32>
    %113 = arith.mulf %107, %112 : vector<8x128xf32>
    %c0_48 = arith.constant 0 : index
    %c0_49 = arith.constant 0 : index
    %114 = vector.load %arg8[%c0_48, %c0_49] : memref<8x128xf32, #tpu.memory_space<vmem>>, vector<8x128xf32>
    tpu.vector_store %arg8[%c0_48, %c0_49], %113 {strides = array<i32>} : memref<8x128xf32, #tpu.memory_space<vmem>>, vector<8x128xf32>,
    %c0_50 = arith.constant 0 : index
    %c0_51 = arith.constant 0 : index
    %115 = vector.load %arg9[%c0_50, %c0_51] : memref<8x128xf32, #tpu.memory_space<vmem>>, vector<8x128xf32>
    tpu.vector_store %arg9[%c0_50, %c0_51], %111 {strides = array<i32>} : memref<8x128xf32, #tpu.memory_space<vmem>>, vector<8x128xf32>,
    %116 = arith.index_cast %c2_i32 : i32 to index
    %c0_52 = arith.constant 0 : index
    %c0_53 = arith.constant 0 : index
    %117 = vector.load %arg6[%116, %c0_52, %c0_53] : memref<8x8x128xf32, #tpu.memory_space<vmem>>, vector<1x8x128xf32>
    %118 = vector.shape_cast %117 : vector<1x8x128xf32> to vector<8x128xf32>
    %119 = vector.shape_cast %113 : vector<8x128xf32> to vector<1x8x128xf32>
    tpu.vector_store %arg6[%116, %c0_52, %c0_53], %119 {strides = array<i32>} : memref<8x8x128xf32, #tpu.memory_space<vmem>>, vector<1x8x128xf32>,
    %c3_i32 = arith.constant 3 : i32
    %120 = arith.index_cast %c3_i32 : i32 to index
    %c0_54 = arith.constant 0 : index
    %c0_55 = arith.constant 0 : index
    %121 = vector.load %arg2[%120, %c0_54, %c0_55] : memref<8x8x512xf32, #tpu.memory_space<vmem>>, vector<1x8x512xf32>
    %122 = vector.shape_cast %121 : vector<1x8x512xf32> to vector<8x512xf32>
    %c0_56 = arith.constant 0 : index
    %c0_57 = arith.constant 0 : index
    %123 = vector.load %arg8[%c0_56, %c0_57] : memref<8x128xf32, #tpu.memory_space<vmem>>, vector<8x128xf32>
    %c0_58 = arith.constant 0 : index
    %c0_59 = arith.constant 0 : index
    %124 = vector.load %arg5[%c0_58, %c0_59] : memref<128x512xf32, #tpu.memory_space<vmem>>, vector<128x512xf32>
    %cst_60 = arith.constant dense<0.000000e+00> : vector<8x512xf32>
    %125 = tpu.matmul %123, %124, %cst_60 {dimension_numbers = #tpu.dot_dimension_numbers<[1], [0], [0], [1], [0, 0, 1, 1], [], []>} : vector<8x128xf32>, vector<128x512xf32>, vector<8x512xf32> -> vector<8x512xf32>
    %126 = arith.addf %122, %125 : vector<8x512xf32>
    %127 = vector.extract_strided_slice %126 {offsets = [0, 0], sizes = [8, 128], strides = [1, 1]} : vector<8x512xf32> to vector<8x128xf32>
    %128 = arith.negf %127 : vector<8x128xf32>
    %129 = math.exp %128 : vector<8x128xf32>
    %cst_61 = arith.constant 1.000000e+00 : f32
    %130 = vector.broadcast %cst_61 : f32 to vector<8x128xf32>
    %131 = arith.addf %130, %129 : vector<8x128xf32>
    %132 = arith.divf %130, %131 : vector<8x128xf32>
    %133 = vector.extract_strided_slice %126 {offsets = [0, 128], sizes = [8, 128], strides = [1, 1]} : vector<8x512xf32> to vector<8x128xf32>
    %134 = arith.negf %133 : vector<8x128xf32>
    %135 = math.exp %134 : vector<8x128xf32>
    %cst_62 = arith.constant 1.000000e+00 : f32
    %136 = vector.broadcast %cst_62 : f32 to vector<8x128xf32>
    %137 = arith.addf %136, %135 : vector<8x128xf32>
    %138 = arith.divf %136, %137 : vector<8x128xf32>
    %139 = vector.extract_strided_slice %126 {offsets = [0, 256], sizes = [8, 128], strides = [1, 1]} : vector<8x512xf32> to vector<8x128xf32>
    %140 = math.tanh %139 : vector<8x128xf32>
    %141 = vector.extract_strided_slice %126 {offsets = [0, 384], sizes = [8, 128], strides = [1, 1]} : vector<8x512xf32> to vector<8x128xf32>
    %142 = arith.negf %141 : vector<8x128xf32>
    %143 = math.exp %142 : vector<8x128xf32>
    %cst_63 = arith.constant 1.000000e+00 : f32
    %144 = vector.broadcast %cst_63 : f32 to vector<8x128xf32>
    %145 = arith.addf %144, %143 : vector<8x128xf32>
    %146 = arith.divf %144, %145 : vector<8x128xf32>
    %c0_64 = arith.constant 0 : index
    %c0_65 = arith.constant 0 : index
    %147 = vector.load %arg9[%c0_64, %c0_65] : memref<8x128xf32, #tpu.memory_space<vmem>>, vector<8x128xf32>
    %148 = arith.mulf %138, %147 : vector<8x128xf32>
    %149 = arith.mulf %132, %140 : vector<8x128xf32>
    %150 = arith.addf %148, %149 : vector<8x128xf32>
    %151 = math.tanh %150 : vector<8x128xf32>
    %152 = arith.mulf %146, %151 : vector<8x128xf32>
    %c0_66 = arith.constant 0 : index
    %c0_67 = arith.constant 0 : index
    %153 = vector.load %arg8[%c0_66, %c0_67] : memref<8x128xf32, #tpu.memory_space<vmem>>, vector<8x128xf32>
    tpu.vector_store %arg8[%c0_66, %c0_67], %152 {strides = array<i32>} : memref<8x128xf32, #tpu.memory_space<vmem>>, vector<8x128xf32>,
    %c0_68 = arith.constant 0 : index
    %c0_69 = arith.constant 0 : index
    %154 = vector.load %arg9[%c0_68, %c0_69] : memref<8x128xf32, #tpu.memory_space<vmem>>, vector<8x128xf32>
    tpu.vector_store %arg9[%c0_68, %c0_69], %150 {strides = array<i32>} : memref<8x128xf32, #tpu.memory_space<vmem>>, vector<8x128xf32>,
    %155 = arith.index_cast %c3_i32 : i32 to index
    %c0_70 = arith.constant 0 : index
    %c0_71 = arith.constant 0 : index
    %156 = vector.load %arg6[%155, %c0_70, %c0_71] : memref<8x8x128xf32, #tpu.memory_space<vmem>>, vector<1x8x128xf32>
    %157 = vector.shape_cast %156 : vector<1x8x128xf32> to vector<8x128xf32>
    %158 = vector.shape_cast %152 : vector<8x128xf32> to vector<1x8x128xf32>
    tpu.vector_store %arg6[%155, %c0_70, %c0_71], %158 {strides = array<i32>} : memref<8x8x128xf32, #tpu.memory_space<vmem>>, vector<1x8x128xf32>,
    %c4_i32 = arith.constant 4 : i32
    %159 = arith.index_cast %c4_i32 : i32 to index
    %c0_72 = arith.constant 0 : index
    %c0_73 = arith.constant 0 : index
    %160 = vector.load %arg2[%159, %c0_72, %c0_73] : memref<8x8x512xf32, #tpu.memory_space<vmem>>, vector<1x8x512xf32>
    %161 = vector.shape_cast %160 : vector<1x8x512xf32> to vector<8x512xf32>
    %c0_74 = arith.constant 0 : index
    %c0_75 = arith.constant 0 : index
    %162 = vector.load %arg8[%c0_74, %c0_75] : memref<8x128xf32, #tpu.memory_space<vmem>>, vector<8x128xf32>
    %c0_76 = arith.constant 0 : index
    %c0_77 = arith.constant 0 : index
    %163 = vector.load %arg5[%c0_76, %c0_77] : memref<128x512xf32, #tpu.memory_space<vmem>>, vector<128x512xf32>
    %cst_78 = arith.constant dense<0.000000e+00> : vector<8x512xf32>
    %164 = tpu.matmul %162, %163, %cst_78 {dimension_numbers = #tpu.dot_dimension_numbers<[1], [0], [0], [1], [0, 0, 1, 1], [], []>} : vector<8x128xf32>, vector<128x512xf32>, vector<8x512xf32> -> vector<8x512xf32>
    %165 = arith.addf %161, %164 : vector<8x512xf32>
    %166 = vector.extract_strided_slice %165 {offsets = [0, 0], sizes = [8, 128], strides = [1, 1]} : vector<8x512xf32> to vector<8x128xf32>
    %167 = arith.negf %166 : vector<8x128xf32>
    %168 = math.exp %167 : vector<8x128xf32>
    %cst_79 = arith.constant 1.000000e+00 : f32
    %169 = vector.broadcast %cst_79 : f32 to vector<8x128xf32>
    %170 = arith.addf %169, %168 : vector<8x128xf32>
    %171 = arith.divf %169, %170 : vector<8x128xf32>
    %172 = vector.extract_strided_slice %165 {offsets = [0, 128], sizes = [8, 128], strides = [1, 1]} : vector<8x512xf32> to vector<8x128xf32>
    %173 = arith.negf %172 : vector<8x128xf32>
    %174 = math.exp %173 : vector<8x128xf32>
    %cst_80 = arith.constant 1.000000e+00 : f32
    %175 = vector.broadcast %cst_80 : f32 to vector<8x128xf32>
    %176 = arith.addf %175, %174 : vector<8x128xf32>
    %177 = arith.divf %175, %176 : vector<8x128xf32>
    %178 = vector.extract_strided_slice %165 {offsets = [0, 256], sizes = [8, 128], strides = [1, 1]} : vector<8x512xf32> to vector<8x128xf32>
    %179 = math.tanh %178 : vector<8x128xf32>
    %180 = vector.extract_strided_slice %165 {offsets = [0, 384], sizes = [8, 128], strides = [1, 1]} : vector<8x512xf32> to vector<8x128xf32>
    %181 = arith.negf %180 : vector<8x128xf32>
    %182 = math.exp %181 : vector<8x128xf32>
    %cst_81 = arith.constant 1.000000e+00 : f32
    %183 = vector.broadcast %cst_81 : f32 to vector<8x128xf32>
    %184 = arith.addf %183, %182 : vector<8x128xf32>
    %185 = arith.divf %183, %184 : vector<8x128xf32>
    %c0_82 = arith.constant 0 : index
    %c0_83 = arith.constant 0 : index
    %186 = vector.load %arg9[%c0_82, %c0_83] : memref<8x128xf32, #tpu.memory_space<vmem>>, vector<8x128xf32>
    %187 = arith.mulf %177, %186 : vector<8x128xf32>
    %188 = arith.mulf %171, %179 : vector<8x128xf32>
    %189 = arith.addf %187, %188 : vector<8x128xf32>
    %190 = math.tanh %189 : vector<8x128xf32>
    %191 = arith.mulf %185, %190 : vector<8x128xf32>
    %c0_84 = arith.constant 0 : index
    %c0_85 = arith.constant 0 : index
    %192 = vector.load %arg8[%c0_84, %c0_85] : memref<8x128xf32, #tpu.memory_space<vmem>>, vector<8x128xf32>
    tpu.vector_store %arg8[%c0_84, %c0_85], %191 {strides = array<i32>} : memref<8x128xf32, #tpu.memory_space<vmem>>, vector<8x128xf32>,
    %c0_86 = arith.constant 0 : index
    %c0_87 = arith.constant 0 : index
    %193 = vector.load %arg9[%c0_86, %c0_87] : memref<8x128xf32, #tpu.memory_space<vmem>>, vector<8x128xf32>
    tpu.vector_store %arg9[%c0_86, %c0_87], %189 {strides = array<i32>} : memref<8x128xf32, #tpu.memory_space<vmem>>, vector<8x128xf32>,
    %194 = arith.index_cast %c4_i32 : i32 to index
    %c0_88 = arith.constant 0 : index
    %c0_89 = arith.constant 0 : index
    %195 = vector.load %arg6[%194, %c0_88, %c0_89] : memref<8x8x128xf32, #tpu.memory_space<vmem>>, vector<1x8x128xf32>
    %196 = vector.shape_cast %195 : vector<1x8x128xf32> to vector<8x128xf32>
    %197 = vector.shape_cast %191 : vector<8x128xf32> to vector<1x8x128xf32>
    tpu.vector_store %arg6[%194, %c0_88, %c0_89], %197 {strides = array<i32>} : memref<8x8x128xf32, #tpu.memory_space<vmem>>, vector<1x8x128xf32>,
    %c5_i32 = arith.constant 5 : i32
    %198 = arith.index_cast %c5_i32 : i32 to index
    %c0_90 = arith.constant 0 : index
    %c0_91 = arith.constant 0 : index
    %199 = vector.load %arg2[%198, %c0_90, %c0_91] : memref<8x8x512xf32, #tpu.memory_space<vmem>>, vector<1x8x512xf32>
    %200 = vector.shape_cast %199 : vector<1x8x512xf32> to vector<8x512xf32>
    %c0_92 = arith.constant 0 : index
    %c0_93 = arith.constant 0 : index
    %201 = vector.load %arg8[%c0_92, %c0_93] : memref<8x128xf32, #tpu.memory_space<vmem>>, vector<8x128xf32>
    %c0_94 = arith.constant 0 : index
    %c0_95 = arith.constant 0 : index
    %202 = vector.load %arg5[%c0_94, %c0_95] : memref<128x512xf32, #tpu.memory_space<vmem>>, vector<128x512xf32>
    %cst_96 = arith.constant dense<0.000000e+00> : vector<8x512xf32>
    %203 = tpu.matmul %201, %202, %cst_96 {dimension_numbers = #tpu.dot_dimension_numbers<[1], [0], [0], [1], [0, 0, 1, 1], [], []>} : vector<8x128xf32>, vector<128x512xf32>, vector<8x512xf32> -> vector<8x512xf32>
    %204 = arith.addf %200, %203 : vector<8x512xf32>
    %205 = vector.extract_strided_slice %204 {offsets = [0, 0], sizes = [8, 128], strides = [1, 1]} : vector<8x512xf32> to vector<8x128xf32>
    %206 = arith.negf %205 : vector<8x128xf32>
    %207 = math.exp %206 : vector<8x128xf32>
    %cst_97 = arith.constant 1.000000e+00 : f32
    %208 = vector.broadcast %cst_97 : f32 to vector<8x128xf32>
    %209 = arith.addf %208, %207 : vector<8x128xf32>
    %210 = arith.divf %208, %209 : vector<8x128xf32>
    %211 = vector.extract_strided_slice %204 {offsets = [0, 128], sizes = [8, 128], strides = [1, 1]} : vector<8x512xf32> to vector<8x128xf32>
    %212 = arith.negf %211 : vector<8x128xf32>
    %213 = math.exp %212 : vector<8x128xf32>
    %cst_98 = arith.constant 1.000000e+00 : f32
    %214 = vector.broadcast %cst_98 : f32 to vector<8x128xf32>
    %215 = arith.addf %214, %213 : vector<8x128xf32>
    %216 = arith.divf %214, %215 : vector<8x128xf32>
    %217 = vector.extract_strided_slice %204 {offsets = [0, 256], sizes = [8, 128], strides = [1, 1]} : vector<8x512xf32> to vector<8x128xf32>
    %218 = math.tanh %217 : vector<8x128xf32>
    %219 = vector.extract_strided_slice %204 {offsets = [0, 384], sizes = [8, 128], strides = [1, 1]} : vector<8x512xf32> to vector<8x128xf32>
    %220 = arith.negf %219 : vector<8x128xf32>
    %221 = math.exp %220 : vector<8x128xf32>
    %cst_99 = arith.constant 1.000000e+00 : f32
    %222 = vector.broadcast %cst_99 : f32 to vector<8x128xf32>
    %223 = arith.addf %222, %221 : vector<8x128xf32>
    %224 = arith.divf %222, %223 : vector<8x128xf32>
    %c0_100 = arith.constant 0 : index
    %c0_101 = arith.constant 0 : index
    %225 = vector.load %arg9[%c0_100, %c0_101] : memref<8x128xf32, #tpu.memory_space<vmem>>, vector<8x128xf32>
    %226 = arith.mulf %216, %225 : vector<8x128xf32>
    %227 = arith.mulf %210, %218 : vector<8x128xf32>
    %228 = arith.addf %226, %227 : vector<8x128xf32>
    %229 = math.tanh %228 : vector<8x128xf32>
    %230 = arith.mulf %224, %229 : vector<8x128xf32>
    %c0_102 = arith.constant 0 : index
    %c0_103 = arith.constant 0 : index
    %231 = vector.load %arg8[%c0_102, %c0_103] : memref<8x128xf32, #tpu.memory_space<vmem>>, vector<8x128xf32>
    tpu.vector_store %arg8[%c0_102, %c0_103], %230 {strides = array<i32>} : memref<8x128xf32, #tpu.memory_space<vmem>>, vector<8x128xf32>,
    %c0_104 = arith.constant 0 : index
    %c0_105 = arith.constant 0 : index
    %232 = vector.load %arg9[%c0_104, %c0_105] : memref<8x128xf32, #tpu.memory_space<vmem>>, vector<8x128xf32>
    tpu.vector_store %arg9[%c0_104, %c0_105], %228 {strides = array<i32>} : memref<8x128xf32, #tpu.memory_space<vmem>>, vector<8x128xf32>,
    %233 = arith.index_cast %c5_i32 : i32 to index
    %c0_106 = arith.constant 0 : index
    %c0_107 = arith.constant 0 : index
    %234 = vector.load %arg6[%233, %c0_106, %c0_107] : memref<8x8x128xf32, #tpu.memory_space<vmem>>, vector<1x8x128xf32>
    %235 = vector.shape_cast %234 : vector<1x8x128xf32> to vector<8x128xf32>
    %236 = vector.shape_cast %230 : vector<8x128xf32> to vector<1x8x128xf32>
    tpu.vector_store %arg6[%233, %c0_106, %c0_107], %236 {strides = array<i32>} : memref<8x8x128xf32, #tpu.memory_space<vmem>>, vector<1x8x128xf32>,
    %c6_i32 = arith.constant 6 : i32
    %237 = arith.index_cast %c6_i32 : i32 to index
    %c0_108 = arith.constant 0 : index
    %c0_109 = arith.constant 0 : index
    %238 = vector.load %arg2[%237, %c0_108, %c0_109] : memref<8x8x512xf32, #tpu.memory_space<vmem>>, vector<1x8x512xf32>
    %239 = vector.shape_cast %238 : vector<1x8x512xf32> to vector<8x512xf32>
    %c0_110 = arith.constant 0 : index
    %c0_111 = arith.constant 0 : index
    %240 = vector.load %arg8[%c0_110, %c0_111] : memref<8x128xf32, #tpu.memory_space<vmem>>, vector<8x128xf32>
    %c0_112 = arith.constant 0 : index
    %c0_113 = arith.constant 0 : index
    %241 = vector.load %arg5[%c0_112, %c0_113] : memref<128x512xf32, #tpu.memory_space<vmem>>, vector<128x512xf32>
    %cst_114 = arith.constant dense<0.000000e+00> : vector<8x512xf32>
    %242 = tpu.matmul %240, %241, %cst_114 {dimension_numbers = #tpu.dot_dimension_numbers<[1], [0], [0], [1], [0, 0, 1, 1], [], []>} : vector<8x128xf32>, vector<128x512xf32>, vector<8x512xf32> -> vector<8x512xf32>
    %243 = arith.addf %239, %242 : vector<8x512xf32>
    %244 = vector.extract_strided_slice %243 {offsets = [0, 0], sizes = [8, 128], strides = [1, 1]} : vector<8x512xf32> to vector<8x128xf32>
    %245 = arith.negf %244 : vector<8x128xf32>
    %246 = math.exp %245 : vector<8x128xf32>
    %cst_115 = arith.constant 1.000000e+00 : f32
    %247 = vector.broadcast %cst_115 : f32 to vector<8x128xf32>
    %248 = arith.addf %247, %246 : vector<8x128xf32>
    %249 = arith.divf %247, %248 : vector<8x128xf32>
    %250 = vector.extract_strided_slice %243 {offsets = [0, 128], sizes = [8, 128], strides = [1, 1]} : vector<8x512xf32> to vector<8x128xf32>
    %251 = arith.negf %250 : vector<8x128xf32>
    %252 = math.exp %251 : vector<8x128xf32>
    %cst_116 = arith.constant 1.000000e+00 : f32
    %253 = vector.broadcast %cst_116 : f32 to vector<8x128xf32>
    %254 = arith.addf %253, %252 : vector<8x128xf32>
    %255 = arith.divf %253, %254 : vector<8x128xf32>
    %256 = vector.extract_strided_slice %243 {offsets = [0, 256], sizes = [8, 128], strides = [1, 1]} : vector<8x512xf32> to vector<8x128xf32>
    %257 = math.tanh %256 : vector<8x128xf32>
    %258 = vector.extract_strided_slice %243 {offsets = [0, 384], sizes = [8, 128], strides = [1, 1]} : vector<8x512xf32> to vector<8x128xf32>
    %259 = arith.negf %258 : vector<8x128xf32>
    %260 = math.exp %259 : vector<8x128xf32>
    %cst_117 = arith.constant 1.000000e+00 : f32
    %261 = vector.broadcast %cst_117 : f32 to vector<8x128xf32>
    %262 = arith.addf %261, %260 : vector<8x128xf32>
    %263 = arith.divf %261, %262 : vector<8x128xf32>
    %c0_118 = arith.constant 0 : index
    %c0_119 = arith.constant 0 : index
    %264 = vector.load %arg9[%c0_118, %c0_119] : memref<8x128xf32, #tpu.memory_space<vmem>>, vector<8x128xf32>
    %265 = arith.mulf %255, %264 : vector<8x128xf32>
    %266 = arith.mulf %249, %257 : vector<8x128xf32>
    %267 = arith.addf %265, %266 : vector<8x128xf32>
    %268 = math.tanh %267 : vector<8x128xf32>
    %269 = arith.mulf %263, %268 : vector<8x128xf32>
    %c0_120 = arith.constant 0 : index
    %c0_121 = arith.constant 0 : index
    %270 = vector.load %arg8[%c0_120, %c0_121] : memref<8x128xf32, #tpu.memory_space<vmem>>, vector<8x128xf32>
    tpu.vector_store %arg8[%c0_120, %c0_121], %269 {strides = array<i32>} : memref<8x128xf32, #tpu.memory_space<vmem>>, vector<8x128xf32>,
    %c0_122 = arith.constant 0 : index
    %c0_123 = arith.constant 0 : index
    %271 = vector.load %arg9[%c0_122, %c0_123] : memref<8x128xf32, #tpu.memory_space<vmem>>, vector<8x128xf32>
    tpu.vector_store %arg9[%c0_122, %c0_123], %267 {strides = array<i32>} : memref<8x128xf32, #tpu.memory_space<vmem>>, vector<8x128xf32>,
    %272 = arith.index_cast %c6_i32 : i32 to index
    %c0_124 = arith.constant 0 : index
    %c0_125 = arith.constant 0 : index
    %273 = vector.load %arg6[%272, %c0_124, %c0_125] : memref<8x8x128xf32, #tpu.memory_space<vmem>>, vector<1x8x128xf32>
    %274 = vector.shape_cast %273 : vector<1x8x128xf32> to vector<8x128xf32>
    %275 = vector.shape_cast %269 : vector<8x128xf32> to vector<1x8x128xf32>
    tpu.vector_store %arg6[%272, %c0_124, %c0_125], %275 {strides = array<i32>} : memref<8x8x128xf32, #tpu.memory_space<vmem>>, vector<1x8x128xf32>,
    %c7_i32 = arith.constant 7 : i32
    %276 = arith.index_cast %c7_i32 : i32 to index
    %c0_126 = arith.constant 0 : index
    %c0_127 = arith.constant 0 : index
    %277 = vector.load %arg2[%276, %c0_126, %c0_127] : memref<8x8x512xf32, #tpu.memory_space<vmem>>, vector<1x8x512xf32>
    %278 = vector.shape_cast %277 : vector<1x8x512xf32> to vector<8x512xf32>
    %c0_128 = arith.constant 0 : index
    %c0_129 = arith.constant 0 : index
    %279 = vector.load %arg8[%c0_128, %c0_129] : memref<8x128xf32, #tpu.memory_space<vmem>>, vector<8x128xf32>
    %c0_130 = arith.constant 0 : index
    %c0_131 = arith.constant 0 : index
    %280 = vector.load %arg5[%c0_130, %c0_131] : memref<128x512xf32, #tpu.memory_space<vmem>>, vector<128x512xf32>
    %cst_132 = arith.constant dense<0.000000e+00> : vector<8x512xf32>
    %281 = tpu.matmul %279, %280, %cst_132 {dimension_numbers = #tpu.dot_dimension_numbers<[1], [0], [0], [1], [0, 0, 1, 1], [], []>} : vector<8x128xf32>, vector<128x512xf32>, vector<8x512xf32> -> vector<8x512xf32>
    %282 = arith.addf %278, %281 : vector<8x512xf32>
    %283 = vector.extract_strided_slice %282 {offsets = [0, 0], sizes = [8, 128], strides = [1, 1]} : vector<8x512xf32> to vector<8x128xf32>
    %284 = arith.negf %283 : vector<8x128xf32>
    %285 = math.exp %284 : vector<8x128xf32>
    %cst_133 = arith.constant 1.000000e+00 : f32
    %286 = vector.broadcast %cst_133 : f32 to vector<8x128xf32>
    %287 = arith.addf %286, %285 : vector<8x128xf32>
    %288 = arith.divf %286, %287 : vector<8x128xf32>
    %289 = vector.extract_strided_slice %282 {offsets = [0, 128], sizes = [8, 128], strides = [1, 1]} : vector<8x512xf32> to vector<8x128xf32>
    %290 = arith.negf %289 : vector<8x128xf32>
    %291 = math.exp %290 : vector<8x128xf32>
    %cst_134 = arith.constant 1.000000e+00 : f32
    %292 = vector.broadcast %cst_134 : f32 to vector<8x128xf32>
    %293 = arith.addf %292, %291 : vector<8x128xf32>
    %294 = arith.divf %292, %293 : vector<8x128xf32>
    %295 = vector.extract_strided_slice %282 {offsets = [0, 256], sizes = [8, 128], strides = [1, 1]} : vector<8x512xf32> to vector<8x128xf32>
    %296 = math.tanh %295 : vector<8x128xf32>
    %297 = vector.extract_strided_slice %282 {offsets = [0, 384], sizes = [8, 128], strides = [1, 1]} : vector<8x512xf32> to vector<8x128xf32>
    %298 = arith.negf %297 : vector<8x128xf32>
    %299 = math.exp %298 : vector<8x128xf32>
    %cst_135 = arith.constant 1.000000e+00 : f32
    %300 = vector.broadcast %cst_135 : f32 to vector<8x128xf32>
    %301 = arith.addf %300, %299 : vector<8x128xf32>
    %302 = arith.divf %300, %301 : vector<8x128xf32>
    %c0_136 = arith.constant 0 : index
    %c0_137 = arith.constant 0 : index
    %303 = vector.load %arg9[%c0_136, %c0_137] : memref<8x128xf32, #tpu.memory_space<vmem>>, vector<8x128xf32>
    %304 = arith.mulf %294, %303 : vector<8x128xf32>
    %305 = arith.mulf %288, %296 : vector<8x128xf32>
    %306 = arith.addf %304, %305 : vector<8x128xf32>
    %307 = math.tanh %306 : vector<8x128xf32>
    %308 = arith.mulf %302, %307 : vector<8x128xf32>
    %c0_138 = arith.constant 0 : index
    %c0_139 = arith.constant 0 : index
    %309 = vector.load %arg8[%c0_138, %c0_139] : memref<8x128xf32, #tpu.memory_space<vmem>>, vector<8x128xf32>
    tpu.vector_store %arg8[%c0_138, %c0_139], %308 {strides = array<i32>} : memref<8x128xf32, #tpu.memory_space<vmem>>, vector<8x128xf32>,
    %c0_140 = arith.constant 0 : index
    %c0_141 = arith.constant 0 : index
    %310 = vector.load %arg9[%c0_140, %c0_141] : memref<8x128xf32, #tpu.memory_space<vmem>>, vector<8x128xf32>
    tpu.vector_store %arg9[%c0_140, %c0_141], %306 {strides = array<i32>} : memref<8x128xf32, #tpu.memory_space<vmem>>, vector<8x128xf32>,
    %311 = arith.index_cast %c7_i32 : i32 to index
    %c0_142 = arith.constant 0 : index
    %c0_143 = arith.constant 0 : index
    %312 = vector.load %arg6[%311, %c0_142, %c0_143] : memref<8x8x128xf32, #tpu.memory_space<vmem>>, vector<1x8x128xf32>
    %313 = vector.shape_cast %312 : vector<1x8x128xf32> to vector<8x128xf32>
    %314 = vector.shape_cast %308 : vector<8x128xf32> to vector<1x8x128xf32>
    tpu.vector_store %arg6[%311, %c0_142, %c0_143], %314 {strides = array<i32>} : memref<8x8x128xf32, #tpu.memory_space<vmem>>, vector<1x8x128xf32>,
    %c8_i32 = arith.constant 8 : i32
    %c0_i32_144 = arith.constant 0 : i32
    %315 = arith.cmpi eq, %arg1, %c0_i32_144 : i32
    %316 = arith.extui %315 : i1 to i32
    %c0_i32_145 = arith.constant 0 : i32
    %317 = arith.cmpi ne, %316, %c0_i32_145 : i32
    scf.if %317 {
      %c0_146 = arith.constant 0 : index
      %c0_147 = arith.constant 0 : index
      %318 = vector.load %arg9[%c0_146, %c0_147] : memref<8x128xf32, #tpu.memory_space<vmem>>, vector<8x128xf32>
      %c0_148 = arith.constant 0 : index
      %c0_149 = arith.constant 0 : index
      %319 = vector.load %arg7[%c0_148, %c0_149] : memref<8x128xf32, #tpu.memory_space<vmem>>, vector<8x128xf32>
      tpu.vector_store %arg7[%c0_148, %c0_149], %318 {strides = array<i32>} : memref<8x128xf32, #tpu.memory_space<vmem>>, vector<8x128xf32>,
    } else {
    }
    return
  }
  func.func @transform_0(%arg0: i32, %arg1: i32) -> (i32, i32, i32) {
    %c0_i32 = arith.constant 0 : i32
    %c0_i32_0 = arith.constant 0 : i32
    return %arg1, %arg0, %c0_i32 : i32, i32, i32
  }
  func.func @transform_1(%arg0: i32, %arg1: i32) -> (i32, i32, i32) {
    %c0_i32 = arith.constant 0 : i32
    %c0_i32_0 = arith.constant 0 : i32
    %c0_i32_1 = arith.constant 0 : i32
    return %c0_i32, %arg0, %c0_i32_0 : i32, i32, i32
  }
  func.func @transform_2(%arg0: i32, %arg1: i32) -> (i32, i32, i32) {
    %c0_i32 = arith.constant 0 : i32
    %c0_i32_0 = arith.constant 0 : i32
    %c0_i32_1 = arith.constant 0 : i32
    return %c0_i32, %arg0, %c0_i32_0 : i32, i32, i32
  }
  func.func @transform_3(%arg0: i32, %arg1: i32) -> (i32, i32) {
    %c0_i32 = arith.constant 0 : i32
    %c0_i32_0 = arith.constant 0 : i32
    %c0_i32_1 = arith.constant 0 : i32
    return %c0_i32, %c0_i32_0 : i32, i32
  }
  func.func @transform_4(%arg0: i32, %arg1: i32) -> (i32, i32, i32) {
    %c0_i32 = arith.constant 0 : i32
    %c0_i32_0 = arith.constant 0 : i32
    return %arg1, %arg0, %c0_i32 : i32, i32, i32
  }
  func.func @transform_5(%arg0: i32, %arg1: i32) -> (i32, i32) {
    %c0_i32 = arith.constant 0 : i32
    %c0_i32_0 = arith.constant 0 : i32
    return %arg0, %c0_i32 : i32, i32
  }
}

module attributes {stable_mosaic.version = 11 : i64} {
  func.func @lstm_recurrent_kernel(%arg0: i32, %arg1: i32, %arg2: memref<8x8x512xf32, #tpu.memory_space<vmem>>, %arg3: memref<1x8x128xf32, #tpu.memory_space<vmem>>, %arg4: memref<1x8x128xf32, #tpu.memory_space<vmem>>, %arg5: memref<128x512xf32, #tpu.memory_space<vmem>>, %arg6: memref<8x8x128xf32, #tpu.memory_space<vmem>>, %arg7: memref<8x128xf32, #tpu.memory_space<vmem>>, %arg8: memref<8x128xf32, #tpu.memory_space<vmem>>, %arg9: memref<8x128xf32, #tpu.memory_space<vmem>>) attributes {dimension_semantics = [#tpu.dimension_semantics<parallel>, #tpu.dimension_semantics<arbitrary>], iteration_bounds = array<i64: 1, 1>, scalar_prefetch = 0 : i64, scratch_operands = 2 : i64, tpu.core_type = #tpu.core_type<tc>, window_params = [{transform_indices = @transform_0, window_bounds = array<i64: 8, 8, 512>}, {transform_indices = @transform_1, window_bounds = array<i64: 1, 8, 128>}, {transform_indices = @transform_2, window_bounds = array<i64: 1, 8, 128>}, {pipeline_mode = #tpu.pipeline_mode<synchronous>, transform_indices = @transform_3, window_bounds = array<i64: 128, 512>}, {transform_indices = @transform_4, window_bounds = array<i64: 8, 8, 128>}, {transform_indices = @transform_5, window_bounds = array<i64: 8, 128>}]} {
    %c0_i32 = arith.constant 0 : i32
    %0 = arith.cmpi eq, %arg1, %c0_i32 : i32
    %1 = arith.extui %0 : i1 to i32
    %c0_i32_0 = arith.constant 0 : i32
    %2 = arith.cmpi ne, %1, %c0_i32_0 : i32
    scf.if %2 {
      %c0_146 = arith.constant 0 : index
      %c0_147 = arith.constant 0 : index
      %c0_148 = arith.constant 0 : index
      %318 = vector.load %arg3[%c0_146, %c0_147, %c0_148] : memref<1x8x128xf32, #tpu.memory_space<vmem>>, vector<1x8x128xf32>
      %319 = vector.shape_cast %318 : vector<1x8x128xf32> to vector<8x128xf32>
      %c0_149 = arith.constant 0 : index
      %c0_150 = arith.constant 0 : index
      %320 = vector.load %arg8[%c0_149, %c0_150] : memref<8x128xf32, #tpu.memory_space<vmem>>, vector<8x128xf32>
      tpu.vector_store %arg8[%c0_149, %c0_150], %319 {strides = array<i32>} : memref<8x128xf32, #tpu.memory_space<vmem>>, vector<8x128xf32>,
      %c0_151 = arith.constant 0 : index
      %c0_152 = arith.constant 0 : index
      %c0_153 = arith.constant 0 : index
      %321 = vector.load %arg4[%c0_151, %c0_152, %c0_153] : memref<1x8x128xf32, #tpu.memory_space<vmem>>, vector<1x8x128xf32>
      %322 = vector.shape_cast %321 : vector<1x8x128xf32> to vector<8x128xf32>
      %c0_154 = arith.constant 0 : index
      %c0_155 = arith.constant 0 : index
      %323 = vector.load %arg9[%c0_154, %c0_155] : memref<8x128xf32, #tpu.memory_space<vmem>>, vector<8x128xf32>
      tpu.vector_store %arg9[%c0_154, %c0_155], %322 {strides = array<i32>} : memref<8x128xf32, #tpu.memory_space<vmem>>, vector<8x128xf32>,
    } else {
    }
    %c0_i32_1 = arith.constant 0 : i32
    %3 = arith.index_cast %c0_i32_1 : i32 to index
    %c0 = arith.constant 0 : index
    %c0_2 = arith.constant 0 : index
    %4 = vector.load %arg2[%3, %c0, %c0_2] : memref<8x8x512xf32, #tpu.memory_space<vmem>>, vector<1x8x512xf32>
    %5 = vector.shape_cast %4 : vector<1x8x512xf32> to vector<8x512xf32>
    %c0_3 = arith.constant 0 : index
    %c0_4 = arith.constant 0 : index
    %6 = vector.load %arg8[%c0_3, %c0_4] : memref<8x128xf32, #tpu.memory_space<vmem>>, vector<8x128xf32>
    %c0_5 = arith.constant 0 : index
    %c0_6 = arith.constant 0 : index
    %7 = vector.load %arg5[%c0_5, %c0_6] : memref<128x512xf32, #tpu.memory_space<vmem>>, vector<128x512xf32>
    %cst = arith.constant dense<0.000000e+00> : vector<8x512xf32>
    %8 = tpu.matmul %6, %7, %cst {dimension_numbers = #tpu.dot_dimension_numbers<[1], [0], [0], [1], [0, 0, 1, 1], [], []>} : vector<8x128xf32>, vector<128x512xf32>, vector<8x512xf32> -> vector<8x512xf32>
    %9 = arith.addf %5, %8 : vector<8x512xf32>
    %10 = vector.extract_strided_slice %9 {offsets = [0, 0], sizes = [8, 128], strides = [1, 1]} : vector<8x512xf32> to vector<8x128xf32>
    %11 = arith.negf %10 : vector<8x128xf32>
    %12 = math.exp %11 : vector<8x128xf32>
    %cst_7 = arith.constant 1.000000e+00 : f32
    %13 = vector.broadcast %cst_7 : f32 to vector<8x128xf32>
    %14 = arith.addf %13, %12 : vector<8x128xf32>
    %15 = arith.divf %13, %14 : vector<8x128xf32>
    %16 = vector.extract_strided_slice %9 {offsets = [0, 128], sizes = [8, 128], strides = [1, 1]} : vector<8x512xf32> to vector<8x128xf32>
    %17 = arith.negf %16 : vector<8x128xf32>
    %18 = math.exp %17 : vector<8x128xf32>
    %cst_8 = arith.constant 1.000000e+00 : f32
    %19 = vector.broadcast %cst_8 : f32 to vector<8x128xf32>
    %20 = arith.addf %19, %18 : vector<8x128xf32>
    %21 = arith.divf %19, %20 : vector<8x128xf32>
    %22 = vector.extract_strided_slice %9 {offsets = [0, 256], sizes = [8, 128], strides = [1, 1]} : vector<8x512xf32> to vector<8x128xf32>
    %23 = math.tanh %22 : vector<8x128xf32>
    %24 = vector.extract_strided_slice %9 {offsets = [0, 384], sizes = [8, 128], strides = [1, 1]} : vector<8x512xf32> to vector<8x128xf32>
    %25 = arith.negf %24 : vector<8x128xf32>
    %26 = math.exp %25 : vector<8x128xf32>
    %cst_9 = arith.constant 1.000000e+00 : f32
    %27 = vector.broadcast %cst_9 : f32 to vector<8x128xf32>
    %28 = arith.addf %27, %26 : vector<8x128xf32>
    %29 = arith.divf %27, %28 : vector<8x128xf32>
    %c0_10 = arith.constant 0 : index
    %c0_11 = arith.constant 0 : index
    %30 = vector.load %arg9[%c0_10, %c0_11] : memref<8x128xf32, #tpu.memory_space<vmem>>, vector<8x128xf32>
    %31 = arith.mulf %21, %30 : vector<8x128xf32>
    %32 = arith.mulf %15, %23 : vector<8x128xf32>
    %33 = arith.addf %31, %32 : vector<8x128xf32>
    %34 = math.tanh %33 : vector<8x128xf32>
    %35 = arith.mulf %29, %34 : vector<8x128xf32>
    %c0_12 = arith.constant 0 : index
    %c0_13 = arith.constant 0 : index
    %36 = vector.load %arg8[%c0_12, %c0_13] : memref<8x128xf32, #tpu.memory_space<vmem>>, vector<8x128xf32>
    tpu.vector_store %arg8[%c0_12, %c0_13], %35 {strides = array<i32>} : memref<8x128xf32, #tpu.memory_space<vmem>>, vector<8x128xf32>,
    %c0_14 = arith.constant 0 : index
    %c0_15 = arith.constant 0 : index
    %37 = vector.load %arg9[%c0_14, %c0_15] : memref<8x128xf32, #tpu.memory_space<vmem>>, vector<8x128xf32>
    tpu.vector_store %arg9[%c0_14, %c0_15], %33 {strides = array<i32>} : memref<8x128xf32, #tpu.memory_space<vmem>>, vector<8x128xf32>,
    %38 = arith.index_cast %c0_i32_1 : i32 to index
    %c0_16 = arith.constant 0 : index
    %c0_17 = arith.constant 0 : index
    %39 = vector.load %arg6[%38, %c0_16, %c0_17] : memref<8x8x128xf32, #tpu.memory_space<vmem>>, vector<1x8x128xf32>
    %40 = vector.shape_cast %39 : vector<1x8x128xf32> to vector<8x128xf32>
    %41 = vector.shape_cast %35 : vector<8x128xf32> to vector<1x8x128xf32>
    tpu.vector_store %arg6[%38, %c0_16, %c0_17], %41 {strides = array<i32>} : memref<8x8x128xf32, #tpu.memory_space<vmem>>, vector<1x8x128xf32>,
    %c1_i32 = arith.constant 1 : i32
    %42 = arith.index_cast %c1_i32 : i32 to index
    %c0_18 = arith.constant 0 : index
    %c0_19 = arith.constant 0 : index
    %43 = vector.load %arg2[%42, %c0_18, %c0_19] : memref<8x8x512xf32, #tpu.memory_space<vmem>>, vector<1x8x512xf32>
    %44 = vector.shape_cast %43 : vector<1x8x512xf32> to vector<8x512xf32>
    %c0_20 = arith.constant 0 : index
    %c0_21 = arith.constant 0 : index
    %45 = vector.load %arg8[%c0_20, %c0_21] : memref<8x128xf32, #tpu.memory_space<vmem>>, vector<8x128xf32>
    %c0_22 = arith.constant 0 : index
    %c0_23 = arith.constant 0 : index
    %46 = vector.load %arg5[%c0_22, %c0_23] : memref<128x512xf32, #tpu.memory_space<vmem>>, vector<128x512xf32>
    %cst_24 = arith.constant dense<0.000000e+00> : vector<8x512xf32>
    %47 = tpu.matmul %45, %46, %cst_24 {dimension_numbers = #tpu.dot_dimension_numbers<[1], [0], [0], [1], [0, 0, 1, 1], [], []>} : vector<8x128xf32>, vector<128x512xf32>, vector<8x512xf32> -> vector<8x512xf32>
    %48 = arith.addf %44, %47 : vector<8x512xf32>
    %49 = vector.extract_strided_slice %48 {offsets = [0, 0], sizes = [8, 128], strides = [1, 1]} : vector<8x512xf32> to vector<8x128xf32>
    %50 = arith.negf %49 : vector<8x128xf32>
    %51 = math.exp %50 : vector<8x128xf32>
    %cst_25 = arith.constant 1.000000e+00 : f32
    %52 = vector.broadcast %cst_25 : f32 to vector<8x128xf32>
    %53 = arith.addf %52, %51 : vector<8x128xf32>
    %54 = arith.divf %52, %53 : vector<8x128xf32>
    %55 = vector.extract_strided_slice %48 {offsets = [0, 128], sizes = [8, 128], strides = [1, 1]} : vector<8x512xf32> to vector<8x128xf32>
    %56 = arith.negf %55 : vector<8x128xf32>
    %57 = math.exp %56 : vector<8x128xf32>
    %cst_26 = arith.constant 1.000000e+00 : f32
    %58 = vector.broadcast %cst_26 : f32 to vector<8x128xf32>
    %59 = arith.addf %58, %57 : vector<8x128xf32>
    %60 = arith.divf %58, %59 : vector<8x128xf32>
    %61 = vector.extract_strided_slice %48 {offsets = [0, 256], sizes = [8, 128], strides = [1, 1]} : vector<8x512xf32> to vector<8x128xf32>
    %62 = math.tanh %61 : vector<8x128xf32>
    %63 = vector.extract_strided_slice %48 {offsets = [0, 384], sizes = [8, 128], strides = [1, 1]} : vector<8x512xf32> to vector<8x128xf32>
    %64 = arith.negf %63 : vector<8x128xf32>
    %65 = math.exp %64 : vector<8x128xf32>
    %cst_27 = arith.constant 1.000000e+00 : f32
    %66 = vector.broadcast %cst_27 : f32 to vector<8x128xf32>
    %67 = arith.addf %66, %65 : vector<8x128xf32>
    %68 = arith.divf %66, %67 : vector<8x128xf32>
    %c0_28 = arith.constant 0 : index
    %c0_29 = arith.constant 0 : index
    %69 = vector.load %arg9[%c0_28, %c0_29] : memref<8x128xf32, #tpu.memory_space<vmem>>, vector<8x128xf32>
    %70 = arith.mulf %60, %69 : vector<8x128xf32>
    %71 = arith.mulf %54, %62 : vector<8x128xf32>
    %72 = arith.addf %70, %71 : vector<8x128xf32>
    %73 = math.tanh %72 : vector<8x128xf32>
    %74 = arith.mulf %68, %73 : vector<8x128xf32>
    %c0_30 = arith.constant 0 : index
    %c0_31 = arith.constant 0 : index
    %75 = vector.load %arg8[%c0_30, %c0_31] : memref<8x128xf32, #tpu.memory_space<vmem>>, vector<8x128xf32>
    tpu.vector_store %arg8[%c0_30, %c0_31], %74 {strides = array<i32>} : memref<8x128xf32, #tpu.memory_space<vmem>>, vector<8x128xf32>,
    %c0_32 = arith.constant 0 : index
    %c0_33 = arith.constant 0 : index
    %76 = vector.load %arg9[%c0_32, %c0_33] : memref<8x128xf32, #tpu.memory_space<vmem>>, vector<8x128xf32>
    tpu.vector_store %arg9[%c0_32, %c0_33], %72 {strides = array<i32>} : memref<8x128xf32, #tpu.memory_space<vmem>>, vector<8x128xf32>,
    %77 = arith.index_cast %c1_i32 : i32 to index
    %c0_34 = arith.constant 0 : index
    %c0_35 = arith.constant 0 : index
    %78 = vector.load %arg6[%77, %c0_34, %c0_35] : memref<8x8x128xf32, #tpu.memory_space<vmem>>, vector<1x8x128xf32>
    %79 = vector.shape_cast %78 : vector<1x8x128xf32> to vector<8x128xf32>
    %80 = vector.shape_cast %74 : vector<8x128xf32> to vector<1x8x128xf32>
    tpu.vector_store %arg6[%77, %c0_34, %c0_35], %80 {strides = array<i32>} : memref<8x8x128xf32, #tpu.memory_space<vmem>>, vector<1x8x128xf32>,
    %c2_i32 = arith.constant 2 : i32
    %81 = arith.index_cast %c2_i32 : i32 to index
    %c0_36 = arith.constant 0 : index
    %c0_37 = arith.constant 0 : index
    %82 = vector.load %arg2[%81, %c0_36, %c0_37] : memref<8x8x512xf32, #tpu.memory_space<vmem>>, vector<1x8x512xf32>
    %83 = vector.shape_cast %82 : vector<1x8x512xf32> to vector<8x512xf32>
    %c0_38 = arith.constant 0 : index
    %c0_39 = arith.constant 0 : index
    %84 = vector.load %arg8[%c0_38, %c0_39] : memref<8x128xf32, #tpu.memory_space<vmem>>, vector<8x128xf32>
    %c0_40 = arith.constant 0 : index
    %c0_41 = arith.constant 0 : index
    %85 = vector.load %arg5[%c0_40, %c0_41] : memref<128x512xf32, #tpu.memory_space<vmem>>, vector<128x512xf32>
    %cst_42 = arith.constant dense<0.000000e+00> : vector<8x512xf32>
    %86 = tpu.matmul %84, %85, %cst_42 {dimension_numbers = #tpu.dot_dimension_numbers<[1], [0], [0], [1], [0, 0, 1, 1], [], []>} : vector<8x128xf32>, vector<128x512xf32>, vector<8x512xf32> -> vector<8x512xf32>
    %87 = arith.addf %83, %86 : vector<8x512xf32>
    %88 = vector.extract_strided_slice %87 {offsets = [0, 0], sizes = [8, 128], strides = [1, 1]} : vector<8x512xf32> to vector<8x128xf32>
    %89 = arith.negf %88 : vector<8x128xf32>
    %90 = math.exp %89 : vector<8x128xf32>
    %cst_43 = arith.constant 1.000000e+00 : f32
    %91 = vector.broadcast %cst_43 : f32 to vector<8x128xf32>
    %92 = arith.addf %91, %90 : vector<8x128xf32>
    %93 = arith.divf %91, %92 : vector<8x128xf32>
    %94 = vector.extract_strided_slice %87 {offsets = [0, 128], sizes = [8, 128], strides = [1, 1]} : vector<8x512xf32> to vector<8x128xf32>
    %95 = arith.negf %94 : vector<8x128xf32>
    %96 = math.exp %95 : vector<8x128xf32>
    %cst_44 = arith.constant 1.000000e+00 : f32
    %97 = vector.broadcast %cst_44 : f32 to vector<8x128xf32>
    %98 = arith.addf %97, %96 : vector<8x128xf32>
    %99 = arith.divf %97, %98 : vector<8x128xf32>
    %100 = vector.extract_strided_slice %87 {offsets = [0, 256], sizes = [8, 128], strides = [1, 1]} : vector<8x512xf32> to vector<8x128xf32>
    %101 = math.tanh %100 : vector<8x128xf32>
    %102 = vector.extract_strided_slice %87 {offsets = [0, 384], sizes = [8, 128], strides = [1, 1]} : vector<8x512xf32> to vector<8x128xf32>
    %103 = arith.negf %102 : vector<8x128xf32>
    %104 = math.exp %103 : vector<8x128xf32>
    %cst_45 = arith.constant 1.000000e+00 : f32
    %105 = vector.broadcast %cst_45 : f32 to vector<8x128xf32>
    %106 = arith.addf %105, %104 : vector<8x128xf32>
    %107 = arith.divf %105, %106 : vector<8x128xf32>
    %c0_46 = arith.constant 0 : index
    %c0_47 = arith.constant 0 : index
    %108 = vector.load %arg9[%c0_46, %c0_47] : memref<8x128xf32, #tpu.memory_space<vmem>>, vector<8x128xf32>
    %109 = arith.mulf %99, %108 : vector<8x128xf32>
    %110 = arith.mulf %93, %101 : vector<8x128xf32>
    %111 = arith.addf %109, %110 : vector<8x128xf32>
    %112 = math.tanh %111 : vector<8x128xf32>
    %113 = arith.mulf %107, %112 : vector<8x128xf32>
    %c0_48 = arith.constant 0 : index
    %c0_49 = arith.constant 0 : index
    %114 = vector.load %arg8[%c0_48, %c0_49] : memref<8x128xf32, #tpu.memory_space<vmem>>, vector<8x128xf32>
    tpu.vector_store %arg8[%c0_48, %c0_49], %113 {strides = array<i32>} : memref<8x128xf32, #tpu.memory_space<vmem>>, vector<8x128xf32>,
    %c0_50 = arith.constant 0 : index
    %c0_51 = arith.constant 0 : index
    %115 = vector.load %arg9[%c0_50, %c0_51] : memref<8x128xf32, #tpu.memory_space<vmem>>, vector<8x128xf32>
    tpu.vector_store %arg9[%c0_50, %c0_51], %111 {strides = array<i32>} : memref<8x128xf32, #tpu.memory_space<vmem>>, vector<8x128xf32>,
    %116 = arith.index_cast %c2_i32 : i32 to index
    %c0_52 = arith.constant 0 : index
    %c0_53 = arith.constant 0 : index
    %117 = vector.load %arg6[%116, %c0_52, %c0_53] : memref<8x8x128xf32, #tpu.memory_space<vmem>>, vector<1x8x128xf32>
    %118 = vector.shape_cast %117 : vector<1x8x128xf32> to vector<8x128xf32>
    %119 = vector.shape_cast %113 : vector<8x128xf32> to vector<1x8x128xf32>
    tpu.vector_store %arg6[%116, %c0_52, %c0_53], %119 {strides = array<i32>} : memref<8x8x128xf32, #tpu.memory_space<vmem>>, vector<1x8x128xf32>,
    %c3_i32 = arith.constant 3 : i32
    %120 = arith.index_cast %c3_i32 : i32 to index
    %c0_54 = arith.constant 0 : index
    %c0_55 = arith.constant 0 : index
    %121 = vector.load %arg2[%120, %c0_54, %c0_55] : memref<8x8x512xf32, #tpu.memory_space<vmem>>, vector<1x8x512xf32>
    %122 = vector.shape_cast %121 : vector<1x8x512xf32> to vector<8x512xf32>
    %c0_56 = arith.constant 0 : index
    %c0_57 = arith.constant 0 : index
    %123 = vector.load %arg8[%c0_56, %c0_57] : memref<8x128xf32, #tpu.memory_space<vmem>>, vector<8x128xf32>
    %c0_58 = arith.constant 0 : index
    %c0_59 = arith.constant 0 : index
    %124 = vector.load %arg5[%c0_58, %c0_59] : memref<128x512xf32, #tpu.memory_space<vmem>>, vector<128x512xf32>
    %cst_60 = arith.constant dense<0.000000e+00> : vector<8x512xf32>
    %125 = tpu.matmul %123, %124, %cst_60 {dimension_numbers = #tpu.dot_dimension_numbers<[1], [0], [0], [1], [0, 0, 1, 1], [], []>} : vector<8x128xf32>, vector<128x512xf32>, vector<8x512xf32> -> vector<8x512xf32>
    %126 = arith.addf %122, %125 : vector<8x512xf32>
    %127 = vector.extract_strided_slice %126 {offsets = [0, 0], sizes = [8, 128], strides = [1, 1]} : vector<8x512xf32> to vector<8x128xf32>
    %128 = arith.negf %127 : vector<8x128xf32>
    %129 = math.exp %128 : vector<8x128xf32>
    %cst_61 = arith.constant 1.000000e+00 : f32
    %130 = vector.broadcast %cst_61 : f32 to vector<8x128xf32>
    %131 = arith.addf %130, %129 : vector<8x128xf32>
    %132 = arith.divf %130, %131 : vector<8x128xf32>
    %133 = vector.extract_strided_slice %126 {offsets = [0, 128], sizes = [8, 128], strides = [1, 1]} : vector<8x512xf32> to vector<8x128xf32>
    %134 = arith.negf %133 : vector<8x128xf32>
    %135 = math.exp %134 : vector<8x128xf32>
    %cst_62 = arith.constant 1.000000e+00 : f32
    %136 = vector.broadcast %cst_62 : f32 to vector<8x128xf32>
    %137 = arith.addf %136, %135 : vector<8x128xf32>
    %138 = arith.divf %136, %137 : vector<8x128xf32>
    %139 = vector.extract_strided_slice %126 {offsets = [0, 256], sizes = [8, 128], strides = [1, 1]} : vector<8x512xf32> to vector<8x128xf32>
    %140 = math.tanh %139 : vector<8x128xf32>
    %141 = vector.extract_strided_slice %126 {offsets = [0, 384], sizes = [8, 128], strides = [1, 1]} : vector<8x512xf32> to vector<8x128xf32>
    %142 = arith.negf %141 : vector<8x128xf32>
    %143 = math.exp %142 : vector<8x128xf32>
    %cst_63 = arith.constant 1.000000e+00 : f32
    %144 = vector.broadcast %cst_63 : f32 to vector<8x128xf32>
    %145 = arith.addf %144, %143 : vector<8x128xf32>
    %146 = arith.divf %144, %145 : vector<8x128xf32>
    %c0_64 = arith.constant 0 : index
    %c0_65 = arith.constant 0 : index
    %147 = vector.load %arg9[%c0_64, %c0_65] : memref<8x128xf32, #tpu.memory_space<vmem>>, vector<8x128xf32>
    %148 = arith.mulf %138, %147 : vector<8x128xf32>
    %149 = arith.mulf %132, %140 : vector<8x128xf32>
    %150 = arith.addf %148, %149 : vector<8x128xf32>
    %151 = math.tanh %150 : vector<8x128xf32>
    %152 = arith.mulf %146, %151 : vector<8x128xf32>
    %c0_66 = arith.constant 0 : index
    %c0_67 = arith.constant 0 : index
    %153 = vector.load %arg8[%c0_66, %c0_67] : memref<8x128xf32, #tpu.memory_space<vmem>>, vector<8x128xf32>
    tpu.vector_store %arg8[%c0_66, %c0_67], %152 {strides = array<i32>} : memref<8x128xf32, #tpu.memory_space<vmem>>, vector<8x128xf32>,
    %c0_68 = arith.constant 0 : index
    %c0_69 = arith.constant 0 : index
    %154 = vector.load %arg9[%c0_68, %c0_69] : memref<8x128xf32, #tpu.memory_space<vmem>>, vector<8x128xf32>
    tpu.vector_store %arg9[%c0_68, %c0_69], %150 {strides = array<i32>} : memref<8x128xf32, #tpu.memory_space<vmem>>, vector<8x128xf32>,
    %155 = arith.index_cast %c3_i32 : i32 to index
    %c0_70 = arith.constant 0 : index
    %c0_71 = arith.constant 0 : index
    %156 = vector.load %arg6[%155, %c0_70, %c0_71] : memref<8x8x128xf32, #tpu.memory_space<vmem>>, vector<1x8x128xf32>
    %157 = vector.shape_cast %156 : vector<1x8x128xf32> to vector<8x128xf32>
    %158 = vector.shape_cast %152 : vector<8x128xf32> to vector<1x8x128xf32>
    tpu.vector_store %arg6[%155, %c0_70, %c0_71], %158 {strides = array<i32>} : memref<8x8x128xf32, #tpu.memory_space<vmem>>, vector<1x8x128xf32>,
    %c4_i32 = arith.constant 4 : i32
    %159 = arith.index_cast %c4_i32 : i32 to index
    %c0_72 = arith.constant 0 : index
    %c0_73 = arith.constant 0 : index
    %160 = vector.load %arg2[%159, %c0_72, %c0_73] : memref<8x8x512xf32, #tpu.memory_space<vmem>>, vector<1x8x512xf32>
    %161 = vector.shape_cast %160 : vector<1x8x512xf32> to vector<8x512xf32>
    %c0_74 = arith.constant 0 : index
    %c0_75 = arith.constant 0 : index
    %162 = vector.load %arg8[%c0_74, %c0_75] : memref<8x128xf32, #tpu.memory_space<vmem>>, vector<8x128xf32>
    %c0_76 = arith.constant 0 : index
    %c0_77 = arith.constant 0 : index
    %163 = vector.load %arg5[%c0_76, %c0_77] : memref<128x512xf32, #tpu.memory_space<vmem>>, vector<128x512xf32>
    %cst_78 = arith.constant dense<0.000000e+00> : vector<8x512xf32>
    %164 = tpu.matmul %162, %163, %cst_78 {dimension_numbers = #tpu.dot_dimension_numbers<[1], [0], [0], [1], [0, 0, 1, 1], [], []>} : vector<8x128xf32>, vector<128x512xf32>, vector<8x512xf32> -> vector<8x512xf32>
    %165 = arith.addf %161, %164 : vector<8x512xf32>
    %166 = vector.extract_strided_slice %165 {offsets = [0, 0], sizes = [8, 128], strides = [1, 1]} : vector<8x512xf32> to vector<8x128xf32>
    %167 = arith.negf %166 : vector<8x128xf32>
    %168 = math.exp %167 : vector<8x128xf32>
    %cst_79 = arith.constant 1.000000e+00 : f32
    %169 = vector.broadcast %cst_79 : f32 to vector<8x128xf32>
    %170 = arith.addf %169, %168 : vector<8x128xf32>
    %171 = arith.divf %169, %170 : vector<8x128xf32>
    %172 = vector.extract_strided_slice %165 {offsets = [0, 128], sizes = [8, 128], strides = [1, 1]} : vector<8x512xf32> to vector<8x128xf32>
    %173 = arith.negf %172 : vector<8x128xf32>
    %174 = math.exp %173 : vector<8x128xf32>
    %cst_80 = arith.constant 1.000000e+00 : f32
    %175 = vector.broadcast %cst_80 : f32 to vector<8x128xf32>
    %176 = arith.addf %175, %174 : vector<8x128xf32>
    %177 = arith.divf %175, %176 : vector<8x128xf32>
    %178 = vector.extract_strided_slice %165 {offsets = [0, 256], sizes = [8, 128], strides = [1, 1]} : vector<8x512xf32> to vector<8x128xf32>
    %179 = math.tanh %178 : vector<8x128xf32>
    %180 = vector.extract_strided_slice %165 {offsets = [0, 384], sizes = [8, 128], strides = [1, 1]} : vector<8x512xf32> to vector<8x128xf32>
    %181 = arith.negf %180 : vector<8x128xf32>
    %182 = math.exp %181 : vector<8x128xf32>
    %cst_81 = arith.constant 1.000000e+00 : f32
    %183 = vector.broadcast %cst_81 : f32 to vector<8x128xf32>
    %184 = arith.addf %183, %182 : vector<8x128xf32>
    %185 = arith.divf %183, %184 : vector<8x128xf32>
    %c0_82 = arith.constant 0 : index
    %c0_83 = arith.constant 0 : index
    %186 = vector.load %arg9[%c0_82, %c0_83] : memref<8x128xf32, #tpu.memory_space<vmem>>, vector<8x128xf32>
    %187 = arith.mulf %177, %186 : vector<8x128xf32>
    %188 = arith.mulf %171, %179 : vector<8x128xf32>
    %189 = arith.addf %187, %188 : vector<8x128xf32>
    %190 = math.tanh %189 : vector<8x128xf32>
    %191 = arith.mulf %185, %190 : vector<8x128xf32>
    %c0_84 = arith.constant 0 : index
    %c0_85 = arith.constant 0 : index
    %192 = vector.load %arg8[%c0_84, %c0_85] : memref<8x128xf32, #tpu.memory_space<vmem>>, vector<8x128xf32>
    tpu.vector_store %arg8[%c0_84, %c0_85], %191 {strides = array<i32>} : memref<8x128xf32, #tpu.memory_space<vmem>>, vector<8x128xf32>,
    %c0_86 = arith.constant 0 : index
    %c0_87 = arith.constant 0 : index
    %193 = vector.load %arg9[%c0_86, %c0_87] : memref<8x128xf32, #tpu.memory_space<vmem>>, vector<8x128xf32>
    tpu.vector_store %arg9[%c0_86, %c0_87], %189 {strides = array<i32>} : memref<8x128xf32, #tpu.memory_space<vmem>>, vector<8x128xf32>,
    %194 = arith.index_cast %c4_i32 : i32 to index
    %c0_88 = arith.constant 0 : index
    %c0_89 = arith.constant 0 : index
    %195 = vector.load %arg6[%194, %c0_88, %c0_89] : memref<8x8x128xf32, #tpu.memory_space<vmem>>, vector<1x8x128xf32>
    %196 = vector.shape_cast %195 : vector<1x8x128xf32> to vector<8x128xf32>
    %197 = vector.shape_cast %191 : vector<8x128xf32> to vector<1x8x128xf32>
    tpu.vector_store %arg6[%194, %c0_88, %c0_89], %197 {strides = array<i32>} : memref<8x8x128xf32, #tpu.memory_space<vmem>>, vector<1x8x128xf32>,
    %c5_i32 = arith.constant 5 : i32
    %198 = arith.index_cast %c5_i32 : i32 to index
    %c0_90 = arith.constant 0 : index
    %c0_91 = arith.constant 0 : index
    %199 = vector.load %arg2[%198, %c0_90, %c0_91] : memref<8x8x512xf32, #tpu.memory_space<vmem>>, vector<1x8x512xf32>
    %200 = vector.shape_cast %199 : vector<1x8x512xf32> to vector<8x512xf32>
    %c0_92 = arith.constant 0 : index
    %c0_93 = arith.constant 0 : index
    %201 = vector.load %arg8[%c0_92, %c0_93] : memref<8x128xf32, #tpu.memory_space<vmem>>, vector<8x128xf32>
    %c0_94 = arith.constant 0 : index
    %c0_95 = arith.constant 0 : index
    %202 = vector.load %arg5[%c0_94, %c0_95] : memref<128x512xf32, #tpu.memory_space<vmem>>, vector<128x512xf32>
    %cst_96 = arith.constant dense<0.000000e+00> : vector<8x512xf32>
    %203 = tpu.matmul %201, %202, %cst_96 {dimension_numbers = #tpu.dot_dimension_numbers<[1], [0], [0], [1], [0, 0, 1, 1], [], []>} : vector<8x128xf32>, vector<128x512xf32>, vector<8x512xf32> -> vector<8x512xf32>
    %204 = arith.addf %200, %203 : vector<8x512xf32>
    %205 = vector.extract_strided_slice %204 {offsets = [0, 0], sizes = [8, 128], strides = [1, 1]} : vector<8x512xf32> to vector<8x128xf32>
    %206 = arith.negf %205 : vector<8x128xf32>
    %207 = math.exp %206 : vector<8x128xf32>
    %cst_97 = arith.constant 1.000000e+00 : f32
    %208 = vector.broadcast %cst_97 : f32 to vector<8x128xf32>
    %209 = arith.addf %208, %207 : vector<8x128xf32>
    %210 = arith.divf %208, %209 : vector<8x128xf32>
    %211 = vector.extract_strided_slice %204 {offsets = [0, 128], sizes = [8, 128], strides = [1, 1]} : vector<8x512xf32> to vector<8x128xf32>
    %212 = arith.negf %211 : vector<8x128xf32>
    %213 = math.exp %212 : vector<8x128xf32>
    %cst_98 = arith.constant 1.000000e+00 : f32
    %214 = vector.broadcast %cst_98 : f32 to vector<8x128xf32>
    %215 = arith.addf %214, %213 : vector<8x128xf32>
    %216 = arith.divf %214, %215 : vector<8x128xf32>
    %217 = vector.extract_strided_slice %204 {offsets = [0, 256], sizes = [8, 128], strides = [1, 1]} : vector<8x512xf32> to vector<8x128xf32>
    %218 = math.tanh %217 : vector<8x128xf32>
    %219 = vector.extract_strided_slice %204 {offsets = [0, 384], sizes = [8, 128], strides = [1, 1]} : vector<8x512xf32> to vector<8x128xf32>
    %220 = arith.negf %219 : vector<8x128xf32>
    %221 = math.exp %220 : vector<8x128xf32>
    %cst_99 = arith.constant 1.000000e+00 : f32
    %222 = vector.broadcast %cst_99 : f32 to vector<8x128xf32>
    %223 = arith.addf %222, %221 : vector<8x128xf32>
    %224 = arith.divf %222, %223 : vector<8x128xf32>
    %c0_100 = arith.constant 0 : index
    %c0_101 = arith.constant 0 : index
    %225 = vector.load %arg9[%c0_100, %c0_101] : memref<8x128xf32, #tpu.memory_space<vmem>>, vector<8x128xf32>
    %226 = arith.mulf %216, %225 : vector<8x128xf32>
    %227 = arith.mulf %210, %218 : vector<8x128xf32>
    %228 = arith.addf %226, %227 : vector<8x128xf32>
    %229 = math.tanh %228 : vector<8x128xf32>
    %230 = arith.mulf %224, %229 : vector<8x128xf32>
    %c0_102 = arith.constant 0 : index
    %c0_103 = arith.constant 0 : index
    %231 = vector.load %arg8[%c0_102, %c0_103] : memref<8x128xf32, #tpu.memory_space<vmem>>, vector<8x128xf32>
    tpu.vector_store %arg8[%c0_102, %c0_103], %230 {strides = array<i32>} : memref<8x128xf32, #tpu.memory_space<vmem>>, vector<8x128xf32>,
    %c0_104 = arith.constant 0 : index
    %c0_105 = arith.constant 0 : index
    %232 = vector.load %arg9[%c0_104, %c0_105] : memref<8x128xf32, #tpu.memory_space<vmem>>, vector<8x128xf32>
    tpu.vector_store %arg9[%c0_104, %c0_105], %228 {strides = array<i32>} : memref<8x128xf32, #tpu.memory_space<vmem>>, vector<8x128xf32>,
    %233 = arith.index_cast %c5_i32 : i32 to index
    %c0_106 = arith.constant 0 : index
    %c0_107 = arith.constant 0 : index
    %234 = vector.load %arg6[%233, %c0_106, %c0_107] : memref<8x8x128xf32, #tpu.memory_space<vmem>>, vector<1x8x128xf32>
    %235 = vector.shape_cast %234 : vector<1x8x128xf32> to vector<8x128xf32>
    %236 = vector.shape_cast %230 : vector<8x128xf32> to vector<1x8x128xf32>
    tpu.vector_store %arg6[%233, %c0_106, %c0_107], %236 {strides = array<i32>} : memref<8x8x128xf32, #tpu.memory_space<vmem>>, vector<1x8x128xf32>,
    %c6_i32 = arith.constant 6 : i32
    %237 = arith.index_cast %c6_i32 : i32 to index
    %c0_108 = arith.constant 0 : index
    %c0_109 = arith.constant 0 : index
    %238 = vector.load %arg2[%237, %c0_108, %c0_109] : memref<8x8x512xf32, #tpu.memory_space<vmem>>, vector<1x8x512xf32>
    %239 = vector.shape_cast %238 : vector<1x8x512xf32> to vector<8x512xf32>
    %c0_110 = arith.constant 0 : index
    %c0_111 = arith.constant 0 : index
    %240 = vector.load %arg8[%c0_110, %c0_111] : memref<8x128xf32, #tpu.memory_space<vmem>>, vector<8x128xf32>
    %c0_112 = arith.constant 0 : index
    %c0_113 = arith.constant 0 : index
    %241 = vector.load %arg5[%c0_112, %c0_113] : memref<128x512xf32, #tpu.memory_space<vmem>>, vector<128x512xf32>
    %cst_114 = arith.constant dense<0.000000e+00> : vector<8x512xf32>
    %242 = tpu.matmul %240, %241, %cst_114 {dimension_numbers = #tpu.dot_dimension_numbers<[1], [0], [0], [1], [0, 0, 1, 1], [], []>} : vector<8x128xf32>, vector<128x512xf32>, vector<8x512xf32> -> vector<8x512xf32>
    %243 = arith.addf %239, %242 : vector<8x512xf32>
    %244 = vector.extract_strided_slice %243 {offsets = [0, 0], sizes = [8, 128], strides = [1, 1]} : vector<8x512xf32> to vector<8x128xf32>
    %245 = arith.negf %244 : vector<8x128xf32>
    %246 = math.exp %245 : vector<8x128xf32>
    %cst_115 = arith.constant 1.000000e+00 : f32
    %247 = vector.broadcast %cst_115 : f32 to vector<8x128xf32>
    %248 = arith.addf %247, %246 : vector<8x128xf32>
    %249 = arith.divf %247, %248 : vector<8x128xf32>
    %250 = vector.extract_strided_slice %243 {offsets = [0, 128], sizes = [8, 128], strides = [1, 1]} : vector<8x512xf32> to vector<8x128xf32>
    %251 = arith.negf %250 : vector<8x128xf32>
    %252 = math.exp %251 : vector<8x128xf32>
    %cst_116 = arith.constant 1.000000e+00 : f32
    %253 = vector.broadcast %cst_116 : f32 to vector<8x128xf32>
    %254 = arith.addf %253, %252 : vector<8x128xf32>
    %255 = arith.divf %253, %254 : vector<8x128xf32>
    %256 = vector.extract_strided_slice %243 {offsets = [0, 256], sizes = [8, 128], strides = [1, 1]} : vector<8x512xf32> to vector<8x128xf32>
    %257 = math.tanh %256 : vector<8x128xf32>
    %258 = vector.extract_strided_slice %243 {offsets = [0, 384], sizes = [8, 128], strides = [1, 1]} : vector<8x512xf32> to vector<8x128xf32>
    %259 = arith.negf %258 : vector<8x128xf32>
    %260 = math.exp %259 : vector<8x128xf32>
    %cst_117 = arith.constant 1.000000e+00 : f32
    %261 = vector.broadcast %cst_117 : f32 to vector<8x128xf32>
    %262 = arith.addf %261, %260 : vector<8x128xf32>
    %263 = arith.divf %261, %262 : vector<8x128xf32>
    %c0_118 = arith.constant 0 : index
    %c0_119 = arith.constant 0 : index
    %264 = vector.load %arg9[%c0_118, %c0_119] : memref<8x128xf32, #tpu.memory_space<vmem>>, vector<8x128xf32>
    %265 = arith.mulf %255, %264 : vector<8x128xf32>
    %266 = arith.mulf %249, %257 : vector<8x128xf32>
    %267 = arith.addf %265, %266 : vector<8x128xf32>
    %268 = math.tanh %267 : vector<8x128xf32>
    %269 = arith.mulf %263, %268 : vector<8x128xf32>
    %c0_120 = arith.constant 0 : index
    %c0_121 = arith.constant 0 : index
    %270 = vector.load %arg8[%c0_120, %c0_121] : memref<8x128xf32, #tpu.memory_space<vmem>>, vector<8x128xf32>
    tpu.vector_store %arg8[%c0_120, %c0_121], %269 {strides = array<i32>} : memref<8x128xf32, #tpu.memory_space<vmem>>, vector<8x128xf32>,
    %c0_122 = arith.constant 0 : index
    %c0_123 = arith.constant 0 : index
    %271 = vector.load %arg9[%c0_122, %c0_123] : memref<8x128xf32, #tpu.memory_space<vmem>>, vector<8x128xf32>
    tpu.vector_store %arg9[%c0_122, %c0_123], %267 {strides = array<i32>} : memref<8x128xf32, #tpu.memory_space<vmem>>, vector<8x128xf32>,
    %272 = arith.index_cast %c6_i32 : i32 to index
    %c0_124 = arith.constant 0 : index
    %c0_125 = arith.constant 0 : index
    %273 = vector.load %arg6[%272, %c0_124, %c0_125] : memref<8x8x128xf32, #tpu.memory_space<vmem>>, vector<1x8x128xf32>
    %274 = vector.shape_cast %273 : vector<1x8x128xf32> to vector<8x128xf32>
    %275 = vector.shape_cast %269 : vector<8x128xf32> to vector<1x8x128xf32>
    tpu.vector_store %arg6[%272, %c0_124, %c0_125], %275 {strides = array<i32>} : memref<8x8x128xf32, #tpu.memory_space<vmem>>, vector<1x8x128xf32>,
    %c7_i32 = arith.constant 7 : i32
    %276 = arith.index_cast %c7_i32 : i32 to index
    %c0_126 = arith.constant 0 : index
    %c0_127 = arith.constant 0 : index
    %277 = vector.load %arg2[%276, %c0_126, %c0_127] : memref<8x8x512xf32, #tpu.memory_space<vmem>>, vector<1x8x512xf32>
    %278 = vector.shape_cast %277 : vector<1x8x512xf32> to vector<8x512xf32>
    %c0_128 = arith.constant 0 : index
    %c0_129 = arith.constant 0 : index
    %279 = vector.load %arg8[%c0_128, %c0_129] : memref<8x128xf32, #tpu.memory_space<vmem>>, vector<8x128xf32>
    %c0_130 = arith.constant 0 : index
    %c0_131 = arith.constant 0 : index
    %280 = vector.load %arg5[%c0_130, %c0_131] : memref<128x512xf32, #tpu.memory_space<vmem>>, vector<128x512xf32>
    %cst_132 = arith.constant dense<0.000000e+00> : vector<8x512xf32>
    %281 = tpu.matmul %279, %280, %cst_132 {dimension_numbers = #tpu.dot_dimension_numbers<[1], [0], [0], [1], [0, 0, 1, 1], [], []>} : vector<8x128xf32>, vector<128x512xf32>, vector<8x512xf32> -> vector<8x512xf32>
    %282 = arith.addf %278, %281 : vector<8x512xf32>
    %283 = vector.extract_strided_slice %282 {offsets = [0, 0], sizes = [8, 128], strides = [1, 1]} : vector<8x512xf32> to vector<8x128xf32>
    %284 = arith.negf %283 : vector<8x128xf32>
    %285 = math.exp %284 : vector<8x128xf32>
    %cst_133 = arith.constant 1.000000e+00 : f32
    %286 = vector.broadcast %cst_133 : f32 to vector<8x128xf32>
    %287 = arith.addf %286, %285 : vector<8x128xf32>
    %288 = arith.divf %286, %287 : vector<8x128xf32>
    %289 = vector.extract_strided_slice %282 {offsets = [0, 128], sizes = [8, 128], strides = [1, 1]} : vector<8x512xf32> to vector<8x128xf32>
    %290 = arith.negf %289 : vector<8x128xf32>
    %291 = math.exp %290 : vector<8x128xf32>
    %cst_134 = arith.constant 1.000000e+00 : f32
    %292 = vector.broadcast %cst_134 : f32 to vector<8x128xf32>
    %293 = arith.addf %292, %291 : vector<8x128xf32>
    %294 = arith.divf %292, %293 : vector<8x128xf32>
    %295 = vector.extract_strided_slice %282 {offsets = [0, 256], sizes = [8, 128], strides = [1, 1]} : vector<8x512xf32> to vector<8x128xf32>
    %296 = math.tanh %295 : vector<8x128xf32>
    %297 = vector.extract_strided_slice %282 {offsets = [0, 384], sizes = [8, 128], strides = [1, 1]} : vector<8x512xf32> to vector<8x128xf32>
    %298 = arith.negf %297 : vector<8x128xf32>
    %299 = math.exp %298 : vector<8x128xf32>
    %cst_135 = arith.constant 1.000000e+00 : f32
    %300 = vector.broadcast %cst_135 : f32 to vector<8x128xf32>
    %301 = arith.addf %300, %299 : vector<8x128xf32>
    %302 = arith.divf %300, %301 : vector<8x128xf32>
    %c0_136 = arith.constant 0 : index
    %c0_137 = arith.constant 0 : index
    %303 = vector.load %arg9[%c0_136, %c0_137] : memref<8x128xf32, #tpu.memory_space<vmem>>, vector<8x128xf32>
    %304 = arith.mulf %294, %303 : vector<8x128xf32>
    %305 = arith.mulf %288, %296 : vector<8x128xf32>
    %306 = arith.addf %304, %305 : vector<8x128xf32>
    %307 = math.tanh %306 : vector<8x128xf32>
    %308 = arith.mulf %302, %307 : vector<8x128xf32>
    %c0_138 = arith.constant 0 : index
    %c0_139 = arith.constant 0 : index
    %309 = vector.load %arg8[%c0_138, %c0_139] : memref<8x128xf32, #tpu.memory_space<vmem>>, vector<8x128xf32>
    tpu.vector_store %arg8[%c0_138, %c0_139], %308 {strides = array<i32>} : memref<8x128xf32, #tpu.memory_space<vmem>>, vector<8x128xf32>,
    %c0_140 = arith.constant 0 : index
    %c0_141 = arith.constant 0 : index
    %310 = vector.load %arg9[%c0_140, %c0_141] : memref<8x128xf32, #tpu.memory_space<vmem>>, vector<8x128xf32>
    tpu.vector_store %arg9[%c0_140, %c0_141], %306 {strides = array<i32>} : memref<8x128xf32, #tpu.memory_space<vmem>>, vector<8x128xf32>,
    %311 = arith.index_cast %c7_i32 : i32 to index
    %c0_142 = arith.constant 0 : index
    %c0_143 = arith.constant 0 : index
    %312 = vector.load %arg6[%311, %c0_142, %c0_143] : memref<8x8x128xf32, #tpu.memory_space<vmem>>, vector<1x8x128xf32>
    %313 = vector.shape_cast %312 : vector<1x8x128xf32> to vector<8x128xf32>
    %314 = vector.shape_cast %308 : vector<8x128xf32> to vector<1x8x128xf32>
    tpu.vector_store %arg6[%311, %c0_142, %c0_143], %314 {strides = array<i32>} : memref<8x8x128xf32, #tpu.memory_space<vmem>>, vector<1x8x128xf32>,
    %c8_i32 = arith.constant 8 : i32
    %c0_i32_144 = arith.constant 0 : i32
    %315 = arith.cmpi eq, %arg1, %c0_i32_144 : i32
    %316 = arith.extui %315 : i1 to i32
    %c0_i32_145 = arith.constant 0 : i32
    %317 = arith.cmpi ne, %316, %c0_i32_145 : i32
    scf.if %317 {
      %c0_146 = arith.constant 0 : index
      %c0_147 = arith.constant 0 : index
      %318 = vector.load %arg9[%c0_146, %c0_147] : memref<8x128xf32, #tpu.memory_space<vmem>>, vector<8x128xf32>
      %c0_148 = arith.constant 0 : index
      %c0_149 = arith.constant 0 : index
      %319 = vector.load %arg7[%c0_148, %c0_149] : memref<8x128xf32, #tpu.memory_space<vmem>>, vector<8x128xf32>
      tpu.vector_store %arg7[%c0_148, %c0_149], %318 {strides = array<i32>} : memref<8x128xf32, #tpu.memory_space<vmem>>, vector<8x128xf32>,
    } else {
    }
    return
  }
  func.func @transform_0(%arg0: i32, %arg1: i32) -> (i32, i32, i32) {
    %c0_i32 = arith.constant 0 : i32
    %c0_i32_0 = arith.constant 0 : i32
    return %arg1, %arg0, %c0_i32 : i32, i32, i32
  }
  func.func @transform_1(%arg0: i32, %arg1: i32) -> (i32, i32, i32) {
    %c0_i32 = arith.constant 0 : i32
    %c0_i32_0 = arith.constant 0 : i32
    %c0_i32_1 = arith.constant 0 : i32
    return %c0_i32, %arg0, %c0_i32_0 : i32, i32, i32
  }
  func.func @transform_2(%arg0: i32, %arg1: i32) -> (i32, i32, i32) {
    %c0_i32 = arith.constant 0 : i32
    %c0_i32_0 = arith.constant 0 : i32
    %c0_i32_1 = arith.constant 0 : i32
    return %c0_i32, %arg0, %c0_i32_0 : i32, i32, i32
  }
  func.func @transform_3(%arg0: i32, %arg1: i32) -> (i32, i32) {
    %c0_i32 = arith.constant 0 : i32
    %c0_i32_0 = arith.constant 0 : i32
    %c0_i32_1 = arith.constant 0 : i32
    return %c0_i32, %c0_i32_0 : i32, i32
  }
  func.func @transform_4(%arg0: i32, %arg1: i32) -> (i32, i32, i32) {
    %c0_i32 = arith.constant 0 : i32
    %c0_i32_0 = arith.constant 0 : i32
    return %arg1, %arg0, %c0_i32 : i32, i32, i32
  }
  func.func @transform_5(%arg0: i32, %arg1: i32) -> (i32, i32) {
    %c0_i32 = arith.constant 0 : i32
    %c0_i32_0 = arith.constant 0 : i32
    return %arg0, %c0_i32 : i32, i32
  }
}

</mosaic_0001>

<llo_original>
// kernel: tpu_custom_call.1
$region0: #{tpu_custom_call.1}
  #allocation0 [shape = 'u32[]', space=smem, size = 0x4, offset = 0x4, fixed_abs, tag = 'smem constant byte address 0x4 - core index']
  #allocation1 [shape = 'u32[72,128]{1,0:T(1,128)}', space=vmem, size = 0x9000, scoped, tag = 'internal scratch']
  #allocation2 [shape = 'f32[8,128]{1,0:T(8,128)}', space=vmem, size = 0x1000, scoped, tag = 'scratch operand']
  #allocation3 [shape = 'f32[8,128]{1,0:T(8,128)}', space=vmem, size = 0x1000, scoped, tag = 'scratch operand']
  %s0 = inlined_call_operand.hbm [shape: f32[8,8,512], index: 0, kind: input, shape index: {}]
  %s1 = inlined_call_operand.hbm [shape: f32[1,8,128], index: 1, kind: input, shape index: {}]
  %s2 = inlined_call_operand.hbm [shape: f32[1,8,128], index: 2, kind: input, shape index: {}]
  %s3 = inlined_call_operand.hbm [shape: f32[128,512], index: 3, kind: input, shape index: {}]
  %s4 = inlined_call_operand.hbm [shape: f32[8,8,128], index: 4, kind: output, shape index: {0}]
  %s5 = inlined_call_operand.hbm [shape: f32[8,128], index: 5, kind: output, shape index: {1}]
  %6 = xla_tuple %s4, %s5
  %s7 = sld [smem:[#allocation0]]
  $region58: #{tpu_custom_call.1} parent=0
    _
  %s9 = ssub.s32 1, %s7
  %s10 = scalar_select 0, %s9, %s7
  $region1: #{tpu_custom_call.1} parent=0
    #allocation4 [shape = 'u8[131072]{0}', space=vmem, size = 0x20000, scoped, tag = 'input window, operand 0, single buffered']
    #allocation5 [shape = 's32[1]{0}', space=sflag, size = 0x4, scoped, tag = 'scoped memory for tpu_custom_call.1']
    #allocation6 [shape = 's32[1]{0}', space=sflag, size = 0x4, scoped, tag = 'scoped memory for tpu_custom_call.1']
    #allocation7 [shape = 'u8[4096]{0}', space=vmem, size = 0x1000, scoped, tag = 'input window, operand 1, single buffered']
    #allocation8 [shape = 's32[1]{0}', space=sflag, size = 0x4, scoped, tag = 'scoped memory for tpu_custom_call.1']
    #allocation9 [shape = 'u8[4096]{0}', space=vmem, size = 0x1000, scoped, tag = 'input window, operand 2, single buffered']
    #allocation10 [shape = 'u8[262144]{0}', space=vmem, size = 0x40000, scoped, tag = 'input window, operand 3, single buffered']
    #allocation11 [shape = 's32[1]{0}', space=sflag, size = 0x4, scoped, tag = 'scoped memory for tpu_custom_call.1']
    #allocation12 [shape = 'u8[32768]{0}', space=vmem, size = 0x8000, scoped, tag = 'output window, operand 0, single buffered']
    #allocation13 [shape = 'u8[4096]{0}', space=vmem, size = 0x1000, scoped, tag = 'output window, operand 1, single buffered']
    #allocation14 [shape = 's32[1]{0}', space=sflag, size = 0x4, scoped, tag = 'scoped memory for tpu_custom_call.1']
    %11 = vsyncpa [#allocation5], 0
    %12 = vsyncpa [#allocation8], 0
    %13 = vsyncpa [#allocation11], 0
    %14 = vsyncpa [#allocation6], 0
    %15 = vsyncpa [#allocation14], 0
    // Predicated region
    $region2: #{tpu_custom_call.1} parent=1 // pred_check
      _
    $region3: #{tpu_custom_call.1} parent=1 // pred_check_branch
      %17 = sbr.rel (0) target = $region5
    $region4: #{tpu_custom_call.1} parent=1 // pred_region
      %19 = vsyncadd [#allocation5], 0
      %s20 = sshll.u32 %s0, 4
      %s21 = int_to_ptr.hbm [resolvable:$true] %s20
      %s22 = sshll.u32 [#allocation4], 4
      %s23 = int_to_ptr.vmem [resolvable:$true] %s22
      %28 = dma.hbm_to_vmem [thread:$0]  %s21, 4096, %s23, [#allocation5], 512, 512, 32
    $region5: #{tpu_custom_call.1} parent=1 // pred_fallthru
      _
    // Predicated region
    $region6: #{tpu_custom_call.1} parent=1 // pred_check
      _
    $region7: #{tpu_custom_call.1} parent=1 // pred_check_branch
      %30 = sbr.rel (0) target = $region9
    $region8: #{tpu_custom_call.1} parent=1 // pred_region
      %32 = vsyncadd [#allocation8], 0
      %s34 = sshll.u32 %s1, 4
      %s35 = int_to_ptr.hbm [resolvable:$true] %s34
      %s36 = sshll.u32 [#allocation7], 4
      %s37 = int_to_ptr.vmem [resolvable:$true] %s36
      %39 = dma.hbm_to_vmem [thread:$0]  %s35, 128, %s37, [#allocation8]
    $region9: #{tpu_custom_call.1} parent=1 // pred_fallthru
      _
    // Predicated region
    $region10: #{tpu_custom_call.1} parent=1 // pred_check
      _
    $region11: #{tpu_custom_call.1} parent=1 // pred_check_branch
      %41 = sbr.rel (0) target = $region13
    $region12: #{tpu_custom_call.1} parent=1 // pred_region
      %43 = vsyncadd [#allocation8], 0
      %s45 = sshll.u32 %s2, 4
      %s46 = int_to_ptr.hbm [resolvable:$true] %s45
      %s47 = sshll.u32 [#allocation9], 4
      %s48 = int_to_ptr.vmem [resolvable:$true] %s47
      %50 = dma.hbm_to_vmem [thread:$0]  %s46, 128, %s48, [#allocation8]
    $region13: #{tpu_custom_call.1} parent=1 // pred_fallthru
      _
    // Predicated region
    $region14: #{tpu_custom_call.1} parent=1 // pred_check
      _
    $region15: #{tpu_custom_call.1} parent=1 // pred_check_branch
      %52 = sbr.rel (0) target = $region17
    $region16: #{tpu_custom_call.1} parent=1 // pred_region
      %54 = vsyncadd [#allocation11], 0
      %s55 = sshll.u32 %s3, 4
      %s56 = int_to_ptr.hbm [resolvable:$true] %s55
      %s57 = sshll.u32 [#allocation10], 4
      %s58 = int_to_ptr.vmem [resolvable:$true] %s57
      %63 = dma.hbm_to_vmem [thread:$0]  %s56, 8192, %s58, [#allocation11], 512, 512, 32
    $region17: #{tpu_custom_call.1} parent=1 // pred_fallthru
      _
    // Predicated region
    $region18: #{tpu_custom_call.1} parent=1 // pred_check
      _
    $region19: #{tpu_custom_call.1} parent=1 // pred_check_branch
      %65 = sbr.rel (0) target = $region21
    $region20: #{tpu_custom_call.1} parent=1 // pred_region
      %67 = dma.done [#allocation5], 4096
    $region21: #{tpu_custom_call.1} parent=1 // pred_fallthru
      _
    // Predicated region
    $region22: #{tpu_custom_call.1} parent=1 // pred_check
      _
    $region23: #{tpu_custom_call.1} parent=1 // pred_check_branch
      %69 = sbr.rel (0) target = $region25
    $region24: #{tpu_custom_call.1} parent=1 // pred_region
      %71 = dma.done [#allocation8], 128
    $region25: #{tpu_custom_call.1} parent=1 // pred_fallthru
      _
    // Predicated region
    $region26: #{tpu_custom_call.1} parent=1 // pred_check
      _
    $region27: #{tpu_custom_call.1} parent=1 // pred_check_branch
      %73 = sbr.rel (0) target = $region29
    $region28: #{tpu_custom_call.1} parent=1 // pred_region
      %75 = dma.done [#allocation8], 128
    $region29: #{tpu_custom_call.1} parent=1 // pred_fallthru
      _
    // Predicated region
    $region30: #{tpu_custom_call.1} parent=1 // pred_check
      _
    $region31: #{tpu_custom_call.1} parent=1 // pred_check_branch
      %77 = sbr.rel (0) target = $region33
    $region32: #{tpu_custom_call.1} parent=1 // pred_region
      %79 = dma.done [#allocation11], 8192
    $region33: #{tpu_custom_call.1} parent=1 // pred_fallthru
      _
    %p80 = scmp.eq.s32.totalorder 0, 0
    // Predicated region
    $region34: #{tpu_custom_call.1} parent=1 // pred_check
      %p81 = pneg %p80
    $region35: #{tpu_custom_call.1} parent=1 // pred_check_branch
      %83 = sbr.rel (%p81) target = $region37
    $region36: #{tpu_custom_call.1} parent=1 // pred_region
      %v84 = vld [vmem:[#allocation7] sm:$0xff]
      %85 = vst [vmem:[#allocation2] sm:$0xff] %v84
      %v86 = vld [vmem:[#allocation9] sm:$0xff]
      %87 = vst [vmem:[#allocation3] sm:$0xff] %v86
    $region37: #{tpu_custom_call.1} parent=1 // pred_fallthru
      _
    %v88 = vld [vmem:[#allocation4] sm:$0xff]
    %v89 = vld [vmem:[#allocation4 + $0x8] sm:$0xff]
    %v90 = vld [vmem:[#allocation4 + $0x10] sm:$0xff]
    %v91 = vld [vmem:[#allocation4 + $0x18] sm:$0xff]
    %v92 = vld [vmem:[#allocation2] sm:$0xff]
    %v93 = vld [vmem:[#allocation10] sm:$0xff]
    %v94 = vld [vmem:[#allocation10 + $0x8] sm:$0xff]
    %v95 = vld [vmem:[#allocation10 + $0x10] sm:$0xff]
    %v96 = vld [vmem:[#allocation10 + $0x18] sm:$0xff]
    %v97 = vld [vmem:[#allocation10 + $0x20] sm:$0xff]
    %v98 = vld [vmem:[#allocation10 + $0x28] sm:$0xff]
    %v99 = vld [vmem:[#allocation10 + $0x30] sm:$0xff]
    %v100 = vld [vmem:[#allocation10 + $0x38] sm:$0xff]
    %v101 = vld [vmem:[#allocation10 + $0x40] sm:$0xff]
    %v102 = vld [vmem:[#allocation10 + $0x48] sm:$0xff]
    %v103 = vld [vmem:[#allocation10 + $0x50] sm:$0xff]
    %v104 = vld [vmem:[#allocation10 + $0x58] sm:$0xff]
    %v105 = vld [vmem:[#allocation10 + $0x60] sm:$0xff]
    %v106 = vld [vmem:[#allocation10 + $0x68] sm:$0xff]
    %v107 = vld [vmem:[#allocation10 + $0x70] sm:$0xff]
    %v108 = vld [vmem:[#allocation10 + $0x78] sm:$0xff]
    %v109 = vld [vmem:[#allocation10 + $0x80] sm:$0xff]
    %v110 = vld [vmem:[#allocation10 + $0x88] sm:$0xff]
    %v111 = vld [vmem:[#allocation10 + $0x90] sm:$0xff]
    %v112 = vld [vmem:[#allocation10 + $0x98] sm:$0xff]
    %v113 = vld [vmem:[#allocation10 + $0xa0] sm:$0xff]
    %v114 = vld [vmem:[#allocation10 + $0xa8] sm:$0xff]
    %v115 = vld [vmem:[#allocation10 + $0xb0] sm:$0xff]
    %v116 = vld [vmem:[#allocation10 + $0xb8] sm:$0xff]
    %v117 = vld [vmem:[#allocation10 + $0xc0] sm:$0xff]
    %v118 = vld [vmem:[#allocation10 + $0xc8] sm:$0xff]
    %v119 = vld [vmem:[#allocation10 + $0xd0] sm:$0xff]
    %v120 = vld [vmem:[#allocation10 + $0xd8] sm:$0xff]
    %v121 = vld [vmem:[#allocation10 + $0xe0] sm:$0xff]
    %v122 = vld [vmem:[#allocation10 + $0xe8] sm:$0xff]
    %v123 = vld [vmem:[#allocation10 + $0xf0] sm:$0xff]
    %v124 = vld [vmem:[#allocation10 + $0xf8] sm:$0xff]
    %v125 = vld [vmem:[#allocation10 + $0x100] sm:$0xff]
    %v126 = vld [vmem:[#allocation10 + $0x108] sm:$0xff]
    %v127 = vld [vmem:[#allocation10 + $0x110] sm:$0xff]
    %v128 = vld [vmem:[#allocation10 + $0x118] sm:$0xff]
    %v129 = vld [vmem:[#allocation10 + $0x120] sm:$0xff]
    %v130 = vld [vmem:[#allocation10 + $0x128] sm:$0xff]
    %v131 = vld [vmem:[#allocation10 + $0x130] sm:$0xff]
    %v132 = vld [vmem:[#allocation10 + $0x138] sm:$0xff]
    %v133 = vld [vmem:[#allocation10 + $0x140] sm:$0xff]
    %v134 = vld [vmem:[#allocation10 + $0x148] sm:$0xff]
    %v135 = vld [vmem:[#allocation10 + $0x150] sm:$0xff]
    %v136 = vld [vmem:[#allocation10 + $0x158] sm:$0xff]
    %v137 = vld [vmem:[#allocation10 + $0x160] sm:$0xff]
    %v138 = vld [vmem:[#allocation10 + $0x168] sm:$0xff]
    %v139 = vld [vmem:[#allocation10 + $0x170] sm:$0xff]
    %v140 = vld [vmem:[#allocation10 + $0x178] sm:$0xff]
    %v141 = vld [vmem:[#allocation10 + $0x180] sm:$0xff]
    %v142 = vld [vmem:[#allocation10 + $0x188] sm:$0xff]
    %v143 = vld [vmem:[#allocation10 + $0x190] sm:$0xff]
    %v144 = vld [vmem:[#allocation10 + $0x198] sm:$0xff]
    %v145 = vld [vmem:[#allocation10 + $0x1a0] sm:$0xff]
    %v146 = vld [vmem:[#allocation10 + $0x1a8] sm:$0xff]
    %v147 = vld [vmem:[#allocation10 + $0x1b0] sm:$0xff]
    %v148 = vld [vmem:[#allocation10 + $0x1b8] sm:$0xff]
    %v149 = vld [vmem:[#allocation10 + $0x1c0] sm:$0xff]
    %v150 = vld [vmem:[#allocation10 + $0x1c8] sm:$0xff]
    %v151 = vld [vmem:[#allocation10 + $0x1d0] sm:$0xff]
    %v152 = vld [vmem:[#allocation10 + $0x1d8] sm:$0xff]
    %v153 = vld [vmem:[#allocation10 + $0x1e0] sm:$0xff]
    %v154 = vld [vmem:[#allocation10 + $0x1e8] sm:$0xff]
    %v155 = vld [vmem:[#allocation10 + $0x1f0] sm:$0xff]
    %v156 = vld [vmem:[#allocation10 + $0x1f8] sm:$0xff]
    %157 = vmatpush.msra.mxu0 %v153
    %158 = vmatpush.msra.mxu0 %v149
    %159 = vmatpush.msra.mxu0 %v145
    %160 = vmatpush.msra.mxu0 %v141
    %161 = vmatpush.msra.mxu0 %v137
    %162 = vmatpush.msra.mxu0 %v133
    %163 = vmatpush.msra.mxu0 %v129
    %164 = vmatpush.msra.mxu0 %v125
    %165 = vmatpush.msra.mxu0 %v121
    %166 = vmatpush.msra.mxu0 %v117
    %167 = vmatpush.msra.mxu0 %v113
    %168 = vmatpush.msra.mxu0 %v109
    %169 = vmatpush.msra.mxu0 %v105
    %170 = vmatpush.msra.mxu0 %v101
    %171 = vmatpush.msra.mxu0 %v97
    %172 = vmatpush.msra.mxu0 %v93
    %173 = vmatmul.f32.gmra.mxu0 %v92
    %v174 = vpop.f32.mrf.mxu0
    %v175 = vadd.f32 0.0, %v174
    %176 = vdwg.mxu0
    %177 = vmatpush.msra.mxu0 %v154
    %178 = vmatpush.msra.mxu0 %v150
    %179 = vmatpush.msra.mxu0 %v146
    %180 = vmatpush.msra.mxu0 %v142
    %181 = vmatpush.msra.mxu0 %v138
    %182 = vmatpush.msra.mxu0 %v134
    %183 = vmatpush.msra.mxu0 %v130
    %184 = vmatpush.msra.mxu0 %v126
    %185 = vmatpush.msra.mxu0 %v122
    %186 = vmatpush.msra.mxu0 %v118
    %187 = vmatpush.msra.mxu0 %v114
    %188 = vmatpush.msra.mxu0 %v110
    %189 = vmatpush.msra.mxu0 %v106
    %190 = vmatpush.msra.mxu0 %v102
    %191 = vmatpush.msra.mxu0 %v98
    %192 = vmatpush.msra.mxu0 %v94
    %193 = vmatmul.f32.gmra.mxu0 %v92
    %v194 = vpop.f32.mrf.mxu0
    %v195 = vadd.f32 0.0, %v194
    %196 = vdwg.mxu0
    %197 = vmatpush.msra.mxu0 %v155
    %198 = vmatpush.msra.mxu0 %v151
    %199 = vmatpush.msra.mxu0 %v147
    %200 = vmatpush.msra.mxu0 %v143
    %201 = vmatpush.msra.mxu0 %v139
    %202 = vmatpush.msra.mxu0 %v135
    %203 = vmatpush.msra.mxu0 %v131
    %204 = vmatpush.msra.mxu0 %v127
    %205 = vmatpush.msra.mxu0 %v123
    %206 = vmatpush.msra.mxu0 %v119
    %207 = vmatpush.msra.mxu0 %v115
    %208 = vmatpush.msra.mxu0 %v111
    %209 = vmatpush.msra.mxu0 %v107
    %210 = vmatpush.msra.mxu0 %v103
    %211 = vmatpush.msra.mxu0 %v99
    %212 = vmatpush.msra.mxu0 %v95
    %213 = vmatmul.f32.gmra.mxu0 %v92
    %v214 = vpop.f32.mrf.mxu0
    %v215 = vadd.f32 0.0, %v214
    %216 = vdwg.mxu0
    %217 = vmatpush.msra.mxu0 %v156
    %218 = vmatpush.msra.mxu0 %v152
    %219 = vmatpush.msra.mxu0 %v148
    %220 = vmatpush.msra.mxu0 %v144
    %221 = vmatpush.msra.mxu0 %v140
    %222 = vmatpush.msra.mxu0 %v136
    %223 = vmatpush.msra.mxu0 %v132
    %224 = vmatpush.msra.mxu0 %v128
    %225 = vmatpush.msra.mxu0 %v124
    %226 = vmatpush.msra.mxu0 %v120
    %227 = vmatpush.msra.mxu0 %v116
    %228 = vmatpush.msra.mxu0 %v112
    %229 = vmatpush.msra.mxu0 %v108
    %230 = vmatpush.msra.mxu0 %v104
    %231 = vmatpush.msra.mxu0 %v100
    %232 = vmatpush.msra.mxu0 %v96
    %233 = vmatmul.f32.gmra.mxu0 %v92
    %v234 = vpop.f32.mrf.mxu0
    %v235 = vadd.f32 0.0, %v234
    %236 = vdwg.mxu0
    %v237 = vadd.f32 %v88, %v175
    %v238 = vadd.f32 %v89, %v195
    %v239 = vadd.f32 %v90, %v215
    %v240 = vadd.f32 %v91, %v235
    %v241 = vxor.u32 %v237, 2147483648
    %v242 = vmul.f32 %v241, 1.442695
    %v243 = vpow.pop %v242
    %v244 = vadd.f32 %v243, 1.0
    %v245 = vrcp.pop %v244
    %v246 = vmul.f32 %v244, %v245
    %v247 = vsub.f32 1.0, %v246
    %v248 = vmul.f32 %v245, %v247
    %v249 = vadd.f32 %v245, %v248
    %vm250 = vweird.f32 %v244
    %vm251 = vweird.f32 %v245
    %vm252 = vmor %vm250, %vm251
    %v253 = vsel %vm252, %v245, %v249
    %v254 = vand.u32 2147483647, %v244
    %vm255 = vcmp.eq.f32.partialorder %v254, 8.507059e+37
    %v256 = vand.u32 %v244, 2147483648
    %v257 = vor.u32 1.1754944e-38, %v256
    %v258 = vsel %vm255, %v257, %v253
    %v259 = vmul.f32 1.0, %v258
    %v260 = vxor.u32 %v238, 2147483648
    %v261 = vmul.f32 %v260, 1.442695
    %v262 = vpow.pop %v261
    %v263 = vadd.f32 %v262, 1.0
    %v264 = vrcp.pop %v263
    %v265 = vmul.f32 %v263, %v264
    %v266 = vsub.f32 1.0, %v265
    %v267 = vmul.f32 %v264, %v266
    %v268 = vadd.f32 %v264, %v267
    %vm269 = vweird.f32 %v263
    %vm270 = vweird.f32 %v264
    %vm271 = vmor %vm269, %vm270
    %v272 = vsel %vm271, %v264, %v268
    %v273 = vand.u32 2147483647, %v263
    %vm274 = vcmp.eq.f32.partialorder %v273, 8.507059e+37
    %v275 = vand.u32 %v263, 2147483648
    %v276 = vor.u32 1.1754944e-38, %v275
    %v277 = vsel %vm274, %v276, %v272
    %v278 = vmul.f32 1.0, %v277
    %v279 = vtanh.pop %v239
    %v280 = vxor.u32 %v240, 2147483648
    %v281 = vmul.f32 %v280, 1.442695
    %v282 = vpow.pop %v281
    %v283 = vadd.f32 %v282, 1.0
    %v284 = vrcp.pop %v283
    %v285 = vmul.f32 %v283, %v284
    %v286 = vsub.f32 1.0, %v285
    %v287 = vmul.f32 %v284, %v286
    %v288 = vadd.f32 %v284, %v287
    %vm289 = vweird.f32 %v283
    %vm290 = vweird.f32 %v284
    %vm291 = vmor %vm289, %vm290
    %v292 = vsel %vm291, %v284, %v288
    %v293 = vand.u32 2147483647, %v283
    %vm294 = vcmp.eq.f32.partialorder %v293, 8.507059e+37
    %v295 = vand.u32 %v283, 2147483648
    %v296 = vor.u32 1.1754944e-38, %v295
    %v297 = vsel %vm294, %v296, %v292
    %v298 = vmul.f32 1.0, %v297
    %v299 = vld [vmem:[#allocation3] sm:$0xff]
    %v300 = vmul.f32 %v278, %v299
    %v301 = vmul.f32 %v259, %v279
    %v302 = vadd.f32 %v300, %v301
    %v303 = vtanh.pop %v302
    %v304 = vmul.f32 %v298, %v303
    %305 = vst [vmem:[#allocation2] sm:$0xff] %v304
    %306 = vst [vmem:[#allocation3] sm:$0xff] %v302
    %307 = vst [vmem:[#allocation12] sm:$0xff] %v304
    %s308 = scalar_lea.vmem [#allocation4], 32
    %v309 = vld [vmem:[%s308] sm:$0xff]
    %v310 = vld [vmem:[%s308 + $0x8] sm:$0xff]
    %v311 = vld [vmem:[%s308 + $0x10] sm:$0xff]
    %v312 = vld [vmem:[%s308 + $0x18] sm:$0xff]
    %v313 = vld [vmem:[#allocation2] sm:$0xff]
    %v314 = vld [vmem:[#allocation10] sm:$0xff]
    %v315 = vld [vmem:[#allocation10 + $0x8] sm:$0xff]
    %v316 = vld [vmem:[#allocation10 + $0x10] sm:$0xff]
    %v317 = vld [vmem:[#allocation10 + $0x18] sm:$0xff]
    %v318 = vld [vmem:[#allocation10 + $0x20] sm:$0xff]
    %v319 = vld [vmem:[#allocation10 + $0x28] sm:$0xff]
    %v320 = vld [vmem:[#allocation10 + $0x30] sm:$0xff]
    %v321 = vld [vmem:[#allocation10 + $0x38] sm:$0xff]
    %v322 = vld [vmem:[#allocation10 + $0x40] sm:$0xff]
    %v323 = vld [vmem:[#allocation10 + $0x48] sm:$0xff]
    %v324 = vld [vmem:[#allocation10 + $0x50] sm:$0xff]
    %v325 = vld [vmem:[#allocation10 + $0x58] sm:$0xff]
    %v326 = vld [vmem:[#allocation10 + $0x60] sm:$0xff]
    %v327 = vld [vmem:[#allocation10 + $0x68] sm:$0xff]
    %v328 = vld [vmem:[#allocation10 + $0x70] sm:$0xff]
    %v329 = vld [vmem:[#allocation10 + $0x78] sm:$0xff]
    %v330 = vld [vmem:[#allocation10 + $0x80] sm:$0xff]
    %v331 = vld [vmem:[#allocation10 + $0x88] sm:$0xff]
    %v332 = vld [vmem:[#allocation10 + $0x90] sm:$0xff]
    %v333 = vld [vmem:[#allocation10 + $0x98] sm:$0xff]
    %v334 = vld [vmem:[#allocation10 + $0xa0] sm:$0xff]
    %v335 = vld [vmem:[#allocation10 + $0xa8] sm:$0xff]
    %v336 = vld [vmem:[#allocation10 + $0xb0] sm:$0xff]
    %v337 = vld [vmem:[#allocation10 + $0xb8] sm:$0xff]
    %v338 = vld [vmem:[#allocation10 + $0xc0] sm:$0xff]
    %v339 = vld [vmem:[#allocation10 + $0xc8] sm:$0xff]
    %v340 = vld [vmem:[#allocation10 + $0xd0] sm:$0xff]
    %v341 = vld [vmem:[#allocation10 + $0xd8] sm:$0xff]
    %v342 = vld [vmem:[#allocation10 + $0xe0] sm:$0xff]
    %v343 = vld [vmem:[#allocation10 + $0xe8] sm:$0xff]
    %v344 = vld [vmem:[#allocation10 + $0xf0] sm:$0xff]
    %v345 = vld [vmem:[#allocation10 + $0xf8] sm:$0xff]
    %v346 = vld [vmem:[#allocation10 + $0x100] sm:$0xff]
    %v347 = vld [vmem:[#allocation10 + $0x108] sm:$0xff]
    %v348 = vld [vmem:[#allocation10 + $0x110] sm:$0xff]
    %v349 = vld [vmem:[#allocation10 + $0x118] sm:$0xff]
    %v350 = vld [vmem:[#allocation10 + $0x120] sm:$0xff]
    %v351 = vld [vmem:[#allocation10 + $0x128] sm:$0xff]
    %v352 = vld [vmem:[#allocation10 + $0x130] sm:$0xff]
    %v353 = vld [vmem:[#allocation10 + $0x138] sm:$0xff]
    %v354 = vld [vmem:[#allocation10 + $0x140] sm:$0xff]
    %v355 = vld [vmem:[#allocation10 + $0x148] sm:$0xff]
    %v356 = vld [vmem:[#allocation10 + $0x150] sm:$0xff]
    %v357 = vld [vmem:[#allocation10 + $0x158] sm:$0xff]
    %v358 = vld [vmem:[#allocation10 + $0x160] sm:$0xff]
    %v359 = vld [vmem:[#allocation10 + $0x168] sm:$0xff]
    %v360 = vld [vmem:[#allocation10 + $0x170] sm:$0xff]
    %v361 = vld [vmem:[#allocation10 + $0x178] sm:$0xff]
    %v362 = vld [vmem:[#allocation10 + $0x180] sm:$0xff]
    %v363 = vld [vmem:[#allocation10 + $0x188] sm:$0xff]
    %v364 = vld [vmem:[#allocation10 + $0x190] sm:$0xff]
    %v365 = vld [vmem:[#allocation10 + $0x198] sm:$0xff]
    %v366 = vld [vmem:[#allocation10 + $0x1a0] sm:$0xff]
    %v367 = vld [vmem:[#allocation10 + $0x1a8] sm:$0xff]
    %v368 = vld [vmem:[#allocation10 + $0x1b0] sm:$0xff]
    %v369 = vld [vmem:[#allocation10 + $0x1b8] sm:$0xff]
    %v370 = vld [vmem:[#allocation10 + $0x1c0] sm:$0xff]
    %v371 = vld [vmem:[#allocation10 + $0x1c8] sm:$0xff]
    %v372 = vld [vmem:[#allocation10 + $0x1d0] sm:$0xff]
    %v373 = vld [vmem:[#allocation10 + $0x1d8] sm:$0xff]
    %v374 = vld [vmem:[#allocation10 + $0x1e0] sm:$0xff]
    %v375 = vld [vmem:[#allocation10 + $0x1e8] sm:$0xff]
    %v376 = vld [vmem:[#allocation10 + $0x1f0] sm:$0xff]
    %v377 = vld [vmem:[#allocation10 + $0x1f8] sm:$0xff]
    %378 = vmatpush.msra.mxu0 %v374
    %379 = vmatpush.msra.mxu0 %v370
    %380 = vmatpush.msra.mxu0 %v366
    %381 = vmatpush.msra.mxu0 %v362
    %382 = vmatpush.msra.mxu0 %v358
    %383 = vmatpush.msra.mxu0 %v354
    %384 = vmatpush.msra.mxu0 %v350
    %385 = vmatpush.msra.mxu0 %v346
    %386 = vmatpush.msra.mxu0 %v342
    %387 = vmatpush.msra.mxu0 %v338
    %388 = vmatpush.msra.mxu0 %v334
    %389 = vmatpush.msra.mxu0 %v330
    %390 = vmatpush.msra.mxu0 %v326
    %391 = vmatpush.msra.mxu0 %v322
    %392 = vmatpush.msra.mxu0 %v318
    %393 = vmatpush.msra.mxu0 %v314
    %394 = vmatmul.f32.gmra.mxu0 %v313
    %v395 = vpop.f32.mrf.mxu0
    %v396 = vadd.f32 0.0, %v395
    %397 = vdwg.mxu0
    %398 = vmatpush.msra.mxu0 %v375
    %399 = vmatpush.msra.mxu0 %v371
    %400 = vmatpush.msra.mxu0 %v367
    %401 = vmatpush.msra.mxu0 %v363
    %402 = vmatpush.msra.mxu0 %v359
    %403 = vmatpush.msra.mxu0 %v355
    %404 = vmatpush.msra.mxu0 %v351
    %405 = vmatpush.msra.mxu0 %v347
    %406 = vmatpush.msra.mxu0 %v343
    %407 = vmatpush.msra.mxu0 %v339
    %408 = vmatpush.msra.mxu0 %v335
    %409 = vmatpush.msra.mxu0 %v331
    %410 = vmatpush.msra.mxu0 %v327
    %411 = vmatpush.msra.mxu0 %v323
    %412 = vmatpush.msra.mxu0 %v319
    %413 = vmatpush.msra.mxu0 %v315
    %414 = vmatmul.f32.gmra.mxu0 %v313
    %v415 = vpop.f32.mrf.mxu0
    %v416 = vadd.f32 0.0, %v415
    %417 = vdwg.mxu0
    %418 = vmatpush.msra.mxu0 %v376
    %419 = vmatpush.msra.mxu0 %v372
    %420 = vmatpush.msra.mxu0 %v368
    %421 = vmatpush.msra.mxu0 %v364
    %422 = vmatpush.msra.mxu0 %v360
    %423 = vmatpush.msra.mxu0 %v356
    %424 = vmatpush.msra.mxu0 %v352
    %425 = vmatpush.msra.mxu0 %v348
    %426 = vmatpush.msra.mxu0 %v344
    %427 = vmatpush.msra.mxu0 %v340
    %428 = vmatpush.msra.mxu0 %v336
    %429 = vmatpush.msra.mxu0 %v332
    %430 = vmatpush.msra.mxu0 %v328
    %431 = vmatpush.msra.mxu0 %v324
    %432 = vmatpush.msra.mxu0 %v320
    %433 = vmatpush.msra.mxu0 %v316
    %434 = vmatmul.f32.gmra.mxu0 %v313
    %v435 = vpop.f32.mrf.mxu0
    %v436 = vadd.f32 0.0, %v435
    %437 = vdwg.mxu0
    %438 = vmatpush.msra.mxu0 %v377
    %439 = vmatpush.msra.mxu0 %v373
    %440 = vmatpush.msra.mxu0 %v369
    %441 = vmatpush.msra.mxu0 %v365
    %442 = vmatpush.msra.mxu0 %v361
    %443 = vmatpush.msra.mxu0 %v357
    %444 = vmatpush.msra.mxu0 %v353
    %445 = vmatpush.msra.mxu0 %v349
    %446 = vmatpush.msra.mxu0 %v345
    %447 = vmatpush.msra.mxu0 %v341
    %448 = vmatpush.msra.mxu0 %v337
    %449 = vmatpush.msra.mxu0 %v333
    %450 = vmatpush.msra.mxu0 %v329
    %451 = vmatpush.msra.mxu0 %v325
    %452 = vmatpush.msra.mxu0 %v321
    %453 = vmatpush.msra.mxu0 %v317
    %454 = vmatmul.f32.gmra.mxu0 %v313
    %v455 = vpop.f32.mrf.mxu0
    %v456 = vadd.f32 0.0, %v455
    %457 = vdwg.mxu0
    %v458 = vadd.f32 %v309, %v396
    %v459 = vadd.f32 %v310, %v416
    %v460 = vadd.f32 %v311, %v436
    %v461 = vadd.f32 %v312, %v456
    %v462 = vxor.u32 %v458, 2147483648
    %v463 = vmul.f32 %v462, 1.442695
    %v464 = vpow.pop %v463
    %v465 = vadd.f32 %v464, 1.0
    %v466 = vrcp.pop %v465
    %v467 = vmul.f32 %v465, %v466
    %v468 = vsub.f32 1.0, %v467
    %v469 = vmul.f32 %v466, %v468
    %v470 = vadd.f32 %v466, %v469
    %vm471 = vweird.f32 %v465
    %vm472 = vweird.f32 %v466
    %vm473 = vmor %vm471, %vm472
    %v474 = vsel %vm473, %v466, %v470
    %v475 = vand.u32 2147483647, %v465
    %vm476 = vcmp.eq.f32.partialorder %v475, 8.507059e+37
    %v477 = vand.u32 %v465, 2147483648
    %v478 = vor.u32 1.1754944e-38, %v477
    %v479 = vsel %vm476, %v478, %v474
    %v480 = vmul.f32 1.0, %v479
    %v481 = vxor.u32 %v459, 2147483648
    %v482 = vmul.f32 %v481, 1.442695
    %v483 = vpow.pop %v482
    %v484 = vadd.f32 %v483, 1.0
    %v485 = vrcp.pop %v484
    %v486 = vmul.f32 %v484, %v485
    %v487 = vsub.f32 1.0, %v486
    %v488 = vmul.f32 %v485, %v487
    %v489 = vadd.f32 %v485, %v488
    %vm490 = vweird.f32 %v484
    %vm491 = vweird.f32 %v485
    %vm492 = vmor %vm490, %vm491
    %v493 = vsel %vm492, %v485, %v489
    %v494 = vand.u32 2147483647, %v484
    %vm495 = vcmp.eq.f32.partialorder %v494, 8.507059e+37
    %v496 = vand.u32 %v484, 2147483648
    %v497 = vor.u32 1.1754944e-38, %v496
    %v498 = vsel %vm495, %v497, %v493
    %v499 = vmul.f32 1.0, %v498
    %v500 = vtanh.pop %v460
    %v501 = vxor.u32 %v461, 2147483648
    %v502 = vmul.f32 %v501, 1.442695
    %v503 = vpow.pop %v502
    %v504 = vadd.f32 %v503, 1.0
    %v505 = vrcp.pop %v504
    %v506 = vmul.f32 %v504, %v505
    %v507 = vsub.f32 1.0, %v506
    %v508 = vmul.f32 %v505, %v507
    %v509 = vadd.f32 %v505, %v508
    %vm510 = vweird.f32 %v504
    %vm511 = vweird.f32 %v505
    %vm512 = vmor %vm510, %vm511
    %v513 = vsel %vm512, %v505, %v509
    %v514 = vand.u32 2147483647, %v504
    %vm515 = vcmp.eq.f32.partialorder %v514, 8.507059e+37
    %v516 = vand.u32 %v504, 2147483648
    %v517 = vor.u32 1.1754944e-38, %v516
    %v518 = vsel %vm515, %v517, %v513
    %v519 = vmul.f32 1.0, %v518
    %v520 = vld [vmem:[#allocation3] sm:$0xff]
    %v521 = vmul.f32 %v499, %v520
    %v522 = vmul.f32 %v480, %v500
    %v523 = vadd.f32 %v521, %v522
    %v524 = vtanh.pop %v523
    %v525 = vmul.f32 %v519, %v524
    %526 = vst [vmem:[#allocation2] sm:$0xff] %v525
    %527 = vst [vmem:[#allocation3] sm:$0xff] %v523
    %s528 = scalar_lea.vmem [#allocation12], 8
    %529 = vst [vmem:[%s528] sm:$0xff] %v525
    %s530 = scalar_lea.vmem [#allocation4], 64
    %v531 = vld [vmem:[%s530] sm:$0xff]
    %v532 = vld [vmem:[%s530 + $0x8] sm:$0xff]
    %v533 = vld [vmem:[%s530 + $0x10] sm:$0xff]
    %v534 = vld [vmem:[%s530 + $0x18] sm:$0xff]
    %v535 = vld [vmem:[#allocation2] sm:$0xff]
    %v536 = vld [vmem:[#allocation10] sm:$0xff]
    %v537 = vld [vmem:[#allocation10 + $0x8] sm:$0xff]
    %v538 = vld [vmem:[#allocation10 + $0x10] sm:$0xff]
    %v539 = vld [vmem:[#allocation10 + $0x18] sm:$0xff]
    %v540 = vld [vmem:[#allocation10 + $0x20] sm:$0xff]
    %v541 = vld [vmem:[#allocation10 + $0x28] sm:$0xff]
    %v542 = vld [vmem:[#allocation10 + $0x30] sm:$0xff]
    %v543 = vld [vmem:[#allocation10 + $0x38] sm:$0xff]
    %v544 = vld [vmem:[#allocation10 + $0x40] sm:$0xff]
    %v545 = vld [vmem:[#allocation10 + $0x48] sm:$0xff]
    %v546 = vld [vmem:[#allocation10 + $0x50] sm:$0xff]
    %v547 = vld [vmem:[#allocation10 + $0x58] sm:$0xff]
    %v548 = vld [vmem:[#allocation10 + $0x60] sm:$0xff]
    %v549 = vld [vmem:[#allocation10 + $0x68] sm:$0xff]
    %v550 = vld [vmem:[#allocation10 + $0x70] sm:$0xff]
    %v551 = vld [vmem:[#allocation10 + $0x78] sm:$0xff]
    %v552 = vld [vmem:[#allocation10 + $0x80] sm:$0xff]
    %v553 = vld [vmem:[#allocation10 + $0x88] sm:$0xff]
    %v554 = vld [vmem:[#allocation10 + $0x90] sm:$0xff]
    %v555 = vld [vmem:[#allocation10 + $0x98] sm:$0xff]
    %v556 = vld [vmem:[#allocation10 + $0xa0] sm:$0xff]
    %v557 = vld [vmem:[#allocation10 + $0xa8] sm:$0xff]
    %v558 = vld [vmem:[#allocation10 + $0xb0] sm:$0xff]
    %v559 = vld [vmem:[#allocation10 + $0xb8] sm:$0xff]
    %v560 = vld [vmem:[#allocation10 + $0xc0] sm:$0xff]
    %v561 = vld [vmem:[#allocation10 + $0xc8] sm:$0xff]
    %v562 = vld [vmem:[#allocation10 + $0xd0] sm:$0xff]
    %v563 = vld [vmem:[#allocation10 + $0xd8] sm:$0xff]
    %v564 = vld [vmem:[#allocation10 + $0xe0] sm:$0xff]
    %v565 = vld [vmem:[#allocation10 + $0xe8] sm:$0xff]
    %v566 = vld [vmem:[#allocation10 + $0xf0] sm:$0xff]
    %v567 = vld [vmem:[#allocation10 + $0xf8] sm:$0xff]
    %v568 = vld [vmem:[#allocation10 + $0x100] sm:$0xff]
    %v569 = vld [vmem:[#allocation10 + $0x108] sm:$0xff]
    %v570 = vld [vmem:[#allocation10 + $0x110] sm:$0xff]
    %v571 = vld [vmem:[#allocation10 + $0x118] sm:$0xff]
    %v572 = vld [vmem:[#allocation10 + $0x120] sm:$0xff]
    %v573 = vld [vmem:[#allocation10 + $0x128] sm:$0xff]
    %v574 = vld [vmem:[#allocation10 + $0x130] sm:$0xff]
    %v575 = vld [vmem:[#allocation10 + $0x138] sm:$0xff]
    %v576 = vld [vmem:[#allocation10 + $0x140] sm:$0xff]
    %v577 = vld [vmem:[#allocation10 + $0x148] sm:$0xff]
    %v578 = vld [vmem:[#allocation10 + $0x150] sm:$0xff]
    %v579 = vld [vmem:[#allocation10 + $0x158] sm:$0xff]
    %v580 = vld [vmem:[#allocation10 + $0x160] sm:$0xff]
    %v581 = vld [vmem:[#allocation10 + $0x168] sm:$0xff]
    %v582 = vld [vmem:[#allocation10 + $0x170] sm:$0xff]
    %v583 = vld [vmem:[#allocation10 + $0x178] sm:$0xff]
    %v584 = vld [vmem:[#allocation10 + $0x180] sm:$0xff]
    %v585 = vld [vmem:[#allocation10 + $0x188] sm:$0xff]
    %v586 = vld [vmem:[#allocation10 + $0x190] sm:$0xff]
    %v587 = vld [vmem:[#allocation10 + $0x198] sm:$0xff]
    %v588 = vld [vmem:[#allocation10 + $0x1a0] sm:$0xff]
    %v589 = vld [vmem:[#allocation10 + $0x1a8] sm:$0xff]
    %v590 = vld [vmem:[#allocation10 + $0x1b0] sm:$0xff]
    %v591 = vld [vmem:[#allocation10 + $0x1b8] sm:$0xff]
    %v592 = vld [vmem:[#allocation10 + $0x1c0] sm:$0xff]
    %v593 = vld [vmem:[#allocation10 + $0x1c8] sm:$0xff]
    %v594 = vld [vmem:[#allocation10 + $0x1d0] sm:$0xff]
    %v595 = vld [vmem:[#allocation10 + $0x1d8] sm:$0xff]
    %v596 = vld [vmem:[#allocation10 + $0x1e0] sm:$0xff]
    %v597 = vld [vmem:[#allocation10 + $0x1e8] sm:$0xff]
    %v598 = vld [vmem:[#allocation10 + $0x1f0] sm:$0xff]
    %v599 = vld [vmem:[#allocation10 + $0x1f8] sm:$0xff]
    %600 = vmatpush.msra.mxu0 %v596
    %601 = vmatpush.msra.mxu0 %v592
    %602 = vmatpush.msra.mxu0 %v588
    %603 = vmatpush.msra.mxu0 %v584
    %604 = vmatpush.msra.mxu0 %v580
    %605 = vmatpush.msra.mxu0 %v576
    %606 = vmatpush.msra.mxu0 %v572
    %607 = vmatpush.msra.mxu0 %v568
    %608 = vmatpush.msra.mxu0 %v564
    %609 = vmatpush.msra.mxu0 %v560
    %610 = vmatpush.msra.mxu0 %v556
    %611 = vmatpush.msra.mxu0 %v552
    %612 = vmatpush.msra.mxu0 %v548
    %613 = vmatpush.msra.mxu0 %v544
    %614 = vmatpush.msra.mxu0 %v540
    %615 = vmatpush.msra.mxu0 %v536
    %616 = vmatmul.f32.gmra.mxu0 %v535
    %v617 = vpop.f32.mrf.mxu0
    %v618 = vadd.f32 0.0, %v617
    %619 = vdwg.mxu0
    %620 = vmatpush.msra.mxu0 %v597
    %621 = vmatpush.msra.mxu0 %v593
    %622 = vmatpush.msra.mxu0 %v589
    %623 = vmatpush.msra.mxu0 %v585
    %624 = vmatpush.msra.mxu0 %v581
    %625 = vmatpush.msra.mxu0 %v577
    %626 = vmatpush.msra.mxu0 %v573
    %627 = vmatpush.msra.mxu0 %v569
    %628 = vmatpush.msra.mxu0 %v565
    %629 = vmatpush.msra.mxu0 %v561
    %630 = vmatpush.msra.mxu0 %v557
    %631 = vmatpush.msra.mxu0 %v553
    %632 = vmatpush.msra.mxu0 %v549
    %633 = vmatpush.msra.mxu0 %v545
    %634 = vmatpush.msra.mxu0 %v541
    %635 = vmatpush.msra.mxu0 %v537
    %636 = vmatmul.f32.gmra.mxu0 %v535
    %v637 = vpop.f32.mrf.mxu0
    %v638 = vadd.f32 0.0, %v637
    %639 = vdwg.mxu0
    %640 = vmatpush.msra.mxu0 %v598
    %641 = vmatpush.msra.mxu0 %v594
    %642 = vmatpush.msra.mxu0 %v590
    %643 = vmatpush.msra.mxu0 %v586
    %644 = vmatpush.msra.mxu0 %v582
    %645 = vmatpush.msra.mxu0 %v578
    %646 = vmatpush.msra.mxu0 %v574
    %647 = vmatpush.msra.mxu0 %v570
    %648 = vmatpush.msra.mxu0 %v566
    %649 = vmatpush.msra.mxu0 %v562
    %650 = vmatpush.msra.mxu0 %v558
    %651 = vmatpush.msra.mxu0 %v554
    %652 = vmatpush.msra.mxu0 %v550
    %653 = vmatpush.msra.mxu0 %v546
    %654 = vmatpush.msra.mxu0 %v542
    %655 = vmatpush.msra.mxu0 %v538
    %656 = vmatmul.f32.gmra.mxu0 %v535
    %v657 = vpop.f32.mrf.mxu0
    %v658 = vadd.f32 0.0, %v657
    %659 = vdwg.mxu0
    %660 = vmatpush.msra.mxu0 %v599
    %661 = vmatpush.msra.mxu0 %v595
    %662 = vmatpush.msra.mxu0 %v591
    %663 = vmatpush.msra.mxu0 %v587
    %664 = vmatpush.msra.mxu0 %v583
    %665 = vmatpush.msra.mxu0 %v579
    %666 = vmatpush.msra.mxu0 %v575
    %667 = vmatpush.msra.mxu0 %v571
    %668 = vmatpush.msra.mxu0 %v567
    %669 = vmatpush.msra.mxu0 %v563
    %670 = vmatpush.msra.mxu0 %v559
    %671 = vmatpush.msra.mxu0 %v555
    %672 = vmatpush.msra.mxu0 %v551
    %673 = vmatpush.msra.mxu0 %v547
    %674 = vmatpush.msra.mxu0 %v543
    %675 = vmatpush.msra.mxu0 %v539
    %676 = vmatmul.f32.gmra.mxu0 %v535
    %v677 = vpop.f32.mrf.mxu0
    %v678 = vadd.f32 0.0, %v677
    %679 = vdwg.mxu0
    %v680 = vadd.f32 %v531, %v618
    %v681 = vadd.f32 %v532, %v638
    %v682 = vadd.f32 %v533, %v658
    %v683 = vadd.f32 %v534, %v678
    %v684 = vxor.u32 %v680, 2147483648
    %v685 = vmul.f32 %v684, 1.442695
    %v686 = vpow.pop %v685
    %v687 = vadd.f32 %v686, 1.0
    %v688 = vrcp.pop %v687
    %v689 = vmul.f32 %v687, %v688
    %v690 = vsub.f32 1.0, %v689
    %v691 = vmul.f32 %v688, %v690
    %v692 = vadd.f32 %v688, %v691
    %vm693 = vweird.f32 %v687
    %vm694 = vweird.f32 %v688
    %vm695 = vmor %vm693, %vm694
    %v696 = vsel %vm695, %v688, %v692
    %v697 = vand.u32 2147483647, %v687
    %vm698 = vcmp.eq.f32.partialorder %v697, 8.507059e+37
    %v699 = vand.u32 %v687, 2147483648
    %v700 = vor.u32 1.1754944e-38, %v699
    %v701 = vsel %vm698, %v700, %v696
    %v702 = vmul.f32 1.0, %v701
    %v703 = vxor.u32 %v681, 2147483648
    %v704 = vmul.f32 %v703, 1.442695
    %v705 = vpow.pop %v704
    %v706 = vadd.f32 %v705, 1.0
    %v707 = vrcp.pop %v706
    %v708 = vmul.f32 %v706, %v707
    %v709 = vsub.f32 1.0, %v708
    %v710 = vmul.f32 %v707, %v709
    %v711 = vadd.f32 %v707, %v710
    %vm712 = vweird.f32 %v706
    %vm713 = vweird.f32 %v707
    %vm714 = vmor %vm712, %vm713
    %v715 = vsel %vm714, %v707, %v711
    %v716 = vand.u32 2147483647, %v706
    %vm717 = vcmp.eq.f32.partialorder %v716, 8.507059e+37
    %v718 = vand.u32 %v706, 2147483648
    %v719 = vor.u32 1.1754944e-38, %v718
    %v720 = vsel %vm717, %v719, %v715
    %v721 = vmul.f32 1.0, %v720
    %v722 = vtanh.pop %v682
    %v723 = vxor.u32 %v683, 2147483648
    %v724 = vmul.f32 %v723, 1.442695
    %v725 = vpow.pop %v724
    %v726 = vadd.f32 %v725, 1.0
    %v727 = vrcp.pop %v726
    %v728 = vmul.f32 %v726, %v727
    %v729 = vsub.f32 1.0, %v728
    %v730 = vmul.f32 %v727, %v729
    %v731 = vadd.f32 %v727, %v730
    %vm732 = vweird.f32 %v726
    %vm733 = vweird.f32 %v727
    %vm734 = vmor %vm732, %vm733
    %v735 = vsel %vm734, %v727, %v731
    %v736 = vand.u32 2147483647, %v726
    %vm737 = vcmp.eq.f32.partialorder %v736, 8.507059e+37
    %v738 = vand.u32 %v726, 2147483648
    %v739 = vor.u32 1.1754944e-38, %v738
    %v740 = vsel %vm737, %v739, %v735
    %v741 = vmul.f32 1.0, %v740
    %v742 = vld [vmem:[#allocation3] sm:$0xff]
    %v743 = vmul.f32 %v721, %v742
    %v744 = vmul.f32 %v702, %v722
    %v745 = vadd.f32 %v743, %v744
    %v746 = vtanh.pop %v745
    %v747 = vmul.f32 %v741, %v746
    %748 = vst [vmem:[#allocation2] sm:$0xff] %v747
    %749 = vst [vmem:[#allocation3] sm:$0xff] %v745
    %s750 = scalar_lea.vmem [#allocation12], 16
    %751 = vst [vmem:[%s750] sm:$0xff] %v747
    %s752 = scalar_lea.vmem [#allocation4], 96
    %v753 = vld [vmem:[%s752] sm:$0xff]
    %v754 = vld [vmem:[%s752 + $0x8] sm:$0xff]
    %v755 = vld [vmem:[%s752 + $0x10] sm:$0xff]
    %v756 = vld [vmem:[%s752 + $0x18] sm:$0xff]
    %v757 = vld [vmem:[#allocation2] sm:$0xff]
    %v758 = vld [vmem:[#allocation10] sm:$0xff]
    %v759 = vld [vmem:[#allocation10 + $0x8] sm:$0xff]
    %v760 = vld [vmem:[#allocation10 + $0x10] sm:$0xff]
    %v761 = vld [vmem:[#allocation10 + $0x18] sm:$0xff]
    %v762 = vld [vmem:[#allocation10 + $0x20] sm:$0xff]
    %v763 = vld [vmem:[#allocation10 + $0x28] sm:$0xff]
    %v764 = vld [vmem:[#allocation10 + $0x30] sm:$0xff]
    %v765 = vld [vmem:[#allocation10 + $0x38] sm:$0xff]
    %v766 = vld [vmem:[#allocation10 + $0x40] sm:$0xff]
    %v767 = vld [vmem:[#allocation10 + $0x48] sm:$0xff]
    %v768 = vld [vmem:[#allocation10 + $0x50] sm:$0xff]
    %v769 = vld [vmem:[#allocation10 + $0x58] sm:$0xff]
    %v770 = vld [vmem:[#allocation10 + $0x60] sm:$0xff]
    %v771 = vld [vmem:[#allocation10 + $0x68] sm:$0xff]
    %v772 = vld [vmem:[#allocation10 + $0x70] sm:$0xff]
    %v773 = vld [vmem:[#allocation10 + $0x78] sm:$0xff]
    %v774 = vld [vmem:[#allocation10 + $0x80] sm:$0xff]
    %v775 = vld [vmem:[#allocation10 + $0x88] sm:$0xff]
    %v776 = vld [vmem:[#allocation10 + $0x90] sm:$0xff]
    %v777 = vld [vmem:[#allocation10 + $0x98] sm:$0xff]
    %v778 = vld [vmem:[#allocation10 + $0xa0] sm:$0xff]
    %v779 = vld [vmem:[#allocation10 + $0xa8] sm:$0xff]
    %v780 = vld [vmem:[#allocation10 + $0xb0] sm:$0xff]
    %v781 = vld [vmem:[#allocation10 + $0xb8] sm:$0xff]
    %v782 = vld [vmem:[#allocation10 + $0xc0] sm:$0xff]
    %v783 = vld [vmem:[#allocation10 + $0xc8] sm:$0xff]
    %v784 = vld [vmem:[#allocation10 + $0xd0] sm:$0xff]
    %v785 = vld [vmem:[#allocation10 + $0xd8] sm:$0xff]
    %v786 = vld [vmem:[#allocation10 + $0xe0] sm:$0xff]
    %v787 = vld [vmem:[#allocation10 + $0xe8] sm:$0xff]
    %v788 = vld [vmem:[#allocation10 + $0xf0] sm:$0xff]
    %v789 = vld [vmem:[#allocation10 + $0xf8] sm:$0xff]
    %v790 = vld [vmem:[#allocation10 + $0x100] sm:$0xff]
    %v791 = vld [vmem:[#allocation10 + $0x108] sm:$0xff]
    %v792 = vld [vmem:[#allocation10 + $0x110] sm:$0xff]
    %v793 = vld [vmem:[#allocation10 + $0x118] sm:$0xff]
    %v794 = vld [vmem:[#allocation10 + $0x120] sm:$0xff]
    %v795 = vld [vmem:[#allocation10 + $0x128] sm:$0xff]
    %v796 = vld [vmem:[#allocation10 + $0x130] sm:$0xff]
    %v797 = vld [vmem:[#allocation10 + $0x138] sm:$0xff]
    %v798 = vld [vmem:[#allocation10 + $0x140] sm:$0xff]
    %v799 = vld [vmem:[#allocation10 + $0x148] sm:$0xff]
    %v800 = vld [vmem:[#allocation10 + $0x150] sm:$0xff]
    %v801 = vld [vmem:[#allocation10 + $0x158] sm:$0xff]
    %v802 = vld [vmem:[#allocation10 + $0x160] sm:$0xff]
    %v803 = vld [vmem:[#allocation10 + $0x168] sm:$0xff]
    %v804 = vld [vmem:[#allocation10 + $0x170] sm:$0xff]
    %v805 = vld [vmem:[#allocation10 + $0x178] sm:$0xff]
    %v806 = vld [vmem:[#allocation10 + $0x180] sm:$0xff]
    %v807 = vld [vmem:[#allocation10 + $0x188] sm:$0xff]
    %v808 = vld [vmem:[#allocation10 + $0x190] sm:$0xff]
    %v809 = vld [vmem:[#allocation10 + $0x198] sm:$0xff]
    %v810 = vld [vmem:[#allocation10 + $0x1a0] sm:$0xff]
    %v811 = vld [vmem:[#allocation10 + $0x1a8] sm:$0xff]
    %v812 = vld [vmem:[#allocation10 + $0x1b0] sm:$0xff]
    %v813 = vld [vmem:[#allocation10 + $0x1b8] sm:$0xff]
    %v814 = vld [vmem:[#allocation10 + $0x1c0] sm:$0xff]
    %v815 = vld [vmem:[#allocation10 + $0x1c8] sm:$0xff]
    %v816 = vld [vmem:[#allocation10 + $0x1d0] sm:$0xff]
    %v817 = vld [vmem:[#allocation10 + $0x1d8] sm:$0xff]
    %v818 = vld [vmem:[#allocation10 + $0x1e0] sm:$0xff]
    %v819 = vld [vmem:[#allocation10 + $0x1e8] sm:$0xff]
    %v820 = vld [vmem:[#allocation10 + $0x1f0] sm:$0xff]
    %v821 = vld [vmem:[#allocation10 + $0x1f8] sm:$0xff]
    %822 = vmatpush.msra.mxu0 %v818
    %823 = vmatpush.msra.mxu0 %v814
    %824 = vmatpush.msra.mxu0 %v810
    %825 = vmatpush.msra.mxu0 %v806
    %826 = vmatpush.msra.mxu0 %v802
    %827 = vmatpush.msra.mxu0 %v798
    %828 = vmatpush.msra.mxu0 %v794
    %829 = vmatpush.msra.mxu0 %v790
    %830 = vmatpush.msra.mxu0 %v786
    %831 = vmatpush.msra.mxu0 %v782
    %832 = vmatpush.msra.mxu0 %v778
    %833 = vmatpush.msra.mxu0 %v774
    %834 = vmatpush.msra.mxu0 %v770
    %835 = vmatpush.msra.mxu0 %v766
    %836 = vmatpush.msra.mxu0 %v762
    %837 = vmatpush.msra.mxu0 %v758
    %838 = vmatmul.f32.gmra.mxu0 %v757
    %v839 = vpop.f32.mrf.mxu0
    %v840 = vadd.f32 0.0, %v839
    %841 = vdwg.mxu0
    %842 = vmatpush.msra.mxu0 %v819
    %843 = vmatpush.msra.mxu0 %v815
    %844 = vmatpush.msra.mxu0 %v811
    %845 = vmatpush.msra.mxu0 %v807
    %846 = vmatpush.msra.mxu0 %v803
    %847 = vmatpush.msra.mxu0 %v799
    %848 = vmatpush.msra.mxu0 %v795
    %849 = vmatpush.msra.mxu0 %v791
    %850 = vmatpush.msra.mxu0 %v787
    %851 = vmatpush.msra.mxu0 %v783
    %852 = vmatpush.msra.mxu0 %v779
    %853 = vmatpush.msra.mxu0 %v775
    %854 = vmatpush.msra.mxu0 %v771
    %855 = vmatpush.msra.mxu0 %v767
    %856 = vmatpush.msra.mxu0 %v763
    %857 = vmatpush.msra.mxu0 %v759
    %858 = vmatmul.f32.gmra.mxu0 %v757
    %v859 = vpop.f32.mrf.mxu0
    %v860 = vadd.f32 0.0, %v859
    %861 = vdwg.mxu0
    %862 = vmatpush.msra.mxu0 %v820
    %863 = vmatpush.msra.mxu0 %v816
    %864 = vmatpush.msra.mxu0 %v812
    %865 = vmatpush.msra.mxu0 %v808
    %866 = vmatpush.msra.mxu0 %v804
    %867 = vmatpush.msra.mxu0 %v800
    %868 = vmatpush.msra.mxu0 %v796
    %869 = vmatpush.msra.mxu0 %v792
    %870 = vmatpush.msra.mxu0 %v788
    %871 = vmatpush.msra.mxu0 %v784
    %872 = vmatpush.msra.mxu0 %v780
    %873 = vmatpush.msra.mxu0 %v776
    %874 = vmatpush.msra.mxu0 %v772
    %875 = vmatpush.msra.mxu0 %v768
    %876 = vmatpush.msra.mxu0 %v764
    %877 = vmatpush.msra.mxu0 %v760
    %878 = vmatmul.f32.gmra.mxu0 %v757
    %v879 = vpop.f32.mrf.mxu0
    %v880 = vadd.f32 0.0, %v879
    %881 = vdwg.mxu0
    %882 = vmatpush.msra.mxu0 %v821
    %883 = vmatpush.msra.mxu0 %v817
    %884 = vmatpush.msra.mxu0 %v813
    %885 = vmatpush.msra.mxu0 %v809
    %886 = vmatpush.msra.mxu0 %v805
    %887 = vmatpush.msra.mxu0 %v801
    %888 = vmatpush.msra.mxu0 %v797
    %889 = vmatpush.msra.mxu0 %v793
    %890 = vmatpush.msra.mxu0 %v789
    %891 = vmatpush.msra.mxu0 %v785
    %892 = vmatpush.msra.mxu0 %v781
    %893 = vmatpush.msra.mxu0 %v777
    %894 = vmatpush.msra.mxu0 %v773
    %895 = vmatpush.msra.mxu0 %v769
    %896 = vmatpush.msra.mxu0 %v765
    %897 = vmatpush.msra.mxu0 %v761
    %898 = vmatmul.f32.gmra.mxu0 %v757
    %v899 = vpop.f32.mrf.mxu0
    %v900 = vadd.f32 0.0, %v899
    %901 = vdwg.mxu0
    %v902 = vadd.f32 %v753, %v840
    %v903 = vadd.f32 %v754, %v860
    %v904 = vadd.f32 %v755, %v880
    %v905 = vadd.f32 %v756, %v900
    %v906 = vxor.u32 %v902, 2147483648
    %v907 = vmul.f32 %v906, 1.442695
    %v908 = vpow.pop %v907
    %v909 = vadd.f32 %v908, 1.0
    %v910 = vrcp.pop %v909
    %v911 = vmul.f32 %v909, %v910
    %v912 = vsub.f32 1.0, %v911
    %v913 = vmul.f32 %v910, %v912
    %v914 = vadd.f32 %v910, %v913
    %vm915 = vweird.f32 %v909
    %vm916 = vweird.f32 %v910
    %vm917 = vmor %vm915, %vm916
    %v918 = vsel %vm917, %v910, %v914
    %v919 = vand.u32 2147483647, %v909
    %vm920 = vcmp.eq.f32.partialorder %v919, 8.507059e+37
    %v921 = vand.u32 %v909, 2147483648
    %v922 = vor.u32 1.1754944e-38, %v921
    %v923 = vsel %vm920, %v922, %v918
    %v924 = vmul.f32 1.0, %v923
    %v925 = vxor.u32 %v903, 2147483648
    %v926 = vmul.f32 %v925, 1.442695
    %v927 = vpow.pop %v926
    %v928 = vadd.f32 %v927, 1.0
    %v929 = vrcp.pop %v928
    %v930 = vmul.f32 %v928, %v929
    %v931 = vsub.f32 1.0, %v930
    %v932 = vmul.f32 %v929, %v931
    %v933 = vadd.f32 %v929, %v932
    %vm934 = vweird.f32 %v928
    %vm935 = vweird.f32 %v929
    %vm936 = vmor %vm934, %vm935
    %v937 = vsel %vm936, %v929, %v933
    %v938 = vand.u32 2147483647, %v928
    %vm939 = vcmp.eq.f32.partialorder %v938, 8.507059e+37
    %v940 = vand.u32 %v928, 2147483648
    %v941 = vor.u32 1.1754944e-38, %v940
    %v942 = vsel %vm939, %v941, %v937
    %v943 = vmul.f32 1.0, %v942
    %v944 = vtanh.pop %v904
    %v945 = vxor.u32 %v905, 2147483648
    %v946 = vmul.f32 %v945, 1.442695
    %v947 = vpow.pop %v946
    %v948 = vadd.f32 %v947, 1.0
    %v949 = vrcp.pop %v948
    %v950 = vmul.f32 %v948, %v949
    %v951 = vsub.f32 1.0, %v950
    %v952 = vmul.f32 %v949, %v951
    %v953 = vadd.f32 %v949, %v952
    %vm954 = vweird.f32 %v948
    %vm955 = vweird.f32 %v949
    %vm956 = vmor %vm954, %vm955
    %v957 = vsel %vm956, %v949, %v953
    %v958 = vand.u32 2147483647, %v948
    %vm959 = vcmp.eq.f32.partialorder %v958, 8.507059e+37
    %v960 = vand.u32 %v948, 2147483648
    %v961 = vor.u32 1.1754944e-38, %v960
    %v962 = vsel %vm959, %v961, %v957
    %v963 = vmul.f32 1.0, %v962
    %v964 = vld [vmem:[#allocation3] sm:$0xff]
    %v965 = vmul.f32 %v943, %v964
    %v966 = vmul.f32 %v924, %v944
    %v967 = vadd.f32 %v965, %v966
    %v968 = vtanh.pop %v967
    %v969 = vmul.f32 %v963, %v968
    %970 = vst [vmem:[#allocation2] sm:$0xff] %v969
    %971 = vst [vmem:[#allocation3] sm:$0xff] %v967
    %s972 = scalar_lea.vmem [#allocation12], 24
    %973 = vst [vmem:[%s972] sm:$0xff] %v969
    %s974 = scalar_lea.vmem [#allocation4], 128
    %v975 = vld [vmem:[%s974] sm:$0xff]
    %v976 = vld [vmem:[%s974 + $0x8] sm:$0xff]
    %v977 = vld [vmem:[%s974 + $0x10] sm:$0xff]
    %v978 = vld [vmem:[%s974 + $0x18] sm:$0xff]
    %v979 = vld [vmem:[#allocation2] sm:$0xff]
    %v980 = vld [vmem:[#allocation10] sm:$0xff]
    %v981 = vld [vmem:[#allocation10 + $0x8] sm:$0xff]
    %v982 = vld [vmem:[#allocation10 + $0x10] sm:$0xff]
    %v983 = vld [vmem:[#allocation10 + $0x18] sm:$0xff]
    %v984 = vld [vmem:[#allocation10 + $0x20] sm:$0xff]
    %v985 = vld [vmem:[#allocation10 + $0x28] sm:$0xff]
    %v986 = vld [vmem:[#allocation10 + $0x30] sm:$0xff]
    %v987 = vld [vmem:[#allocation10 + $0x38] sm:$0xff]
    %v988 = vld [vmem:[#allocation10 + $0x40] sm:$0xff]
    %v989 = vld [vmem:[#allocation10 + $0x48] sm:$0xff]
    %v990 = vld [vmem:[#allocation10 + $0x50] sm:$0xff]
    %v991 = vld [vmem:[#allocation10 + $0x58] sm:$0xff]
    %v992 = vld [vmem:[#allocation10 + $0x60] sm:$0xff]
    %v993 = vld [vmem:[#allocation10 + $0x68] sm:$0xff]
    %v994 = vld [vmem:[#allocation10 + $0x70] sm:$0xff]
    %v995 = vld [vmem:[#allocation10 + $0x78] sm:$0xff]
    %v996 = vld [vmem:[#allocation10 + $0x80] sm:$0xff]
    %v997 = vld [vmem:[#allocation10 + $0x88] sm:$0xff]
    %v998 = vld [vmem:[#allocation10 + $0x90] sm:$0xff]
    %v999 = vld [vmem:[#allocation10 + $0x98] sm:$0xff]
    %v1000 = vld [vmem:[#allocation10 + $0xa0] sm:$0xff]
    %v1001 = vld [vmem:[#allocation10 + $0xa8] sm:$0xff]
    %v1002 = vld [vmem:[#allocation10 + $0xb0] sm:$0xff]
    %v1003 = vld [vmem:[#allocation10 + $0xb8] sm:$0xff]
    %v1004 = vld [vmem:[#allocation10 + $0xc0] sm:$0xff]
    %v1005 = vld [vmem:[#allocation10 + $0xc8] sm:$0xff]
    %v1006 = vld [vmem:[#allocation10 + $0xd0] sm:$0xff]
    %v1007 = vld [vmem:[#allocation10 + $0xd8] sm:$0xff]
    %v1008 = vld [vmem:[#allocation10 + $0xe0] sm:$0xff]
    %v1009 = vld [vmem:[#allocation10 + $0xe8] sm:$0xff]
    %v1010 = vld [vmem:[#allocation10 + $0xf0] sm:$0xff]
    %v1011 = vld [vmem:[#allocation10 + $0xf8] sm:$0xff]
    %v1012 = vld [vmem:[#allocation10 + $0x100] sm:$0xff]
    %v1013 = vld [vmem:[#allocation10 + $0x108] sm:$0xff]
    %v1014 = vld [vmem:[#allocation10 + $0x110] sm:$0xff]
    %v1015 = vld [vmem:[#allocation10 + $0x118] sm:$0xff]
    %v1016 = vld [vmem:[#allocation10 + $0x120] sm:$0xff]
    %v1017 = vld [vmem:[#allocation10 + $0x128] sm:$0xff]
    %v1018 = vld [vmem:[#allocation10 + $0x130] sm:$0xff]
    %v1019 = vld [vmem:[#allocation10 + $0x138] sm:$0xff]
    %v1020 = vld [vmem:[#allocation10 + $0x140] sm:$0xff]
    %v1021 = vld [vmem:[#allocation10 + $0x148] sm:$0xff]
    %v1022 = vld [vmem:[#allocation10 + $0x150] sm:$0xff]
    %v1023 = vld [vmem:[#allocation10 + $0x158] sm:$0xff]
    %v1024 = vld [vmem:[#allocation10 + $0x160] sm:$0xff]
    %v1025 = vld [vmem:[#allocation10 + $0x168] sm:$0xff]
    %v1026 = vld [vmem:[#allocation10 + $0x170] sm:$0xff]
    %v1027 = vld [vmem:[#allocation10 + $0x178] sm:$0xff]
    %v1028 = vld [vmem:[#allocation10 + $0x180] sm:$0xff]
    %v1029 = vld [vmem:[#allocation10 + $0x188] sm:$0xff]
    %v1030 = vld [vmem:[#allocation10 + $0x190] sm:$0xff]
    %v1031 = vld [vmem:[#allocation10 + $0x198] sm:$0xff]
    %v1032 = vld [vmem:[#allocation10 + $0x1a0] sm:$0xff]
    %v1033 = vld [vmem:[#allocation10 + $0x1a8] sm:$0xff]
    %v1034 = vld [vmem:[#allocation10 + $0x1b0] sm:$0xff]
    %v1035 = vld [vmem:[#allocation10 + $0x1b8] sm:$0xff]
    %v1036 = vld [vmem:[#allocation10 + $0x1c0] sm:$0xff]
    %v1037 = vld [vmem:[#allocation10 + $0x1c8] sm:$0xff]
    %v1038 = vld [vmem:[#allocation10 + $0x1d0] sm:$0xff]
    %v1039 = vld [vmem:[#allocation10 + $0x1d8] sm:$0xff]
    %v1040 = vld [vmem:[#allocation10 + $0x1e0] sm:$0xff]
    %v1041 = vld [vmem:[#allocation10 + $0x1e8] sm:$0xff]
    %v1042 = vld [vmem:[#allocation10 + $0x1f0] sm:$0xff]
    %v1043 = vld [vmem:[#allocation10 + $0x1f8] sm:$0xff]
    %1044 = vmatpush.msra.mxu0 %v1040
    %1045 = vmatpush.msra.mxu0 %v1036
    %1046 = vmatpush.msra.mxu0 %v1032
    %1047 = vmatpush.msra.mxu0 %v1028
    %1048 = vmatpush.msra.mxu0 %v1024
    %1049 = vmatpush.msra.mxu0 %v1020
    %1050 = vmatpush.msra.mxu0 %v1016
    %1051 = vmatpush.msra.mxu0 %v1012
    %1052 = vmatpush.msra.mxu0 %v1008
    %1053 = vmatpush.msra.mxu0 %v1004
    %1054 = vmatpush.msra.mxu0 %v1000
    %1055 = vmatpush.msra.mxu0 %v996
    %1056 = vmatpush.msra.mxu0 %v992
    %1057 = vmatpush.msra.mxu0 %v988
    %1058 = vmatpush.msra.mxu0 %v984
    %1059 = vmatpush.msra.mxu0 %v980
    %1060 = vmatmul.f32.gmra.mxu0 %v979
    %v1061 = vpop.f32.mrf.mxu0
    %v1062 = vadd.f32 0.0, %v1061
    %1063 = vdwg.mxu0
    %1064 = vmatpush.msra.mxu0 %v1041
    %1065 = vmatpush.msra.mxu0 %v1037
    %1066 = vmatpush.msra.mxu0 %v1033
    %1067 = vmatpush.msra.mxu0 %v1029
    %1068 = vmatpush.msra.mxu0 %v1025
    %1069 = vmatpush.msra.mxu0 %v1021
    %1070 = vmatpush.msra.mxu0 %v1017
    %1071 = vmatpush.msra.mxu0 %v1013
    %1072 = vmatpush.msra.mxu0 %v1009
    %1073 = vmatpush.msra.mxu0 %v1005
    %1074 = vmatpush.msra.mxu0 %v1001
    %1075 = vmatpush.msra.mxu0 %v997
    %1076 = vmatpush.msra.mxu0 %v993
    %1077 = vmatpush.msra.mxu0 %v989
    %1078 = vmatpush.msra.mxu0 %v985
    %1079 = vmatpush.msra.mxu0 %v981
    %1080 = vmatmul.f32.gmra.mxu0 %v979
    %v1081 = vpop.f32.mrf.mxu0
    %v1082 = vadd.f32 0.0, %v1081
    %1083 = vdwg.mxu0
    %1084 = vmatpush.msra.mxu0 %v1042
    %1085 = vmatpush.msra.mxu0 %v1038
    %1086 = vmatpush.msra.mxu0 %v1034
    %1087 = vmatpush.msra.mxu0 %v1030
    %1088 = vmatpush.msra.mxu0 %v1026
    %1089 = vmatpush.msra.mxu0 %v1022
    %1090 = vmatpush.msra.mxu0 %v1018
    %1091 = vmatpush.msra.mxu0 %v1014
    %1092 = vmatpush.msra.mxu0 %v1010
    %1093 = vmatpush.msra.mxu0 %v1006
    %1094 = vmatpush.msra.mxu0 %v1002
    %1095 = vmatpush.msra.mxu0 %v998
    %1096 = vmatpush.msra.mxu0 %v994
    %1097 = vmatpush.msra.mxu0 %v990
    %1098 = vmatpush.msra.mxu0 %v986
    %1099 = vmatpush.msra.mxu0 %v982
    %1100 = vmatmul.f32.gmra.mxu0 %v979
    %v1101 = vpop.f32.mrf.mxu0
    %v1102 = vadd.f32 0.0, %v1101
    %1103 = vdwg.mxu0
    %1104 = vmatpush.msra.mxu0 %v1043
    %1105 = vmatpush.msra.mxu0 %v1039
    %1106 = vmatpush.msra.mxu0 %v1035
    %1107 = vmatpush.msra.mxu0 %v1031
    %1108 = vmatpush.msra.mxu0 %v1027
    %1109 = vmatpush.msra.mxu0 %v1023
    %1110 = vmatpush.msra.mxu0 %v1019
    %1111 = vmatpush.msra.mxu0 %v1015
    %1112 = vmatpush.msra.mxu0 %v1011
    %1113 = vmatpush.msra.mxu0 %v1007
    %1114 = vmatpush.msra.mxu0 %v1003
    %1115 = vmatpush.msra.mxu0 %v999
    %1116 = vmatpush.msra.mxu0 %v995
    %1117 = vmatpush.msra.mxu0 %v991
    %1118 = vmatpush.msra.mxu0 %v987
    %1119 = vmatpush.msra.mxu0 %v983
    %1120 = vmatmul.f32.gmra.mxu0 %v979
    %v1121 = vpop.f32.mrf.mxu0
    %v1122 = vadd.f32 0.0, %v1121
    %1123 = vdwg.mxu0
    %v1124 = vadd.f32 %v975, %v1062
    %v1125 = vadd.f32 %v976, %v1082
    %v1126 = vadd.f32 %v977, %v1102
    %v1127 = vadd.f32 %v978, %v1122
    %v1128 = vxor.u32 %v1124, 2147483648
    %v1129 = vmul.f32 %v1128, 1.442695
    %v1130 = vpow.pop %v1129
    %v1131 = vadd.f32 %v1130, 1.0
    %v1132 = vrcp.pop %v1131
    %v1133 = vmul.f32 %v1131, %v1132
    %v1134 = vsub.f32 1.0, %v1133
    %v1135 = vmul.f32 %v1132, %v1134
    %v1136 = vadd.f32 %v1132, %v1135
    %vm1137 = vweird.f32 %v1131
    %vm1138 = vweird.f32 %v1132
    %vm1139 = vmor %vm1137, %vm1138
    %v1140 = vsel %vm1139, %v1132, %v1136
    %v1141 = vand.u32 2147483647, %v1131
    %vm1142 = vcmp.eq.f32.partialorder %v1141, 8.507059e+37
    %v1143 = vand.u32 %v1131, 2147483648
    %v1144 = vor.u32 1.1754944e-38, %v1143
    %v1145 = vsel %vm1142, %v1144, %v1140
    %v1146 = vmul.f32 1.0, %v1145
    %v1147 = vxor.u32 %v1125, 2147483648
    %v1148 = vmul.f32 %v1147, 1.442695
    %v1149 = vpow.pop %v1148
    %v1150 = vadd.f32 %v1149, 1.0
    %v1151 = vrcp.pop %v1150
    %v1152 = vmul.f32 %v1150, %v1151
    %v1153 = vsub.f32 1.0, %v1152
    %v1154 = vmul.f32 %v1151, %v1153
    %v1155 = vadd.f32 %v1151, %v1154
    %vm1156 = vweird.f32 %v1150
    %vm1157 = vweird.f32 %v1151
    %vm1158 = vmor %vm1156, %vm1157
    %v1159 = vsel %vm1158, %v1151, %v1155
    %v1160 = vand.u32 2147483647, %v1150
    %vm1161 = vcmp.eq.f32.partialorder %v1160, 8.507059e+37
    %v1162 = vand.u32 %v1150, 2147483648
    %v1163 = vor.u32 1.1754944e-38, %v1162
    %v1164 = vsel %vm1161, %v1163, %v1159
    %v1165 = vmul.f32 1.0, %v1164
    %v1166 = vtanh.pop %v1126
    %v1167 = vxor.u32 %v1127, 2147483648
    %v1168 = vmul.f32 %v1167, 1.442695
    %v1169 = vpow.pop %v1168
    %v1170 = vadd.f32 %v1169, 1.0
    %v1171 = vrcp.pop %v1170
    %v1172 = vmul.f32 %v1170, %v1171
    %v1173 = vsub.f32 1.0, %v1172
    %v1174 = vmul.f32 %v1171, %v1173
    %v1175 = vadd.f32 %v1171, %v1174
    %vm1176 = vweird.f32 %v1170
    %vm1177 = vweird.f32 %v1171
    %vm1178 = vmor %vm1176, %vm1177
    %v1179 = vsel %vm1178, %v1171, %v1175
    %v1180 = vand.u32 2147483647, %v1170
    %vm1181 = vcmp.eq.f32.partialorder %v1180, 8.507059e+37
    %v1182 = vand.u32 %v1170, 2147483648
    %v1183 = vor.u32 1.1754944e-38, %v1182
    %v1184 = vsel %vm1181, %v1183, %v1179
    %v1185 = vmul.f32 1.0, %v1184
    %v1186 = vld [vmem:[#allocation3] sm:$0xff]
    %v1187 = vmul.f32 %v1165, %v1186
    %v1188 = vmul.f32 %v1146, %v1166
    %v1189 = vadd.f32 %v1187, %v1188
    %v1190 = vtanh.pop %v1189
    %v1191 = vmul.f32 %v1185, %v1190
    %1192 = vst [vmem:[#allocation2] sm:$0xff] %v1191
    %1193 = vst [vmem:[#allocation3] sm:$0xff] %v1189
    %s1194 = scalar_lea.vmem [#allocation12], 32
    %1195 = vst [vmem:[%s1194] sm:$0xff] %v1191
    %s1196 = scalar_lea.vmem [#allocation4], 160
    %v1197 = vld [vmem:[%s1196] sm:$0xff]
    %v1198 = vld [vmem:[%s1196 + $0x8] sm:$0xff]
    %v1199 = vld [vmem:[%s1196 + $0x10] sm:$0xff]
    %v1200 = vld [vmem:[%s1196 + $0x18] sm:$0xff]
    %v1201 = vld [vmem:[#allocation2] sm:$0xff]
    %v1202 = vld [vmem:[#allocation10] sm:$0xff]
    %v1203 = vld [vmem:[#allocation10 + $0x8] sm:$0xff]
    %v1204 = vld [vmem:[#allocation10 + $0x10] sm:$0xff]
    %v1205 = vld [vmem:[#allocation10 + $0x18] sm:$0xff]
    %v1206 = vld [vmem:[#allocation10 + $0x20] sm:$0xff]
    %v1207 = vld [vmem:[#allocation10 + $0x28] sm:$0xff]
    %v1208 = vld [vmem:[#allocation10 + $0x30] sm:$0xff]
    %v1209 = vld [vmem:[#allocation10 + $0x38] sm:$0xff]
    %v1210 = vld [vmem:[#allocation10 + $0x40] sm:$0xff]
    %v1211 = vld [vmem:[#allocation10 + $0x48] sm:$0xff]
    %v1212 = vld [vmem:[#allocation10 + $0x50] sm:$0xff]
    %v1213 = vld [vmem:[#allocation10 + $0x58] sm:$0xff]
    %v1214 = vld [vmem:[#allocation10 + $0x60] sm:$0xff]
    %v1215 = vld [vmem:[#allocation10 + $0x68] sm:$0xff]
    %v1216 = vld [vmem:[#allocation10 + $0x70] sm:$0xff]
    %v1217 = vld [vmem:[#allocation10 + $0x78] sm:$0xff]
    %v1218 = vld [vmem:[#allocation10 + $0x80] sm:$0xff]
    %v1219 = vld [vmem:[#allocation10 + $0x88] sm:$0xff]
    %v1220 = vld [vmem:[#allocation10 + $0x90] sm:$0xff]
    %v1221 = vld [vmem:[#allocation10 + $0x98] sm:$0xff]
    %v1222 = vld [vmem:[#allocation10 + $0xa0] sm:$0xff]
    %v1223 = vld [vmem:[#allocation10 + $0xa8] sm:$0xff]
    %v1224 = vld [vmem:[#allocation10 + $0xb0] sm:$0xff]
    %v1225 = vld [vmem:[#allocation10 + $0xb8] sm:$0xff]
    %v1226 = vld [vmem:[#allocation10 + $0xc0] sm:$0xff]
    %v1227 = vld [vmem:[#allocation10 + $0xc8] sm:$0xff]
    %v1228 = vld [vmem:[#allocation10 + $0xd0] sm:$0xff]
    %v1229 = vld [vmem:[#allocation10 + $0xd8] sm:$0xff]
    %v1230 = vld [vmem:[#allocation10 + $0xe0] sm:$0xff]
    %v1231 = vld [vmem:[#allocation10 + $0xe8] sm:$0xff]
    %v1232 = vld [vmem:[#allocation10 + $0xf0] sm:$0xff]
    %v1233 = vld [vmem:[#allocation10 + $0xf8] sm:$0xff]
    %v1234 = vld [vmem:[#allocation10 + $0x100] sm:$0xff]
    %v1235 = vld [vmem:[#allocation10 + $0x108] sm:$0xff]
    %v1236 = vld [vmem:[#allocation10 + $0x110] sm:$0xff]
    %v1237 = vld [vmem:[#allocation10 + $0x118] sm:$0xff]
    %v1238 = vld [vmem:[#allocation10 + $0x120] sm:$0xff]
    %v1239 = vld [vmem:[#allocation10 + $0x128] sm:$0xff]
    %v1240 = vld [vmem:[#allocation10 + $0x130] sm:$0xff]
    %v1241 = vld [vmem:[#allocation10 + $0x138] sm:$0xff]
    %v1242 = vld [vmem:[#allocation10 + $0x140] sm:$0xff]
    %v1243 = vld [vmem:[#allocation10 + $0x148] sm:$0xff]
    %v1244 = vld [vmem:[#allocation10 + $0x150] sm:$0xff]
    %v1245 = vld [vmem:[#allocation10 + $0x158] sm:$0xff]
    %v1246 = vld [vmem:[#allocation10 + $0x160] sm:$0xff]
    %v1247 = vld [vmem:[#allocation10 + $0x168] sm:$0xff]
    %v1248 = vld [vmem:[#allocation10 + $0x170] sm:$0xff]
    %v1249 = vld [vmem:[#allocation10 + $0x178] sm:$0xff]
    %v1250 = vld [vmem:[#allocation10 + $0x180] sm:$0xff]
    %v1251 = vld [vmem:[#allocation10 + $0x188] sm:$0xff]
    %v1252 = vld [vmem:[#allocation10 + $0x190] sm:$0xff]
    %v1253 = vld [vmem:[#allocation10 + $0x198] sm:$0xff]
    %v1254 = vld [vmem:[#allocation10 + $0x1a0] sm:$0xff]
    %v1255 = vld [vmem:[#allocation10 + $0x1a8] sm:$0xff]
    %v1256 = vld [vmem:[#allocation10 + $0x1b0] sm:$0xff]
    %v1257 = vld [vmem:[#allocation10 + $0x1b8] sm:$0xff]
    %v1258 = vld [vmem:[#allocation10 + $0x1c0] sm:$0xff]
    %v1259 = vld [vmem:[#allocation10 + $0x1c8] sm:$0xff]
    %v1260 = vld [vmem:[#allocation10 + $0x1d0] sm:$0xff]
    %v1261 = vld [vmem:[#allocation10 + $0x1d8] sm:$0xff]
    %v1262 = vld [vmem:[#allocation10 + $0x1e0] sm:$0xff]
    %v1263 = vld [vmem:[#allocation10 + $0x1e8] sm:$0xff]
    %v1264 = vld [vmem:[#allocation10 + $0x1f0] sm:$0xff]
    %v1265 = vld [vmem:[#allocation10 + $0x1f8] sm:$0xff]
    %1266 = vmatpush.msra.mxu0 %v1262
    %1267 = vmatpush.msra.mxu0 %v1258
    %1268 = vmatpush.msra.mxu0 %v1254
    %1269 = vmatpush.msra.mxu0 %v1250
    %1270 = vmatpush.msra.mxu0 %v1246
    %1271 = vmatpush.msra.mxu0 %v1242
    %1272 = vmatpush.msra.mxu0 %v1238
    %1273 = vmatpush.msra.mxu0 %v1234
    %1274 = vmatpush.msra.mxu0 %v1230
    %1275 = vmatpush.msra.mxu0 %v1226
    %1276 = vmatpush.msra.mxu0 %v1222
    %1277 = vmatpush.msra.mxu0 %v1218
    %1278 = vmatpush.msra.mxu0 %v1214
    %1279 = vmatpush.msra.mxu0 %v1210
    %1280 = vmatpush.msra.mxu0 %v1206
    %1281 = vmatpush.msra.mxu0 %v1202
    %1282 = vmatmul.f32.gmra.mxu0 %v1201
    %v1283 = vpop.f32.mrf.mxu0
    %v1284 = vadd.f32 0.0, %v1283
    %1285 = vdwg.mxu0
    %1286 = vmatpush.msra.mxu0 %v1263
    %1287 = vmatpush.msra.mxu0 %v1259
    %1288 = vmatpush.msra.mxu0 %v1255
    %1289 = vmatpush.msra.mxu0 %v1251
    %1290 = vmatpush.msra.mxu0 %v1247
    %1291 = vmatpush.msra.mxu0 %v1243
    %1292 = vmatpush.msra.mxu0 %v1239
    %1293 = vmatpush.msra.mxu0 %v1235
    %1294 = vmatpush.msra.mxu0 %v1231
    %1295 = vmatpush.msra.mxu0 %v1227
    %1296 = vmatpush.msra.mxu0 %v1223
    %1297 = vmatpush.msra.mxu0 %v1219
    %1298 = vmatpush.msra.mxu0 %v1215
    %1299 = vmatpush.msra.mxu0 %v1211
    %1300 = vmatpush.msra.mxu0 %v1207
    %1301 = vmatpush.msra.mxu0 %v1203
    %1302 = vmatmul.f32.gmra.mxu0 %v1201
    %v1303 = vpop.f32.mrf.mxu0
    %v1304 = vadd.f32 0.0, %v1303
    %1305 = vdwg.mxu0
    %1306 = vmatpush.msra.mxu0 %v1264
    %1307 = vmatpush.msra.mxu0 %v1260
    %1308 = vmatpush.msra.mxu0 %v1256
    %1309 = vmatpush.msra.mxu0 %v1252
    %1310 = vmatpush.msra.mxu0 %v1248
    %1311 = vmatpush.msra.mxu0 %v1244
    %1312 = vmatpush.msra.mxu0 %v1240
    %1313 = vmatpush.msra.mxu0 %v1236
    %1314 = vmatpush.msra.mxu0 %v1232
    %1315 = vmatpush.msra.mxu0 %v1228
    %1316 = vmatpush.msra.mxu0 %v1224
    %1317 = vmatpush.msra.mxu0 %v1220
    %1318 = vmatpush.msra.mxu0 %v1216
    %1319 = vmatpush.msra.mxu0 %v1212
    %1320 = vmatpush.msra.mxu0 %v1208
    %1321 = vmatpush.msra.mxu0 %v1204
    %1322 = vmatmul.f32.gmra.mxu0 %v1201
    %v1323 = vpop.f32.mrf.mxu0
    %v1324 = vadd.f32 0.0, %v1323
    %1325 = vdwg.mxu0
    %1326 = vmatpush.msra.mxu0 %v1265
    %1327 = vmatpush.msra.mxu0 %v1261
    %1328 = vmatpush.msra.mxu0 %v1257
    %1329 = vmatpush.msra.mxu0 %v1253
    %1330 = vmatpush.msra.mxu0 %v1249
    %1331 = vmatpush.msra.mxu0 %v1245
    %1332 = vmatpush.msra.mxu0 %v1241
    %1333 = vmatpush.msra.mxu0 %v1237
    %1334 = vmatpush.msra.mxu0 %v1233
    %1335 = vmatpush.msra.mxu0 %v1229
    %1336 = vmatpush.msra.mxu0 %v1225
    %1337 = vmatpush.msra.mxu0 %v1221
    %1338 = vmatpush.msra.mxu0 %v1217
    %1339 = vmatpush.msra.mxu0 %v1213
    %1340 = vmatpush.msra.mxu0 %v1209
    %1341 = vmatpush.msra.mxu0 %v1205
    %1342 = vmatmul.f32.gmra.mxu0 %v1201
    %v1343 = vpop.f32.mrf.mxu0
    %v1344 = vadd.f32 0.0, %v1343
    %1345 = vdwg.mxu0
    %v1346 = vadd.f32 %v1197, %v1284
    %v1347 = vadd.f32 %v1198, %v1304
    %v1348 = vadd.f32 %v1199, %v1324
    %v1349 = vadd.f32 %v1200, %v1344
    %v1350 = vxor.u32 %v1346, 2147483648
    %v1351 = vmul.f32 %v1350, 1.442695
    %v1352 = vpow.pop %v1351
    %v1353 = vadd.f32 %v1352, 1.0
    %v1354 = vrcp.pop %v1353
    %v1355 = vmul.f32 %v1353, %v1354
    %v1356 = vsub.f32 1.0, %v1355
    %v1357 = vmul.f32 %v1354, %v1356
    %v1358 = vadd.f32 %v1354, %v1357
    %vm1359 = vweird.f32 %v1353
    %vm1360 = vweird.f32 %v1354
    %vm1361 = vmor %vm1359, %vm1360
    %v1362 = vsel %vm1361, %v1354, %v1358
    %v1363 = vand.u32 2147483647, %v1353
    %vm1364 = vcmp.eq.f32.partialorder %v1363, 8.507059e+37
    %v1365 = vand.u32 %v1353, 2147483648
    %v1366 = vor.u32 1.1754944e-38, %v1365
    %v1367 = vsel %vm1364, %v1366, %v1362
    %v1368 = vmul.f32 1.0, %v1367
    %v1369 = vxor.u32 %v1347, 2147483648
    %v1370 = vmul.f32 %v1369, 1.442695
    %v1371 = vpow.pop %v1370
    %v1372 = vadd.f32 %v1371, 1.0
    %v1373 = vrcp.pop %v1372
    %v1374 = vmul.f32 %v1372, %v1373
    %v1375 = vsub.f32 1.0, %v1374
    %v1376 = vmul.f32 %v1373, %v1375
    %v1377 = vadd.f32 %v1373, %v1376
    %vm1378 = vweird.f32 %v1372
    %vm1379 = vweird.f32 %v1373
    %vm1380 = vmor %vm1378, %vm1379
    %v1381 = vsel %vm1380, %v1373, %v1377
    %v1382 = vand.u32 2147483647, %v1372
    %vm1383 = vcmp.eq.f32.partialorder %v1382, 8.507059e+37
    %v1384 = vand.u32 %v1372, 2147483648
    %v1385 = vor.u32 1.1754944e-38, %v1384
    %v1386 = vsel %vm1383, %v1385, %v1381
    %v1387 = vmul.f32 1.0, %v1386
    %v1388 = vtanh.pop %v1348
    %v1389 = vxor.u32 %v1349, 2147483648
    %v1390 = vmul.f32 %v1389, 1.442695
    %v1391 = vpow.pop %v1390
    %v1392 = vadd.f32 %v1391, 1.0
    %v1393 = vrcp.pop %v1392
    %v1394 = vmul.f32 %v1392, %v1393
    %v1395 = vsub.f32 1.0, %v1394
    %v1396 = vmul.f32 %v1393, %v1395
    %v1397 = vadd.f32 %v1393, %v1396
    %vm1398 = vweird.f32 %v1392
    %vm1399 = vweird.f32 %v1393
    %vm1400 = vmor %vm1398, %vm1399
    %v1401 = vsel %vm1400, %v1393, %v1397
    %v1402 = vand.u32 2147483647, %v1392
    %vm1403 = vcmp.eq.f32.partialorder %v1402, 8.507059e+37
    %v1404 = vand.u32 %v1392, 2147483648
    %v1405 = vor.u32 1.1754944e-38, %v1404
    %v1406 = vsel %vm1403, %v1405, %v1401
    %v1407 = vmul.f32 1.0, %v1406
    %v1408 = vld [vmem:[#allocation3] sm:$0xff]
    %v1409 = vmul.f32 %v1387, %v1408
    %v1410 = vmul.f32 %v1368, %v1388
    %v1411 = vadd.f32 %v1409, %v1410
    %v1412 = vtanh.pop %v1411
    %v1413 = vmul.f32 %v1407, %v1412
    %1414 = vst [vmem:[#allocation2] sm:$0xff] %v1413
    %1415 = vst [vmem:[#allocation3] sm:$0xff] %v1411
    %s1416 = scalar_lea.vmem [#allocation12], 40
    %1417 = vst [vmem:[%s1416] sm:$0xff] %v1413
    %s1418 = scalar_lea.vmem [#allocation4], 192
    %v1419 = vld [vmem:[%s1418] sm:$0xff]
    %v1420 = vld [vmem:[%s1418 + $0x8] sm:$0xff]
    %v1421 = vld [vmem:[%s1418 + $0x10] sm:$0xff]
    %v1422 = vld [vmem:[%s1418 + $0x18] sm:$0xff]
    %v1423 = vld [vmem:[#allocation2] sm:$0xff]
    %v1424 = vld [vmem:[#allocation10] sm:$0xff]
    %v1425 = vld [vmem:[#allocation10 + $0x8] sm:$0xff]
    %v1426 = vld [vmem:[#allocation10 + $0x10] sm:$0xff]
    %v1427 = vld [vmem:[#allocation10 + $0x18] sm:$0xff]
    %v1428 = vld [vmem:[#allocation10 + $0x20] sm:$0xff]
    %v1429 = vld [vmem:[#allocation10 + $0x28] sm:$0xff]
    %v1430 = vld [vmem:[#allocation10 + $0x30] sm:$0xff]
    %v1431 = vld [vmem:[#allocation10 + $0x38] sm:$0xff]
    %v1432 = vld [vmem:[#allocation10 + $0x40] sm:$0xff]
    %v1433 = vld [vmem:[#allocation10 + $0x48] sm:$0xff]
    %v1434 = vld [vmem:[#allocation10 + $0x50] sm:$0xff]
    %v1435 = vld [vmem:[#allocation10 + $0x58] sm:$0xff]
    %v1436 = vld [vmem:[#allocation10 + $0x60] sm:$0xff]
    %v1437 = vld [vmem:[#allocation10 + $0x68] sm:$0xff]
    %v1438 = vld [vmem:[#allocation10 + $0x70] sm:$0xff]
    %v1439 = vld [vmem:[#allocation10 + $0x78] sm:$0xff]
    %v1440 = vld [vmem:[#allocation10 + $0x80] sm:$0xff]
    %v1441 = vld [vmem:[#allocation10 + $0x88] sm:$0xff]
    %v1442 = vld [vmem:[#allocation10 + $0x90] sm:$0xff]
    %v1443 = vld [vmem:[#allocation10 + $0x98] sm:$0xff]
    %v1444 = vld [vmem:[#allocation10 + $0xa0] sm:$0xff]
    %v1445 = vld [vmem:[#allocation10 + $0xa8] sm:$0xff]
    %v1446 = vld [vmem:[#allocation10 + $0xb0] sm:$0xff]
    %v1447 = vld [vmem:[#allocation10 + $0xb8] sm:$0xff]
    %v1448 = vld [vmem:[#allocation10 + $0xc0] sm:$0xff]
    %v1449 = vld [vmem:[#allocation10 + $0xc8] sm:$0xff]
    %v1450 = vld [vmem:[#allocation10 + $0xd0] sm:$0xff]
    %v1451 = vld [vmem:[#allocation10 + $0xd8] sm:$0xff]
    %v1452 = vld [vmem:[#allocation10 + $0xe0] sm:$0xff]
    %v1453 = vld [vmem:[#allocation10 + $0xe8] sm:$0xff]
    %v1454 = vld [vmem:[#allocation10 + $0xf0] sm:$0xff]
    %v1455 = vld [vmem:[#allocation10 + $0xf8] sm:$0xff]
    %v1456 = vld [vmem:[#allocation10 + $0x100] sm:$0xff]
    %v1457 = vld [vmem:[#allocation10 + $0x108] sm:$0xff]
    %v1458 = vld [vmem:[#allocation10 + $0x110] sm:$0xff]
    %v1459 = vld [vmem:[#allocation10 + $0x118] sm:$0xff]
    %v1460 = vld [vmem:[#allocation10 + $0x120] sm:$0xff]
    %v1461 = vld [vmem:[#allocation10 + $0x128] sm:$0xff]
    %v1462 = vld [vmem:[#allocation10 + $0x130] sm:$0xff]
    %v1463 = vld [vmem:[#allocation10 + $0x138] sm:$0xff]
    %v1464 = vld [vmem:[#allocation10 + $0x140] sm:$0xff]
    %v1465 = vld [vmem:[#allocation10 + $0x148] sm:$0xff]
    %v1466 = vld [vmem:[#allocation10 + $0x150] sm:$0xff]
    %v1467 = vld [vmem:[#allocation10 + $0x158] sm:$0xff]
    %v1468 = vld [vmem:[#allocation10 + $0x160] sm:$0xff]
    %v1469 = vld [vmem:[#allocation10 + $0x168] sm:$0xff]
    %v1470 = vld [vmem:[#allocation10 + $0x170] sm:$0xff]
    %v1471 = vld [vmem:[#allocation10 + $0x178] sm:$0xff]
    %v1472 = vld [vmem:[#allocation10 + $0x180] sm:$0xff]
    %v1473 = vld [vmem:[#allocation10 + $0x188] sm:$0xff]
    %v1474 = vld [vmem:[#allocation10 + $0x190] sm:$0xff]
    %v1475 = vld [vmem:[#allocation10 + $0x198] sm:$0xff]
    %v1476 = vld [vmem:[#allocation10 + $0x1a0] sm:$0xff]
    %v1477 = vld [vmem:[#allocation10 + $0x1a8] sm:$0xff]
    %v1478 = vld [vmem:[#allocation10 + $0x1b0] sm:$0xff]
    %v1479 = vld [vmem:[#allocation10 + $0x1b8] sm:$0xff]
    %v1480 = vld [vmem:[#allocation10 + $0x1c0] sm:$0xff]
    %v1481 = vld [vmem:[#allocation10 + $0x1c8] sm:$0xff]
    %v1482 = vld [vmem:[#allocation10 + $0x1d0] sm:$0xff]
    %v1483 = vld [vmem:[#allocation10 + $0x1d8] sm:$0xff]
    %v1484 = vld [vmem:[#allocation10 + $0x1e0] sm:$0xff]
    %v1485 = vld [vmem:[#allocation10 + $0x1e8] sm:$0xff]
    %v1486 = vld [vmem:[#allocation10 + $0x1f0] sm:$0xff]
    %v1487 = vld [vmem:[#allocation10 + $0x1f8] sm:$0xff]
    %1488 = vmatpush.msra.mxu0 %v1484
    %1489 = vmatpush.msra.mxu0 %v1480
    %1490 = vmatpush.msra.mxu0 %v1476
    %1491 = vmatpush.msra.mxu0 %v1472
    %1492 = vmatpush.msra.mxu0 %v1468
    %1493 = vmatpush.msra.mxu0 %v1464
    %1494 = vmatpush.msra.mxu0 %v1460
    %1495 = vmatpush.msra.mxu0 %v1456
    %1496 = vmatpush.msra.mxu0 %v1452
    %1497 = vmatpush.msra.mxu0 %v1448
    %1498 = vmatpush.msra.mxu0 %v1444
    %1499 = vmatpush.msra.mxu0 %v1440
    %1500 = vmatpush.msra.mxu0 %v1436
    %1501 = vmatpush.msra.mxu0 %v1432
    %1502 = vmatpush.msra.mxu0 %v1428
    %1503 = vmatpush.msra.mxu0 %v1424
    %1504 = vmatmul.f32.gmra.mxu0 %v1423
    %v1505 = vpop.f32.mrf.mxu0
    %v1506 = vadd.f32 0.0, %v1505
    %1507 = vdwg.mxu0
    %1508 = vmatpush.msra.mxu0 %v1485
    %1509 = vmatpush.msra.mxu0 %v1481
    %1510 = vmatpush.msra.mxu0 %v1477
    %1511 = vmatpush.msra.mxu0 %v1473
    %1512 = vmatpush.msra.mxu0 %v1469
    %1513 = vmatpush.msra.mxu0 %v1465
    %1514 = vmatpush.msra.mxu0 %v1461
    %1515 = vmatpush.msra.mxu0 %v1457
    %1516 = vmatpush.msra.mxu0 %v1453
    %1517 = vmatpush.msra.mxu0 %v1449
    %1518 = vmatpush.msra.mxu0 %v1445
    %1519 = vmatpush.msra.mxu0 %v1441
    %1520 = vmatpush.msra.mxu0 %v1437
    %1521 = vmatpush.msra.mxu0 %v1433
    %1522 = vmatpush.msra.mxu0 %v1429
    %1523 = vmatpush.msra.mxu0 %v1425
    %1524 = vmatmul.f32.gmra.mxu0 %v1423
    %v1525 = vpop.f32.mrf.mxu0
    %v1526 = vadd.f32 0.0, %v1525
    %1527 = vdwg.mxu0
    %1528 = vmatpush.msra.mxu0 %v1486
    %1529 = vmatpush.msra.mxu0 %v1482
    %1530 = vmatpush.msra.mxu0 %v1478
    %1531 = vmatpush.msra.mxu0 %v1474
    %1532 = vmatpush.msra.mxu0 %v1470
    %1533 = vmatpush.msra.mxu0 %v1466
    %1534 = vmatpush.msra.mxu0 %v1462
    %1535 = vmatpush.msra.mxu0 %v1458
    %1536 = vmatpush.msra.mxu0 %v1454
    %1537 = vmatpush.msra.mxu0 %v1450
    %1538 = vmatpush.msra.mxu0 %v1446
    %1539 = vmatpush.msra.mxu0 %v1442
    %1540 = vmatpush.msra.mxu0 %v1438
    %1541 = vmatpush.msra.mxu0 %v1434
    %1542 = vmatpush.msra.mxu0 %v1430
    %1543 = vmatpush.msra.mxu0 %v1426
    %1544 = vmatmul.f32.gmra.mxu0 %v1423
    %v1545 = vpop.f32.mrf.mxu0
    %v1546 = vadd.f32 0.0, %v1545
    %1547 = vdwg.mxu0
    %1548 = vmatpush.msra.mxu0 %v1487
    %1549 = vmatpush.msra.mxu0 %v1483
    %1550 = vmatpush.msra.mxu0 %v1479
    %1551 = vmatpush.msra.mxu0 %v1475
    %1552 = vmatpush.msra.mxu0 %v1471
    %1553 = vmatpush.msra.mxu0 %v1467
    %1554 = vmatpush.msra.mxu0 %v1463
    %1555 = vmatpush.msra.mxu0 %v1459
    %1556 = vmatpush.msra.mxu0 %v1455
    %1557 = vmatpush.msra.mxu0 %v1451
    %1558 = vmatpush.msra.mxu0 %v1447
    %1559 = vmatpush.msra.mxu0 %v1443
    %1560 = vmatpush.msra.mxu0 %v1439
    %1561 = vmatpush.msra.mxu0 %v1435
    %1562 = vmatpush.msra.mxu0 %v1431
    %1563 = vmatpush.msra.mxu0 %v1427
    %1564 = vmatmul.f32.gmra.mxu0 %v1423
    %v1565 = vpop.f32.mrf.mxu0
    %v1566 = vadd.f32 0.0, %v1565
    %1567 = vdwg.mxu0
    %v1568 = vadd.f32 %v1419, %v1506
    %v1569 = vadd.f32 %v1420, %v1526
    %v1570 = vadd.f32 %v1421, %v1546
    %v1571 = vadd.f32 %v1422, %v1566
    %v1572 = vxor.u32 %v1568, 2147483648
    %v1573 = vmul.f32 %v1572, 1.442695
    %v1574 = vpow.pop %v1573
    %v1575 = vadd.f32 %v1574, 1.0
    %v1576 = vrcp.pop %v1575
    %v1577 = vmul.f32 %v1575, %v1576
    %v1578 = vsub.f32 1.0, %v1577
    %v1579 = vmul.f32 %v1576, %v1578
    %v1580 = vadd.f32 %v1576, %v1579
    %vm1581 = vweird.f32 %v1575
    %vm1582 = vweird.f32 %v1576
    %vm1583 = vmor %vm1581, %vm1582
    %v1584 = vsel %vm1583, %v1576, %v1580
    %v1585 = vand.u32 2147483647, %v1575
    %vm1586 = vcmp.eq.f32.partialorder %v1585, 8.507059e+37
    %v1587 = vand.u32 %v1575, 2147483648
    %v1588 = vor.u32 1.1754944e-38, %v1587
    %v1589 = vsel %vm1586, %v1588, %v1584
    %v1590 = vmul.f32 1.0, %v1589
    %v1591 = vxor.u32 %v1569, 2147483648
    %v1592 = vmul.f32 %v1591, 1.442695
    %v1593 = vpow.pop %v1592
    %v1594 = vadd.f32 %v1593, 1.0
    %v1595 = vrcp.pop %v1594
    %v1596 = vmul.f32 %v1594, %v1595
    %v1597 = vsub.f32 1.0, %v1596
    %v1598 = vmul.f32 %v1595, %v1597
    %v1599 = vadd.f32 %v1595, %v1598
    %vm1600 = vweird.f32 %v1594
    %vm1601 = vweird.f32 %v1595
    %vm1602 = vmor %vm1600, %vm1601
    %v1603 = vsel %vm1602, %v1595, %v1599
    %v1604 = vand.u32 2147483647, %v1594
    %vm1605 = vcmp.eq.f32.partialorder %v1604, 8.507059e+37
    %v1606 = vand.u32 %v1594, 2147483648
    %v1607 = vor.u32 1.1754944e-38, %v1606
    %v1608 = vsel %vm1605, %v1607, %v1603
    %v1609 = vmul.f32 1.0, %v1608
    %v1610 = vtanh.pop %v1570
    %v1611 = vxor.u32 %v1571, 2147483648
    %v1612 = vmul.f32 %v1611, 1.442695
    %v1613 = vpow.pop %v1612
    %v1614 = vadd.f32 %v1613, 1.0
    %v1615 = vrcp.pop %v1614
    %v1616 = vmul.f32 %v1614, %v1615
    %v1617 = vsub.f32 1.0, %v1616
    %v1618 = vmul.f32 %v1615, %v1617
    %v1619 = vadd.f32 %v1615, %v1618
    %vm1620 = vweird.f32 %v1614
    %vm1621 = vweird.f32 %v1615
    %vm1622 = vmor %vm1620, %vm1621
    %v1623 = vsel %vm1622, %v1615, %v1619
    %v1624 = vand.u32 2147483647, %v1614
    %vm1625 = vcmp.eq.f32.partialorder %v1624, 8.507059e+37
    %v1626 = vand.u32 %v1614, 2147483648
    %v1627 = vor.u32 1.1754944e-38, %v1626
    %v1628 = vsel %vm1625, %v1627, %v1623
    %v1629 = vmul.f32 1.0, %v1628
    %v1630 = vld [vmem:[#allocation3] sm:$0xff]
    %v1631 = vmul.f32 %v1609, %v1630
    %v1632 = vmul.f32 %v1590, %v1610
    %v1633 = vadd.f32 %v1631, %v1632
    %v1634 = vtanh.pop %v1633
    %v1635 = vmul.f32 %v1629, %v1634
    %1636 = vst [vmem:[#allocation2] sm:$0xff] %v1635
    %1637 = vst [vmem:[#allocation3] sm:$0xff] %v1633
    %s1638 = scalar_lea.vmem [#allocation12], 48
    %1639 = vst [vmem:[%s1638] sm:$0xff] %v1635
    %s1640 = scalar_lea.vmem [#allocation4], 224
    %v1641 = vld [vmem:[%s1640] sm:$0xff]
    %v1642 = vld [vmem:[%s1640 + $0x8] sm:$0xff]
    %v1643 = vld [vmem:[%s1640 + $0x10] sm:$0xff]
    %v1644 = vld [vmem:[%s1640 + $0x18] sm:$0xff]
    %v1645 = vld [vmem:[#allocation2] sm:$0xff]
    %v1646 = vld [vmem:[#allocation10] sm:$0xff]
    %v1647 = vld [vmem:[#allocation10 + $0x8] sm:$0xff]
    %v1648 = vld [vmem:[#allocation10 + $0x10] sm:$0xff]
    %v1649 = vld [vmem:[#allocation10 + $0x18] sm:$0xff]
    %v1650 = vld [vmem:[#allocation10 + $0x20] sm:$0xff]
    %v1651 = vld [vmem:[#allocation10 + $0x28] sm:$0xff]
    %v1652 = vld [vmem:[#allocation10 + $0x30] sm:$0xff]
    %v1653 = vld [vmem:[#allocation10 + $0x38] sm:$0xff]
    %v1654 = vld [vmem:[#allocation10 + $0x40] sm:$0xff]
    %v1655 = vld [vmem:[#allocation10 + $0x48] sm:$0xff]
    %v1656 = vld [vmem:[#allocation10 + $0x50] sm:$0xff]
    %v1657 = vld [vmem:[#allocation10 + $0x58] sm:$0xff]
    %v1658 = vld [vmem:[#allocation10 + $0x60] sm:$0xff]
    %v1659 = vld [vmem:[#allocation10 + $0x68] sm:$0xff]
    %v1660 = vld [vmem:[#allocation10 + $0x70] sm:$0xff]
    %v1661 = vld [vmem:[#allocation10 + $0x78] sm:$0xff]
    %v1662 = vld [vmem:[#allocation10 + $0x80] sm:$0xff]
    %v1663 = vld [vmem:[#allocation10 + $0x88] sm:$0xff]
    %v1664 = vld [vmem:[#allocation10 + $0x90] sm:$0xff]
    %v1665 = vld [vmem:[#allocation10 + $0x98] sm:$0xff]
    %v1666 = vld [vmem:[#allocation10 + $0xa0] sm:$0xff]
    %v1667 = vld [vmem:[#allocation10 + $0xa8] sm:$0xff]
    %v1668 = vld [vmem:[#allocation10 + $0xb0] sm:$0xff]
    %v1669 = vld [vmem:[#allocation10 + $0xb8] sm:$0xff]
    %v1670 = vld [vmem:[#allocation10 + $0xc0] sm:$0xff]
    %v1671 = vld [vmem:[#allocation10 + $0xc8] sm:$0xff]
    %v1672 = vld [vmem:[#allocation10 + $0xd0] sm:$0xff]
    %v1673 = vld [vmem:[#allocation10 + $0xd8] sm:$0xff]
    %v1674 = vld [vmem:[#allocation10 + $0xe0] sm:$0xff]
    %v1675 = vld [vmem:[#allocation10 + $0xe8] sm:$0xff]
    %v1676 = vld [vmem:[#allocation10 + $0xf0] sm:$0xff]
    %v1677 = vld [vmem:[#allocation10 + $0xf8] sm:$0xff]
    %v1678 = vld [vmem:[#allocation10 + $0x100] sm:$0xff]
    %v1679 = vld [vmem:[#allocation10 + $0x108] sm:$0xff]
    %v1680 = vld [vmem:[#allocation10 + $0x110] sm:$0xff]
    %v1681 = vld [vmem:[#allocation10 + $0x118] sm:$0xff]
    %v1682 = vld [vmem:[#allocation10 + $0x120] sm:$0xff]
    %v1683 = vld [vmem:[#allocation10 + $0x128] sm:$0xff]
    %v1684 = vld [vmem:[#allocation10 + $0x130] sm:$0xff]
    %v1685 = vld [vmem:[#allocation10 + $0x138] sm:$0xff]
    %v1686 = vld [vmem:[#allocation10 + $0x140] sm:$0xff]
    %v1687 = vld [vmem:[#allocation10 + $0x148] sm:$0xff]
    %v1688 = vld [vmem:[#allocation10 + $0x150] sm:$0xff]
    %v1689 = vld [vmem:[#allocation10 + $0x158] sm:$0xff]
    %v1690 = vld [vmem:[#allocation10 + $0x160] sm:$0xff]
    %v1691 = vld [vmem:[#allocation10 + $0x168] sm:$0xff]
    %v1692 = vld [vmem:[#allocation10 + $0x170] sm:$0xff]
    %v1693 = vld [vmem:[#allocation10 + $0x178] sm:$0xff]
    %v1694 = vld [vmem:[#allocation10 + $0x180] sm:$0xff]
    %v1695 = vld [vmem:[#allocation10 + $0x188] sm:$0xff]
    %v1696 = vld [vmem:[#allocation10 + $0x190] sm:$0xff]
    %v1697 = vld [vmem:[#allocation10 + $0x198] sm:$0xff]
    %v1698 = vld [vmem:[#allocation10 + $0x1a0] sm:$0xff]
    %v1699 = vld [vmem:[#allocation10 + $0x1a8] sm:$0xff]
    %v1700 = vld [vmem:[#allocation10 + $0x1b0] sm:$0xff]
    %v1701 = vld [vmem:[#allocation10 + $0x1b8] sm:$0xff]
    %v1702 = vld [vmem:[#allocation10 + $0x1c0] sm:$0xff]
    %v1703 = vld [vmem:[#allocation10 + $0x1c8] sm:$0xff]
    %v1704 = vld [vmem:[#allocation10 + $0x1d0] sm:$0xff]
    %v1705 = vld [vmem:[#allocation10 + $0x1d8] sm:$0xff]
    %v1706 = vld [vmem:[#allocation10 + $0x1e0] sm:$0xff]
    %v1707 = vld [vmem:[#allocation10 + $0x1e8] sm:$0xff]
    %v1708 = vld [vmem:[#allocation10 + $0x1f0] sm:$0xff]
    %v1709 = vld [vmem:[#allocation10 + $0x1f8] sm:$0xff]
    %1710 = vmatpush.msra.mxu0 %v1706
    %1711 = vmatpush.msra.mxu0 %v1702
    %1712 = vmatpush.msra.mxu0 %v1698
    %1713 = vmatpush.msra.mxu0 %v1694
    %1714 = vmatpush.msra.mxu0 %v1690
    %1715 = vmatpush.msra.mxu0 %v1686
    %1716 = vmatpush.msra.mxu0 %v1682
    %1717 = vmatpush.msra.mxu0 %v1678
    %1718 = vmatpush.msra.mxu0 %v1674
    %1719 = vmatpush.msra.mxu0 %v1670
    %1720 = vmatpush.msra.mxu0 %v1666
    %1721 = vmatpush.msra.mxu0 %v1662
    %1722 = vmatpush.msra.mxu0 %v1658
    %1723 = vmatpush.msra.mxu0 %v1654
    %1724 = vmatpush.msra.mxu0 %v1650
    %1725 = vmatpush.msra.mxu0 %v1646
    %1726 = vmatmul.f32.gmra.mxu0 %v1645
    %v1727 = vpop.f32.mrf.mxu0
    %v1728 = vadd.f32 0.0, %v1727
    %1729 = vdwg.mxu0
    %1730 = vmatpush.msra.mxu0 %v1707
    %1731 = vmatpush.msra.mxu0 %v1703
    %1732 = vmatpush.msra.mxu0 %v1699
    %1733 = vmatpush.msra.mxu0 %v1695
    %1734 = vmatpush.msra.mxu0 %v1691
    %1735 = vmatpush.msra.mxu0 %v1687
    %1736 = vmatpush.msra.mxu0 %v1683
    %1737 = vmatpush.msra.mxu0 %v1679
    %1738 = vmatpush.msra.mxu0 %v1675
    %1739 = vmatpush.msra.mxu0 %v1671
    %1740 = vmatpush.msra.mxu0 %v1667
    %1741 = vmatpush.msra.mxu0 %v1663
    %1742 = vmatpush.msra.mxu0 %v1659
    %1743 = vmatpush.msra.mxu0 %v1655
    %1744 = vmatpush.msra.mxu0 %v1651
    %1745 = vmatpush.msra.mxu0 %v1647
    %1746 = vmatmul.f32.gmra.mxu0 %v1645
    %v1747 = vpop.f32.mrf.mxu0
    %v1748 = vadd.f32 0.0, %v1747
    %1749 = vdwg.mxu0
    %1750 = vmatpush.msra.mxu0 %v1708
    %1751 = vmatpush.msra.mxu0 %v1704
    %1752 = vmatpush.msra.mxu0 %v1700
    %1753 = vmatpush.msra.mxu0 %v1696
    %1754 = vmatpush.msra.mxu0 %v1692
    %1755 = vmatpush.msra.mxu0 %v1688
    %1756 = vmatpush.msra.mxu0 %v1684
    %1757 = vmatpush.msra.mxu0 %v1680
    %1758 = vmatpush.msra.mxu0 %v1676
    %1759 = vmatpush.msra.mxu0 %v1672
    %1760 = vmatpush.msra.mxu0 %v1668
    %1761 = vmatpush.msra.mxu0 %v1664
    %1762 = vmatpush.msra.mxu0 %v1660
    %1763 = vmatpush.msra.mxu0 %v1656
    %1764 = vmatpush.msra.mxu0 %v1652
    %1765 = vmatpush.msra.mxu0 %v1648
    %1766 = vmatmul.f32.gmra.mxu0 %v1645
    %v1767 = vpop.f32.mrf.mxu0
    %v1768 = vadd.f32 0.0, %v1767
    %1769 = vdwg.mxu0
    %1770 = vmatpush.msra.mxu0 %v1709
    %1771 = vmatpush.msra.mxu0 %v1705
    %1772 = vmatpush.msra.mxu0 %v1701
    %1773 = vmatpush.msra.mxu0 %v1697
    %1774 = vmatpush.msra.mxu0 %v1693
    %1775 = vmatpush.msra.mxu0 %v1689
    %1776 = vmatpush.msra.mxu0 %v1685
    %1777 = vmatpush.msra.mxu0 %v1681
    %1778 = vmatpush.msra.mxu0 %v1677
    %1779 = vmatpush.msra.mxu0 %v1673
    %1780 = vmatpush.msra.mxu0 %v1669
    %1781 = vmatpush.msra.mxu0 %v1665
    %1782 = vmatpush.msra.mxu0 %v1661
    %1783 = vmatpush.msra.mxu0 %v1657
    %1784 = vmatpush.msra.mxu0 %v1653
    %1785 = vmatpush.msra.mxu0 %v1649
    %1786 = vmatmul.f32.gmra.mxu0 %v1645
    %v1787 = vpop.f32.mrf.mxu0
    %v1788 = vadd.f32 0.0, %v1787
    %1789 = vdwg.mxu0
    %v1790 = vadd.f32 %v1641, %v1728
    %v1791 = vadd.f32 %v1642, %v1748
    %v1792 = vadd.f32 %v1643, %v1768
    %v1793 = vadd.f32 %v1644, %v1788
    %v1794 = vxor.u32 %v1790, 2147483648
    %v1795 = vmul.f32 %v1794, 1.442695
    %v1796 = vpow.pop %v1795
    %v1797 = vadd.f32 %v1796, 1.0
    %v1798 = vrcp.pop %v1797
    %v1799 = vmul.f32 %v1797, %v1798
    %v1800 = vsub.f32 1.0, %v1799
    %v1801 = vmul.f32 %v1798, %v1800
    %v1802 = vadd.f32 %v1798, %v1801
    %vm1803 = vweird.f32 %v1797
    %vm1804 = vweird.f32 %v1798
    %vm1805 = vmor %vm1803, %vm1804
    %v1806 = vsel %vm1805, %v1798, %v1802
    %v1807 = vand.u32 2147483647, %v1797
    %vm1808 = vcmp.eq.f32.partialorder %v1807, 8.507059e+37
    %v1809 = vand.u32 %v1797, 2147483648
    %v1810 = vor.u32 1.1754944e-38, %v1809
    %v1811 = vsel %vm1808, %v1810, %v1806
    %v1812 = vmul.f32 1.0, %v1811
    %v1813 = vxor.u32 %v1791, 2147483648
    %v1814 = vmul.f32 %v1813, 1.442695
    %v1815 = vpow.pop %v1814
    %v1816 = vadd.f32 %v1815, 1.0
    %v1817 = vrcp.pop %v1816
    %v1818 = vmul.f32 %v1816, %v1817
    %v1819 = vsub.f32 1.0, %v1818
    %v1820 = vmul.f32 %v1817, %v1819
    %v1821 = vadd.f32 %v1817, %v1820
    %vm1822 = vweird.f32 %v1816
    %vm1823 = vweird.f32 %v1817
    %vm1824 = vmor %vm1822, %vm1823
    %v1825 = vsel %vm1824, %v1817, %v1821
    %v1826 = vand.u32 2147483647, %v1816
    %vm1827 = vcmp.eq.f32.partialorder %v1826, 8.507059e+37
    %v1828 = vand.u32 %v1816, 2147483648
    %v1829 = vor.u32 1.1754944e-38, %v1828
    %v1830 = vsel %vm1827, %v1829, %v1825
    %v1831 = vmul.f32 1.0, %v1830
    %v1832 = vtanh.pop %v1792
    %v1833 = vxor.u32 %v1793, 2147483648
    %v1834 = vmul.f32 %v1833, 1.442695
    %v1835 = vpow.pop %v1834
    %v1836 = vadd.f32 %v1835, 1.0
    %v1837 = vrcp.pop %v1836
    %v1838 = vmul.f32 %v1836, %v1837
    %v1839 = vsub.f32 1.0, %v1838
    %v1840 = vmul.f32 %v1837, %v1839
    %v1841 = vadd.f32 %v1837, %v1840
    %vm1842 = vweird.f32 %v1836
    %vm1843 = vweird.f32 %v1837
    %vm1844 = vmor %vm1842, %vm1843
    %v1845 = vsel %vm1844, %v1837, %v1841
    %v1846 = vand.u32 2147483647, %v1836
    %vm1847 = vcmp.eq.f32.partialorder %v1846, 8.507059e+37
    %v1848 = vand.u32 %v1836, 2147483648
    %v1849 = vor.u32 1.1754944e-38, %v1848
    %v1850 = vsel %vm1847, %v1849, %v1845
    %v1851 = vmul.f32 1.0, %v1850
    %v1852 = vld [vmem:[#allocation3] sm:$0xff]
    %v1853 = vmul.f32 %v1831, %v1852
    %v1854 = vmul.f32 %v1812, %v1832
    %v1855 = vadd.f32 %v1853, %v1854
    %v1856 = vtanh.pop %v1855
    %v1857 = vmul.f32 %v1851, %v1856
    %1858 = vst [vmem:[#allocation2] sm:$0xff] %v1857
    %1859 = vst [vmem:[#allocation3] sm:$0xff] %v1855
    %s1860 = scalar_lea.vmem [#allocation12], 56
    %1861 = vst [vmem:[%s1860] sm:$0xff] %v1857
    // Predicated region
    $region38: #{tpu_custom_call.1} parent=1 // pred_check
      %p1862 = pneg %p80
    $region39: #{tpu_custom_call.1} parent=1 // pred_check_branch
      %1864 = sbr.rel (%p1862) target = $region41
    $region40: #{tpu_custom_call.1} parent=1 // pred_region
      %v1865 = vld [vmem:[#allocation3] sm:$0xff]
      %1866 = vst [vmem:[#allocation13] sm:$0xff] %v1865
    $region41: #{tpu_custom_call.1} parent=1 // pred_fallthru
      _
    // Predicated region
    $region42: #{tpu_custom_call.1} parent=1 // pred_check
      _
    $region43: #{tpu_custom_call.1} parent=1 // pred_check_branch
      %1868 = sbr.rel (0) target = $region45
    $region44: #{tpu_custom_call.1} parent=1 // pred_region
      %1870 = vsyncadd [#allocation6], 0
      %s1871 = sshll.u32 [#allocation12], 4
      %s1872 = int_to_ptr.vmem [resolvable:$true] %s1871
      %s1873 = sshll.u32 %s4, 4
      %s1874 = int_to_ptr.hbm [resolvable:$true] %s1873
      %1879 = dma.vmem_to_hbm [thread:$0]  %s1872, 1024, %s1874, [#allocation6], 128, 128, 8
    $region45: #{tpu_custom_call.1} parent=1 // pred_fallthru
      _
    // Predicated region
    $region46: #{tpu_custom_call.1} parent=1 // pred_check
      _
    $region47: #{tpu_custom_call.1} parent=1 // pred_check_branch
      %1881 = sbr.rel (0) target = $region49
    $region48: #{tpu_custom_call.1} parent=1 // pred_region
      %1883 = vsyncadd [#allocation14], 0
      %s1885 = sshll.u32 [#allocation13], 4
      %s1886 = int_to_ptr.vmem [resolvable:$true] %s1885
      %s1887 = sshll.u32 %s5, 4
      %s1888 = int_to_ptr.hbm [resolvable:$true] %s1887
      %1890 = dma.vmem_to_hbm [thread:$0]  %s1886, 128, %s1888, [#allocation14]
    $region49: #{tpu_custom_call.1} parent=1 // pred_fallthru
      _
    // Predicated region
    $region50: #{tpu_custom_call.1} parent=1 // pred_check
      _
    $region51: #{tpu_custom_call.1} parent=1 // pred_check_branch
      %1892 = sbr.rel (0) target = $region53
    $region52: #{tpu_custom_call.1} parent=1 // pred_region
      %1894 = dma.done [#allocation6], 1024
    $region53: #{tpu_custom_call.1} parent=1 // pred_fallthru
      _
    // Predicated region
    $region54: #{tpu_custom_call.1} parent=1 // pred_check
      _
    $region55: #{tpu_custom_call.1} parent=1 // pred_check_branch
      %1896 = sbr.rel (0) target = $region57
    $region56: #{tpu_custom_call.1} parent=1 // pred_region
      %1898 = dma.done [#allocation14], 128
    $region57: #{tpu_custom_call.1} parent=1 // pred_fallthru
      _
    %1899 = vsyncpa [#allocation5], 1
    %1900 = vsyncpa [#allocation8], 1
    %1901 = vsyncpa [#allocation11], 1
    %1902 = vsyncpa [#allocation6], 1
    %1903 = vsyncpa [#allocation14], 1

// kernel: tpu_custom_call.1
$region0: #{tpu_custom_call.1}
  #allocation0 [shape = 'u32[]', space=smem, size = 0x4, offset = 0x4, fixed_abs, tag = 'smem constant byte address 0x4 - core index']
  #allocation1 [shape = 'u32[72,128]{1,0:T(1,128)}', space=vmem, size = 0x9000, scoped, tag = 'internal scratch']
  #allocation2 [shape = 'f32[8,128]{1,0:T(8,128)}', space=vmem, size = 0x1000, scoped, tag = 'scratch operand']
  #allocation3 [shape = 'f32[8,128]{1,0:T(8,128)}', space=vmem, size = 0x1000, scoped, tag = 'scratch operand']
  %s0 = inlined_call_operand.hbm [shape: f32[8,8,512], index: 0, kind: input, shape index: {}]
  %s1 = inlined_call_operand.hbm [shape: f32[1,8,128], index: 1, kind: input, shape index: {}]
  %s2 = inlined_call_operand.hbm [shape: f32[1,8,128], index: 2, kind: input, shape index: {}]
  %s3 = inlined_call_operand.hbm [shape: f32[128,512], index: 3, kind: input, shape index: {}]
  %s4 = inlined_call_operand.hbm [shape: f32[8,8,128], index: 4, kind: output, shape index: {0}]
  %s5 = inlined_call_operand.hbm [shape: f32[8,128], index: 5, kind: output, shape index: {1}]
  %6 = xla_tuple %s4, %s5
  %s7 = sld [smem:[#allocation0]]
  $region58: #{tpu_custom_call.1} parent=0
    _
  %s9 = ssub.s32 1, %s7
  %s10 = scalar_select 0, %s9, %s7
  $region1: #{tpu_custom_call.1} parent=0
    #allocation4 [shape = 'u8[131072]{0}', space=vmem, size = 0x20000, scoped, tag = 'input window, operand 0, single buffered']
    #allocation5 [shape = 's32[1]{0}', space=sflag, size = 0x4, scoped, tag = 'scoped memory for tpu_custom_call.1']
    #allocation6 [shape = 's32[1]{0}', space=sflag, size = 0x4, scoped, tag = 'scoped memory for tpu_custom_call.1']
    #allocation7 [shape = 'u8[4096]{0}', space=vmem, size = 0x1000, scoped, tag = 'input window, operand 1, single buffered']
    #allocation8 [shape = 's32[1]{0}', space=sflag, size = 0x4, scoped, tag = 'scoped memory for tpu_custom_call.1']
    #allocation9 [shape = 'u8[4096]{0}', space=vmem, size = 0x1000, scoped, tag = 'input window, operand 2, single buffered']
    #allocation10 [shape = 'u8[262144]{0}', space=vmem, size = 0x40000, scoped, tag = 'input window, operand 3, single buffered']
    #allocation11 [shape = 's32[1]{0}', space=sflag, size = 0x4, scoped, tag = 'scoped memory for tpu_custom_call.1']
    #allocation12 [shape = 'u8[32768]{0}', space=vmem, size = 0x8000, scoped, tag = 'output window, operand 0, single buffered']
    #allocation13 [shape = 'u8[4096]{0}', space=vmem, size = 0x1000, scoped, tag = 'output window, operand 1, single buffered']
    #allocation14 [shape = 's32[1]{0}', space=sflag, size = 0x4, scoped, tag = 'scoped memory for tpu_custom_call.1']
    %11 = vsyncpa [#allocation5], 0
    %12 = vsyncpa [#allocation8], 0
    %13 = vsyncpa [#allocation11], 0
    %14 = vsyncpa [#allocation6], 0
    %15 = vsyncpa [#allocation14], 0
    // Predicated region
    $region2: #{tpu_custom_call.1} parent=1 // pred_check
      _
    $region3: #{tpu_custom_call.1} parent=1 // pred_check_branch
      %17 = sbr.rel (0) target = $region5
    $region4: #{tpu_custom_call.1} parent=1 // pred_region
      %19 = vsyncadd [#allocation5], 0
      %s20 = sshll.u32 %s0, 4
      %s21 = int_to_ptr.hbm [resolvable:$true] %s20
      %s22 = sshll.u32 [#allocation4], 4
      %s23 = int_to_ptr.vmem [resolvable:$true] %s22
      %28 = dma.hbm_to_vmem [thread:$0]  %s21, 4096, %s23, [#allocation5], 512, 512, 32
    $region5: #{tpu_custom_call.1} parent=1 // pred_fallthru
      _
    // Predicated region
    $region6: #{tpu_custom_call.1} parent=1 // pred_check
      _
    $region7: #{tpu_custom_call.1} parent=1 // pred_check_branch
      %30 = sbr.rel (0) target = $region9
    $region8: #{tpu_custom_call.1} parent=1 // pred_region
      %32 = vsyncadd [#allocation8], 0
      %s34 = sshll.u32 %s1, 4
      %s35 = int_to_ptr.hbm [resolvable:$true] %s34
      %s36 = sshll.u32 [#allocation7], 4
      %s37 = int_to_ptr.vmem [resolvable:$true] %s36
      %39 = dma.hbm_to_vmem [thread:$0]  %s35, 128, %s37, [#allocation8]
    $region9: #{tpu_custom_call.1} parent=1 // pred_fallthru
      _
    // Predicated region
    $region10: #{tpu_custom_call.1} parent=1 // pred_check
      _
    $region11: #{tpu_custom_call.1} parent=1 // pred_check_branch
      %41 = sbr.rel (0) target = $region13
    $region12: #{tpu_custom_call.1} parent=1 // pred_region
      %43 = vsyncadd [#allocation8], 0
      %s45 = sshll.u32 %s2, 4
      %s46 = int_to_ptr.hbm [resolvable:$true] %s45
      %s47 = sshll.u32 [#allocation9], 4
      %s48 = int_to_ptr.vmem [resolvable:$true] %s47
      %50 = dma.hbm_to_vmem [thread:$0]  %s46, 128, %s48, [#allocation8]
    $region13: #{tpu_custom_call.1} parent=1 // pred_fallthru
      _
    // Predicated region
    $region14: #{tpu_custom_call.1} parent=1 // pred_check
      _
    $region15: #{tpu_custom_call.1} parent=1 // pred_check_branch
      %52 = sbr.rel (0) target = $region17
    $region16: #{tpu_custom_call.1} parent=1 // pred_region
      %54 = vsyncadd [#allocation11], 0
      %s55 = sshll.u32 %s3, 4
      %s56 = int_to_ptr.hbm [resolvable:$true] %s55
      %s57 = sshll.u32 [#allocation10], 4
      %s58 = int_to_ptr.vmem [resolvable:$true] %s57
      %63 = dma.hbm_to_vmem [thread:$0]  %s56, 8192, %s58, [#allocation11], 512, 512, 32
    $region17: #{tpu_custom_call.1} parent=1 // pred_fallthru
      _
    // Predicated region
    $region18: #{tpu_custom_call.1} parent=1 // pred_check
      _
    $region19: #{tpu_custom_call.1} parent=1 // pred_check_branch
      %65 = sbr.rel (0) target = $region21
    $region20: #{tpu_custom_call.1} parent=1 // pred_region
      %67 = dma.done [#allocation5], 4096
    $region21: #{tpu_custom_call.1} parent=1 // pred_fallthru
      _
    // Predicated region
    $region22: #{tpu_custom_call.1} parent=1 // pred_check
      _
    $region23: #{tpu_custom_call.1} parent=1 // pred_check_branch
      %69 = sbr.rel (0) target = $region25
    $region24: #{tpu_custom_call.1} parent=1 // pred_region
      %71 = dma.done [#allocation8], 128
    $region25: #{tpu_custom_call.1} parent=1 // pred_fallthru
      _
    // Predicated region
    $region26: #{tpu_custom_call.1} parent=1 // pred_check
      _
    $region27: #{tpu_custom_call.1} parent=1 // pred_check_branch
      %73 = sbr.rel (0) target = $region29
    $region28: #{tpu_custom_call.1} parent=1 // pred_region
      %75 = dma.done [#allocation8], 128
    $region29: #{tpu_custom_call.1} parent=1 // pred_fallthru
      _
    // Predicated region
    $region30: #{tpu_custom_call.1} parent=1 // pred_check
      _
    $region31: #{tpu_custom_call.1} parent=1 // pred_check_branch
      %77 = sbr.rel (0) target = $region33
    $region32: #{tpu_custom_call.1} parent=1 // pred_region
      %79 = dma.done [#allocation11], 8192
    $region33: #{tpu_custom_call.1} parent=1 // pred_fallthru
      _
    %p80 = scmp.eq.s32.totalorder 0, 0
    // Predicated region
    $region34: #{tpu_custom_call.1} parent=1 // pred_check
      %p81 = pneg %p80
    $region35: #{tpu_custom_call.1} parent=1 // pred_check_branch
      %83 = sbr.rel (%p81) target = $region37
    $region36: #{tpu_custom_call.1} parent=1 // pred_region
      %v84 = vld [vmem:[#allocation7] sm:$0xff]
      %85 = vst [vmem:[#allocation2] sm:$0xff] %v84
      %v86 = vld [vmem:[#allocation9] sm:$0xff]
      %87 = vst [vmem:[#allocation3] sm:$0xff] %v86
    $region37: #{tpu_custom_call.1} parent=1 // pred_fallthru
      _
    %v88 = vld [vmem:[#allocation4] sm:$0xff]
    %v89 = vld [vmem:[#allocation4 + $0x8] sm:$0xff]
    %v90 = vld [vmem:[#allocation4 + $0x10] sm:$0xff]
    %v91 = vld [vmem:[#allocation4 + $0x18] sm:$0xff]
    %v92 = vld [vmem:[#allocation2] sm:$0xff]
    %v93 = vld [vmem:[#allocation10] sm:$0xff]
    %v94 = vld [vmem:[#allocation10 + $0x8] sm:$0xff]
    %v95 = vld [vmem:[#allocation10 + $0x10] sm:$0xff]
    %v96 = vld [vmem:[#allocation10 + $0x18] sm:$0xff]
    %v97 = vld [vmem:[#allocation10 + $0x20] sm:$0xff]
    %v98 = vld [vmem:[#allocation10 + $0x28] sm:$0xff]
    %v99 = vld [vmem:[#allocation10 + $0x30] sm:$0xff]
    %v100 = vld [vmem:[#allocation10 + $0x38] sm:$0xff]
    %v101 = vld [vmem:[#allocation10 + $0x40] sm:$0xff]
    %v102 = vld [vmem:[#allocation10 + $0x48] sm:$0xff]
    %v103 = vld [vmem:[#allocation10 + $0x50] sm:$0xff]
    %v104 = vld [vmem:[#allocation10 + $0x58] sm:$0xff]
    %v105 = vld [vmem:[#allocation10 + $0x60] sm:$0xff]
    %v106 = vld [vmem:[#allocation10 + $0x68] sm:$0xff]
    %v107 = vld [vmem:[#allocation10 + $0x70] sm:$0xff]
    %v108 = vld [vmem:[#allocation10 + $0x78] sm:$0xff]
    %v109 = vld [vmem:[#allocation10 + $0x80] sm:$0xff]
    %v110 = vld [vmem:[#allocation10 + $0x88] sm:$0xff]
    %v111 = vld [vmem:[#allocation10 + $0x90] sm:$0xff]
    %v112 = vld [vmem:[#allocation10 + $0x98] sm:$0xff]
    %v113 = vld [vmem:[#allocation10 + $0xa0] sm:$0xff]
    %v114 = vld [vmem:[#allocation10 + $0xa8] sm:$0xff]
    %v115 = vld [vmem:[#allocation10 + $0xb0] sm:$0xff]
    %v116 = vld [vmem:[#allocation10 + $0xb8] sm:$0xff]
    %v117 = vld [vmem:[#allocation10 + $0xc0] sm:$0xff]
    %v118 = vld [vmem:[#allocation10 + $0xc8] sm:$0xff]
    %v119 = vld [vmem:[#allocation10 + $0xd0] sm:$0xff]
    %v120 = vld [vmem:[#allocation10 + $0xd8] sm:$0xff]
    %v121 = vld [vmem:[#allocation10 + $0xe0] sm:$0xff]
    %v122 = vld [vmem:[#allocation10 + $0xe8] sm:$0xff]
    %v123 = vld [vmem:[#allocation10 + $0xf0] sm:$0xff]
    %v124 = vld [vmem:[#allocation10 + $0xf8] sm:$0xff]
    %v125 = vld [vmem:[#allocation10 + $0x100] sm:$0xff]
    %v126 = vld [vmem:[#allocation10 + $0x108] sm:$0xff]
    %v127 = vld [vmem:[#allocation10 + $0x110] sm:$0xff]
    %v128 = vld [vmem:[#allocation10 + $0x118] sm:$0xff]
    %v129 = vld [vmem:[#allocation10 + $0x120] sm:$0xff]
    %v130 = vld [vmem:[#allocation10 + $0x128] sm:$0xff]
    %v131 = vld [vmem:[#allocation10 + $0x130] sm:$0xff]
    %v132 = vld [vmem:[#allocation10 + $0x138] sm:$0xff]
    %v133 = vld [vmem:[#allocation10 + $0x140] sm:$0xff]
    %v134 = vld [vmem:[#allocation10 + $0x148] sm:$0xff]
    %v135 = vld [vmem:[#allocation10 + $0x150] sm:$0xff]
    %v136 = vld [vmem:[#allocation10 + $0x158] sm:$0xff]
    %v137 = vld [vmem:[#allocation10 + $0x160] sm:$0xff]
    %v138 = vld [vmem:[#allocation10 + $0x168] sm:$0xff]
    %v139 = vld [vmem:[#allocation10 + $0x170] sm:$0xff]
    %v140 = vld [vmem:[#allocation10 + $0x178] sm:$0xff]
    %v141 = vld [vmem:[#allocation10 + $0x180] sm:$0xff]
    %v142 = vld [vmem:[#allocation10 + $0x188] sm:$0xff]
    %v143 = vld [vmem:[#allocation10 + $0x190] sm:$0xff]
    %v144 = vld [vmem:[#allocation10 + $0x198] sm:$0xff]
    %v145 = vld [vmem:[#allocation10 + $0x1a0] sm:$0xff]
    %v146 = vld [vmem:[#allocation10 + $0x1a8] sm:$0xff]
    %v147 = vld [vmem:[#allocation10 + $0x1b0] sm:$0xff]
    %v148 = vld [vmem:[#allocation10 + $0x1b8] sm:$0xff]
    %v149 = vld [vmem:[#allocation10 + $0x1c0] sm:$0xff]
    %v150 = vld [vmem:[#allocation10 + $0x1c8] sm:$0xff]
    %v151 = vld [vmem:[#allocation10 + $0x1d0] sm:$0xff]
    %v152 = vld [vmem:[#allocation10 + $0x1d8] sm:$0xff]
    %v153 = vld [vmem:[#allocation10 + $0x1e0] sm:$0xff]
    %v154 = vld [vmem:[#allocation10 + $0x1e8] sm:$0xff]
    %v155 = vld [vmem:[#allocation10 + $0x1f0] sm:$0xff]
    %v156 = vld [vmem:[#allocation10 + $0x1f8] sm:$0xff]
    %157 = vmatpush.msra.mxu0 %v153
    %158 = vmatpush.msra.mxu0 %v149
    %159 = vmatpush.msra.mxu0 %v145
    %160 = vmatpush.msra.mxu0 %v141
    %161 = vmatpush.msra.mxu0 %v137
    %162 = vmatpush.msra.mxu0 %v133
    %163 = vmatpush.msra.mxu0 %v129
    %164 = vmatpush.msra.mxu0 %v125
    %165 = vmatpush.msra.mxu0 %v121
    %166 = vmatpush.msra.mxu0 %v117
    %167 = vmatpush.msra.mxu0 %v113
    %168 = vmatpush.msra.mxu0 %v109
    %169 = vmatpush.msra.mxu0 %v105
    %170 = vmatpush.msra.mxu0 %v101
    %171 = vmatpush.msra.mxu0 %v97
    %172 = vmatpush.msra.mxu0 %v93
    %173 = vmatmul.f32.gmra.mxu0 %v92
    %v174 = vpop.f32.mrf.mxu0
    %v175 = vadd.f32 0.0, %v174
    %176 = vdwg.mxu0
    %177 = vmatpush.msra.mxu0 %v154
    %178 = vmatpush.msra.mxu0 %v150
    %179 = vmatpush.msra.mxu0 %v146
    %180 = vmatpush.msra.mxu0 %v142
    %181 = vmatpush.msra.mxu0 %v138
    %182 = vmatpush.msra.mxu0 %v134
    %183 = vmatpush.msra.mxu0 %v130
    %184 = vmatpush.msra.mxu0 %v126
    %185 = vmatpush.msra.mxu0 %v122
    %186 = vmatpush.msra.mxu0 %v118
    %187 = vmatpush.msra.mxu0 %v114
    %188 = vmatpush.msra.mxu0 %v110
    %189 = vmatpush.msra.mxu0 %v106
    %190 = vmatpush.msra.mxu0 %v102
    %191 = vmatpush.msra.mxu0 %v98
    %192 = vmatpush.msra.mxu0 %v94
    %193 = vmatmul.f32.gmra.mxu0 %v92
    %v194 = vpop.f32.mrf.mxu0
    %v195 = vadd.f32 0.0, %v194
    %196 = vdwg.mxu0
    %197 = vmatpush.msra.mxu0 %v155
    %198 = vmatpush.msra.mxu0 %v151
    %199 = vmatpush.msra.mxu0 %v147
    %200 = vmatpush.msra.mxu0 %v143
    %201 = vmatpush.msra.mxu0 %v139
    %202 = vmatpush.msra.mxu0 %v135
    %203 = vmatpush.msra.mxu0 %v131
    %204 = vmatpush.msra.mxu0 %v127
    %205 = vmatpush.msra.mxu0 %v123
    %206 = vmatpush.msra.mxu0 %v119
    %207 = vmatpush.msra.mxu0 %v115
    %208 = vmatpush.msra.mxu0 %v111
    %209 = vmatpush.msra.mxu0 %v107
    %210 = vmatpush.msra.mxu0 %v103
    %211 = vmatpush.msra.mxu0 %v99
    %212 = vmatpush.msra.mxu0 %v95
    %213 = vmatmul.f32.gmra.mxu0 %v92
    %v214 = vpop.f32.mrf.mxu0
    %v215 = vadd.f32 0.0, %v214
    %216 = vdwg.mxu0
    %217 = vmatpush.msra.mxu0 %v156
    %218 = vmatpush.msra.mxu0 %v152
    %219 = vmatpush.msra.mxu0 %v148
    %220 = vmatpush.msra.mxu0 %v144
    %221 = vmatpush.msra.mxu0 %v140
    %222 = vmatpush.msra.mxu0 %v136
    %223 = vmatpush.msra.mxu0 %v132
    %224 = vmatpush.msra.mxu0 %v128
    %225 = vmatpush.msra.mxu0 %v124
    %226 = vmatpush.msra.mxu0 %v120
    %227 = vmatpush.msra.mxu0 %v116
    %228 = vmatpush.msra.mxu0 %v112
    %229 = vmatpush.msra.mxu0 %v108
    %230 = vmatpush.msra.mxu0 %v104
    %231 = vmatpush.msra.mxu0 %v100
    %232 = vmatpush.msra.mxu0 %v96
    %233 = vmatmul.f32.gmra.mxu0 %v92
    %v234 = vpop.f32.mrf.mxu0
    %v235 = vadd.f32 0.0, %v234
    %236 = vdwg.mxu0
    %v237 = vadd.f32 %v88, %v175
    %v238 = vadd.f32 %v89, %v195
    %v239 = vadd.f32 %v90, %v215
    %v240 = vadd.f32 %v91, %v235
    %v241 = vxor.u32 %v237, 2147483648
    %v242 = vmul.f32 %v241, 1.442695
    %v243 = vpow.pop %v242
    %v244 = vadd.f32 %v243, 1.0
    %v245 = vrcp.pop %v244
    %v246 = vmul.f32 %v244, %v245
    %v247 = vsub.f32 1.0, %v246
    %v248 = vmul.f32 %v245, %v247
    %v249 = vadd.f32 %v245, %v248
    %vm250 = vweird.f32 %v244
    %vm251 = vweird.f32 %v245
    %vm252 = vmor %vm250, %vm251
    %v253 = vsel %vm252, %v245, %v249
    %v254 = vand.u32 2147483647, %v244
    %vm255 = vcmp.eq.f32.partialorder %v254, 8.507059e+37
    %v256 = vand.u32 %v244, 2147483648
    %v257 = vor.u32 1.1754944e-38, %v256
    %v258 = vsel %vm255, %v257, %v253
    %v259 = vmul.f32 1.0, %v258
    %v260 = vxor.u32 %v238, 2147483648
    %v261 = vmul.f32 %v260, 1.442695
    %v262 = vpow.pop %v261
    %v263 = vadd.f32 %v262, 1.0
    %v264 = vrcp.pop %v263
    %v265 = vmul.f32 %v263, %v264
    %v266 = vsub.f32 1.0, %v265
    %v267 = vmul.f32 %v264, %v266
    %v268 = vadd.f32 %v264, %v267
    %vm269 = vweird.f32 %v263
    %vm270 = vweird.f32 %v264
    %vm271 = vmor %vm269, %vm270
    %v272 = vsel %vm271, %v264, %v268
    %v273 = vand.u32 2147483647, %v263
    %vm274 = vcmp.eq.f32.partialorder %v273, 8.507059e+37
    %v275 = vand.u32 %v263, 2147483648
    %v276 = vor.u32 1.1754944e-38, %v275
    %v277 = vsel %vm274, %v276, %v272
    %v278 = vmul.f32 1.0, %v277
    %v279 = vtanh.pop %v239
    %v280 = vxor.u32 %v240, 2147483648
    %v281 = vmul.f32 %v280, 1.442695
    %v282 = vpow.pop %v281
    %v283 = vadd.f32 %v282, 1.0
    %v284 = vrcp.pop %v283
    %v285 = vmul.f32 %v283, %v284
    %v286 = vsub.f32 1.0, %v285
    %v287 = vmul.f32 %v284, %v286
    %v288 = vadd.f32 %v284, %v287
    %vm289 = vweird.f32 %v283
    %vm290 = vweird.f32 %v284
    %vm291 = vmor %vm289, %vm290
    %v292 = vsel %vm291, %v284, %v288
    %v293 = vand.u32 2147483647, %v283
    %vm294 = vcmp.eq.f32.partialorder %v293, 8.507059e+37
    %v295 = vand.u32 %v283, 2147483648
    %v296 = vor.u32 1.1754944e-38, %v295
    %v297 = vsel %vm294, %v296, %v292
    %v298 = vmul.f32 1.0, %v297
    %v299 = vld [vmem:[#allocation3] sm:$0xff]
    %v300 = vmul.f32 %v278, %v299
    %v301 = vmul.f32 %v259, %v279
    %v302 = vadd.f32 %v300, %v301
    %v303 = vtanh.pop %v302
    %v304 = vmul.f32 %v298, %v303
    %305 = vst [vmem:[#allocation2] sm:$0xff] %v304
    %306 = vst [vmem:[#allocation3] sm:$0xff] %v302
    %307 = vst [vmem:[#allocation12] sm:$0xff] %v304
    %s308 = scalar_lea.vmem [#allocation4], 32
    %v309 = vld [vmem:[%s308] sm:$0xff]
    %v310 = vld [vmem:[%s308 + $0x8] sm:$0xff]
    %v311 = vld [vmem:[%s308 + $0x10] sm:$0xff]
    %v312 = vld [vmem:[%s308 + $0x18] sm:$0xff]
    %v313 = vld [vmem:[#allocation2] sm:$0xff]
    %v314 = vld [vmem:[#allocation10] sm:$0xff]
    %v315 = vld [vmem:[#allocation10 + $0x8] sm:$0xff]
    %v316 = vld [vmem:[#allocation10 + $0x10] sm:$0xff]
    %v317 = vld [vmem:[#allocation10 + $0x18] sm:$0xff]
    %v318 = vld [vmem:[#allocation10 + $0x20] sm:$0xff]
    %v319 = vld [vmem:[#allocation10 + $0x28] sm:$0xff]
    %v320 = vld [vmem:[#allocation10 + $0x30] sm:$0xff]
    %v321 = vld [vmem:[#allocation10 + $0x38] sm:$0xff]
    %v322 = vld [vmem:[#allocation10 + $0x40] sm:$0xff]
    %v323 = vld [vmem:[#allocation10 + $0x48] sm:$0xff]
    %v324 = vld [vmem:[#allocation10 + $0x50] sm:$0xff]
    %v325 = vld [vmem:[#allocation10 + $0x58] sm:$0xff]
    %v326 = vld [vmem:[#allocation10 + $0x60] sm:$0xff]
    %v327 = vld [vmem:[#allocation10 + $0x68] sm:$0xff]
    %v328 = vld [vmem:[#allocation10 + $0x70] sm:$0xff]
    %v329 = vld [vmem:[#allocation10 + $0x78] sm:$0xff]
    %v330 = vld [vmem:[#allocation10 + $0x80] sm:$0xff]
    %v331 = vld [vmem:[#allocation10 + $0x88] sm:$0xff]
    %v332 = vld [vmem:[#allocation10 + $0x90] sm:$0xff]
    %v333 = vld [vmem:[#allocation10 + $0x98] sm:$0xff]
    %v334 = vld [vmem:[#allocation10 + $0xa0] sm:$0xff]
    %v335 = vld [vmem:[#allocation10 + $0xa8] sm:$0xff]
    %v336 = vld [vmem:[#allocation10 + $0xb0] sm:$0xff]
    %v337 = vld [vmem:[#allocation10 + $0xb8] sm:$0xff]
    %v338 = vld [vmem:[#allocation10 + $0xc0] sm:$0xff]
    %v339 = vld [vmem:[#allocation10 + $0xc8] sm:$0xff]
    %v340 = vld [vmem:[#allocation10 + $0xd0] sm:$0xff]
    %v341 = vld [vmem:[#allocation10 + $0xd8] sm:$0xff]
    %v342 = vld [vmem:[#allocation10 + $0xe0] sm:$0xff]
    %v343 = vld [vmem:[#allocation10 + $0xe8] sm:$0xff]
    %v344 = vld [vmem:[#allocation10 + $0xf0] sm:$0xff]
    %v345 = vld [vmem:[#allocation10 + $0xf8] sm:$0xff]
    %v346 = vld [vmem:[#allocation10 + $0x100] sm:$0xff]
    %v347 = vld [vmem:[#allocation10 + $0x108] sm:$0xff]
    %v348 = vld [vmem:[#allocation10 + $0x110] sm:$0xff]
    %v349 = vld [vmem:[#allocation10 + $0x118] sm:$0xff]
    %v350 = vld [vmem:[#allocation10 + $0x120] sm:$0xff]
    %v351 = vld [vmem:[#allocation10 + $0x128] sm:$0xff]
    %v352 = vld [vmem:[#allocation10 + $0x130] sm:$0xff]
    %v353 = vld [vmem:[#allocation10 + $0x138] sm:$0xff]
    %v354 = vld [vmem:[#allocation10 + $0x140] sm:$0xff]
    %v355 = vld [vmem:[#allocation10 + $0x148] sm:$0xff]
    %v356 = vld [vmem:[#allocation10 + $0x150] sm:$0xff]
    %v357 = vld [vmem:[#allocation10 + $0x158] sm:$0xff]
    %v358 = vld [vmem:[#allocation10 + $0x160] sm:$0xff]
    %v359 = vld [vmem:[#allocation10 + $0x168] sm:$0xff]
    %v360 = vld [vmem:[#allocation10 + $0x170] sm:$0xff]
    %v361 = vld [vmem:[#allocation10 + $0x178] sm:$0xff]
    %v362 = vld [vmem:[#allocation10 + $0x180] sm:$0xff]
    %v363 = vld [vmem:[#allocation10 + $0x188] sm:$0xff]
    %v364 = vld [vmem:[#allocation10 + $0x190] sm:$0xff]
    %v365 = vld [vmem:[#allocation10 + $0x198] sm:$0xff]
    %v366 = vld [vmem:[#allocation10 + $0x1a0] sm:$0xff]
    %v367 = vld [vmem:[#allocation10 + $0x1a8] sm:$0xff]
    %v368 = vld [vmem:[#allocation10 + $0x1b0] sm:$0xff]
    %v369 = vld [vmem:[#allocation10 + $0x1b8] sm:$0xff]
    %v370 = vld [vmem:[#allocation10 + $0x1c0] sm:$0xff]
    %v371 = vld [vmem:[#allocation10 + $0x1c8] sm:$0xff]
    %v372 = vld [vmem:[#allocation10 + $0x1d0] sm:$0xff]
    %v373 = vld [vmem:[#allocation10 + $0x1d8] sm:$0xff]
    %v374 = vld [vmem:[#allocation10 + $0x1e0] sm:$0xff]
    %v375 = vld [vmem:[#allocation10 + $0x1e8] sm:$0xff]
    %v376 = vld [vmem:[#allocation10 + $0x1f0] sm:$0xff]
    %v377 = vld [vmem:[#allocation10 + $0x1f8] sm:$0xff]
    %378 = vmatpush.msra.mxu0 %v374
    %379 = vmatpush.msra.mxu0 %v370
    %380 = vmatpush.msra.mxu0 %v366
    %381 = vmatpush.msra.mxu0 %v362
    %382 = vmatpush.msra.mxu0 %v358
    %383 = vmatpush.msra.mxu0 %v354
    %384 = vmatpush.msra.mxu0 %v350
    %385 = vmatpush.msra.mxu0 %v346
    %386 = vmatpush.msra.mxu0 %v342
    %387 = vmatpush.msra.mxu0 %v338
    %388 = vmatpush.msra.mxu0 %v334
    %389 = vmatpush.msra.mxu0 %v330
    %390 = vmatpush.msra.mxu0 %v326
    %391 = vmatpush.msra.mxu0 %v322
    %392 = vmatpush.msra.mxu0 %v318
    %393 = vmatpush.msra.mxu0 %v314
    %394 = vmatmul.f32.gmra.mxu0 %v313
    %v395 = vpop.f32.mrf.mxu0
    %v396 = vadd.f32 0.0, %v395
    %397 = vdwg.mxu0
    %398 = vmatpush.msra.mxu0 %v375
    %399 = vmatpush.msra.mxu0 %v371
    %400 = vmatpush.msra.mxu0 %v367
    %401 = vmatpush.msra.mxu0 %v363
    %402 = vmatpush.msra.mxu0 %v359
    %403 = vmatpush.msra.mxu0 %v355
    %404 = vmatpush.msra.mxu0 %v351
    %405 = vmatpush.msra.mxu0 %v347
    %406 = vmatpush.msra.mxu0 %v343
    %407 = vmatpush.msra.mxu0 %v339
    %408 = vmatpush.msra.mxu0 %v335
    %409 = vmatpush.msra.mxu0 %v331
    %410 = vmatpush.msra.mxu0 %v327
    %411 = vmatpush.msra.mxu0 %v323
    %412 = vmatpush.msra.mxu0 %v319
    %413 = vmatpush.msra.mxu0 %v315
    %414 = vmatmul.f32.gmra.mxu0 %v313
    %v415 = vpop.f32.mrf.mxu0
    %v416 = vadd.f32 0.0, %v415
    %417 = vdwg.mxu0
    %418 = vmatpush.msra.mxu0 %v376
    %419 = vmatpush.msra.mxu0 %v372
    %420 = vmatpush.msra.mxu0 %v368
    %421 = vmatpush.msra.mxu0 %v364
    %422 = vmatpush.msra.mxu0 %v360
    %423 = vmatpush.msra.mxu0 %v356
    %424 = vmatpush.msra.mxu0 %v352
    %425 = vmatpush.msra.mxu0 %v348
    %426 = vmatpush.msra.mxu0 %v344
    %427 = vmatpush.msra.mxu0 %v340
    %428 = vmatpush.msra.mxu0 %v336
    %429 = vmatpush.msra.mxu0 %v332
    %430 = vmatpush.msra.mxu0 %v328
    %431 = vmatpush.msra.mxu0 %v324
    %432 = vmatpush.msra.mxu0 %v320
    %433 = vmatpush.msra.mxu0 %v316
    %434 = vmatmul.f32.gmra.mxu0 %v313
    %v435 = vpop.f32.mrf.mxu0
    %v436 = vadd.f32 0.0, %v435
    %437 = vdwg.mxu0
    %438 = vmatpush.msra.mxu0 %v377
    %439 = vmatpush.msra.mxu0 %v373
    %440 = vmatpush.msra.mxu0 %v369
    %441 = vmatpush.msra.mxu0 %v365
    %442 = vmatpush.msra.mxu0 %v361
    %443 = vmatpush.msra.mxu0 %v357
    %444 = vmatpush.msra.mxu0 %v353
    %445 = vmatpush.msra.mxu0 %v349
    %446 = vmatpush.msra.mxu0 %v345
    %447 = vmatpush.msra.mxu0 %v341
    %448 = vmatpush.msra.mxu0 %v337
    %449 = vmatpush.msra.mxu0 %v333
    %450 = vmatpush.msra.mxu0 %v329
    %451 = vmatpush.msra.mxu0 %v325
    %452 = vmatpush.msra.mxu0 %v321
    %453 = vmatpush.msra.mxu0 %v317
    %454 = vmatmul.f32.gmra.mxu0 %v313
    %v455 = vpop.f32.mrf.mxu0
    %v456 = vadd.f32 0.0, %v455
    %457 = vdwg.mxu0
    %v458 = vadd.f32 %v309, %v396
    %v459 = vadd.f32 %v310, %v416
    %v460 = vadd.f32 %v311, %v436
    %v461 = vadd.f32 %v312, %v456
    %v462 = vxor.u32 %v458, 2147483648
    %v463 = vmul.f32 %v462, 1.442695
    %v464 = vpow.pop %v463
    %v465 = vadd.f32 %v464, 1.0
    %v466 = vrcp.pop %v465
    %v467 = vmul.f32 %v465, %v466
    %v468 = vsub.f32 1.0, %v467
    %v469 = vmul.f32 %v466, %v468
    %v470 = vadd.f32 %v466, %v469
    %vm471 = vweird.f32 %v465
    %vm472 = vweird.f32 %v466
    %vm473 = vmor %vm471, %vm472
    %v474 = vsel %vm473, %v466, %v470
    %v475 = vand.u32 2147483647, %v465
    %vm476 = vcmp.eq.f32.partialorder %v475, 8.507059e+37
    %v477 = vand.u32 %v465, 2147483648
    %v478 = vor.u32 1.1754944e-38, %v477
    %v479 = vsel %vm476, %v478, %v474
    %v480 = vmul.f32 1.0, %v479
    %v481 = vxor.u32 %v459, 2147483648
    %v482 = vmul.f32 %v481, 1.442695
    %v483 = vpow.pop %v482
    %v484 = vadd.f32 %v483, 1.0
    %v485 = vrcp.pop %v484
    %v486 = vmul.f32 %v484, %v485
    %v487 = vsub.f32 1.0, %v486
    %v488 = vmul.f32 %v485, %v487
    %v489 = vadd.f32 %v485, %v488
    %vm490 = vweird.f32 %v484
    %vm491 = vweird.f32 %v485
    %vm492 = vmor %vm490, %vm491
    %v493 = vsel %vm492, %v485, %v489
    %v494 = vand.u32 2147483647, %v484
    %vm495 = vcmp.eq.f32.partialorder %v494, 8.507059e+37
    %v496 = vand.u32 %v484, 2147483648
    %v497 = vor.u32 1.1754944e-38, %v496
    %v498 = vsel %vm495, %v497, %v493
    %v499 = vmul.f32 1.0, %v498
    %v500 = vtanh.pop %v460
    %v501 = vxor.u32 %v461, 2147483648
    %v502 = vmul.f32 %v501, 1.442695
    %v503 = vpow.pop %v502
    %v504 = vadd.f32 %v503, 1.0
    %v505 = vrcp.pop %v504
    %v506 = vmul.f32 %v504, %v505
    %v507 = vsub.f32 1.0, %v506
    %v508 = vmul.f32 %v505, %v507
    %v509 = vadd.f32 %v505, %v508
    %vm510 = vweird.f32 %v504
    %vm511 = vweird.f32 %v505
    %vm512 = vmor %vm510, %vm511
    %v513 = vsel %vm512, %v505, %v509
    %v514 = vand.u32 2147483647, %v504
    %vm515 = vcmp.eq.f32.partialorder %v514, 8.507059e+37
    %v516 = vand.u32 %v504, 2147483648
    %v517 = vor.u32 1.1754944e-38, %v516
    %v518 = vsel %vm515, %v517, %v513
    %v519 = vmul.f32 1.0, %v518
    %v520 = vld [vmem:[#allocation3] sm:$0xff]
    %v521 = vmul.f32 %v499, %v520
    %v522 = vmul.f32 %v480, %v500
    %v523 = vadd.f32 %v521, %v522
    %v524 = vtanh.pop %v523
    %v525 = vmul.f32 %v519, %v524
    %526 = vst [vmem:[#allocation2] sm:$0xff] %v525
    %527 = vst [vmem:[#allocation3] sm:$0xff] %v523
    %s528 = scalar_lea.vmem [#allocation12], 8
    %529 = vst [vmem:[%s528] sm:$0xff] %v525
    %s530 = scalar_lea.vmem [#allocation4], 64
    %v531 = vld [vmem:[%s530] sm:$0xff]
    %v532 = vld [vmem:[%s530 + $0x8] sm:$0xff]
    %v533 = vld [vmem:[%s530 + $0x10] sm:$0xff]
    %v534 = vld [vmem:[%s530 + $0x18] sm:$0xff]
    %v535 = vld [vmem:[#allocation2] sm:$0xff]
    %v536 = vld [vmem:[#allocation10] sm:$0xff]
    %v537 = vld [vmem:[#allocation10 + $0x8] sm:$0xff]
    %v538 = vld [vmem:[#allocation10 + $0x10] sm:$0xff]
    %v539 = vld [vmem:[#allocation10 + $0x18] sm:$0xff]
    %v540 = vld [vmem:[#allocation10 + $0x20] sm:$0xff]
    %v541 = vld [vmem:[#allocation10 + $0x28] sm:$0xff]
    %v542 = vld [vmem:[#allocation10 + $0x30] sm:$0xff]
    %v543 = vld [vmem:[#allocation10 + $0x38] sm:$0xff]
    %v544 = vld [vmem:[#allocation10 + $0x40] sm:$0xff]
    %v545 = vld [vmem:[#allocation10 + $0x48] sm:$0xff]
    %v546 = vld [vmem:[#allocation10 + $0x50] sm:$0xff]
    %v547 = vld [vmem:[#allocation10 + $0x58] sm:$0xff]
    %v548 = vld [vmem:[#allocation10 + $0x60] sm:$0xff]
    %v549 = vld [vmem:[#allocation10 + $0x68] sm:$0xff]
    %v550 = vld [vmem:[#allocation10 + $0x70] sm:$0xff]
    %v551 = vld [vmem:[#allocation10 + $0x78] sm:$0xff]
    %v552 = vld [vmem:[#allocation10 + $0x80] sm:$0xff]
    %v553 = vld [vmem:[#allocation10 + $0x88] sm:$0xff]
    %v554 = vld [vmem:[#allocation10 + $0x90] sm:$0xff]
    %v555 = vld [vmem:[#allocation10 + $0x98] sm:$0xff]
    %v556 = vld [vmem:[#allocation10 + $0xa0] sm:$0xff]
    %v557 = vld [vmem:[#allocation10 + $0xa8] sm:$0xff]
    %v558 = vld [vmem:[#allocation10 + $0xb0] sm:$0xff]
    %v559 = vld [vmem:[#allocation10 + $0xb8] sm:$0xff]
    %v560 = vld [vmem:[#allocation10 + $0xc0] sm:$0xff]
    %v561 = vld [vmem:[#allocation10 + $0xc8] sm:$0xff]
    %v562 = vld [vmem:[#allocation10 + $0xd0] sm:$0xff]
    %v563 = vld [vmem:[#allocation10 + $0xd8] sm:$0xff]
    %v564 = vld [vmem:[#allocation10 + $0xe0] sm:$0xff]
    %v565 = vld [vmem:[#allocation10 + $0xe8] sm:$0xff]
    %v566 = vld [vmem:[#allocation10 + $0xf0] sm:$0xff]
    %v567 = vld [vmem:[#allocation10 + $0xf8] sm:$0xff]
    %v568 = vld [vmem:[#allocation10 + $0x100] sm:$0xff]
    %v569 = vld [vmem:[#allocation10 + $0x108] sm:$0xff]
    %v570 = vld [vmem:[#allocation10 + $0x110] sm:$0xff]
    %v571 = vld [vmem:[#allocation10 + $0x118] sm:$0xff]
    %v572 = vld [vmem:[#allocation10 + $0x120] sm:$0xff]
    %v573 = vld [vmem:[#allocation10 + $0x128] sm:$0xff]
    %v574 = vld [vmem:[#allocation10 + $0x130] sm:$0xff]
    %v575 = vld [vmem:[#allocation10 + $0x138] sm:$0xff]
    %v576 = vld [vmem:[#allocation10 + $0x140] sm:$0xff]
    %v577 = vld [vmem:[#allocation10 + $0x148] sm:$0xff]
    %v578 = vld [vmem:[#allocation10 + $0x150] sm:$0xff]
    %v579 = vld [vmem:[#allocation10 + $0x158] sm:$0xff]
    %v580 = vld [vmem:[#allocation10 + $0x160] sm:$0xff]
    %v581 = vld [vmem:[#allocation10 + $0x168] sm:$0xff]
    %v582 = vld [vmem:[#allocation10 + $0x170] sm:$0xff]
    %v583 = vld [vmem:[#allocation10 + $0x178] sm:$0xff]
    %v584 = vld [vmem:[#allocation10 + $0x180] sm:$0xff]
    %v585 = vld [vmem:[#allocation10 + $0x188] sm:$0xff]
    %v586 = vld [vmem:[#allocation10 + $0x190] sm:$0xff]
    %v587 = vld [vmem:[#allocation10 + $0x198] sm:$0xff]
    %v588 = vld [vmem:[#allocation10 + $0x1a0] sm:$0xff]
    %v589 = vld [vmem:[#allocation10 + $0x1a8] sm:$0xff]
    %v590 = vld [vmem:[#allocation10 + $0x1b0] sm:$0xff]
    %v591 = vld [vmem:[#allocation10 + $0x1b8] sm:$0xff]
    %v592 = vld [vmem:[#allocation10 + $0x1c0] sm:$0xff]
    %v593 = vld [vmem:[#allocation10 + $0x1c8] sm:$0xff]
    %v594 = vld [vmem:[#allocation10 + $0x1d0] sm:$0xff]
    %v595 = vld [vmem:[#allocation10 + $0x1d8] sm:$0xff]
    %v596 = vld [vmem:[#allocation10 + $0x1e0] sm:$0xff]
    %v597 = vld [vmem:[#allocation10 + $0x1e8] sm:$0xff]
    %v598 = vld [vmem:[#allocation10 + $0x1f0] sm:$0xff]
    %v599 = vld [vmem:[#allocation10 + $0x1f8] sm:$0xff]
    %600 = vmatpush.msra.mxu0 %v596
    %601 = vmatpush.msra.mxu0 %v592
    %602 = vmatpush.msra.mxu0 %v588
    %603 = vmatpush.msra.mxu0 %v584
    %604 = vmatpush.msra.mxu0 %v580
    %605 = vmatpush.msra.mxu0 %v576
    %606 = vmatpush.msra.mxu0 %v572
    %607 = vmatpush.msra.mxu0 %v568
    %608 = vmatpush.msra.mxu0 %v564
    %609 = vmatpush.msra.mxu0 %v560
    %610 = vmatpush.msra.mxu0 %v556
    %611 = vmatpush.msra.mxu0 %v552
    %612 = vmatpush.msra.mxu0 %v548
    %613 = vmatpush.msra.mxu0 %v544
    %614 = vmatpush.msra.mxu0 %v540
    %615 = vmatpush.msra.mxu0 %v536
    %616 = vmatmul.f32.gmra.mxu0 %v535
    %v617 = vpop.f32.mrf.mxu0
    %v618 = vadd.f32 0.0, %v617
    %619 = vdwg.mxu0
    %620 = vmatpush.msra.mxu0 %v597
    %621 = vmatpush.msra.mxu0 %v593
    %622 = vmatpush.msra.mxu0 %v589
    %623 = vmatpush.msra.mxu0 %v585
    %624 = vmatpush.msra.mxu0 %v581
    %625 = vmatpush.msra.mxu0 %v577
    %626 = vmatpush.msra.mxu0 %v573
    %627 = vmatpush.msra.mxu0 %v569
    %628 = vmatpush.msra.mxu0 %v565
    %629 = vmatpush.msra.mxu0 %v561
    %630 = vmatpush.msra.mxu0 %v557
    %631 = vmatpush.msra.mxu0 %v553
    %632 = vmatpush.msra.mxu0 %v549
    %633 = vmatpush.msra.mxu0 %v545
    %634 = vmatpush.msra.mxu0 %v541
    %635 = vmatpush.msra.mxu0 %v537
    %636 = vmatmul.f32.gmra.mxu0 %v535
    %v637 = vpop.f32.mrf.mxu0
    %v638 = vadd.f32 0.0, %v637
    %639 = vdwg.mxu0
    %640 = vmatpush.msra.mxu0 %v598
    %641 = vmatpush.msra.mxu0 %v594
    %642 = vmatpush.msra.mxu0 %v590
    %643 = vmatpush.msra.mxu0 %v586
    %644 = vmatpush.msra.mxu0 %v582
    %645 = vmatpush.msra.mxu0 %v578
    %646 = vmatpush.msra.mxu0 %v574
    %647 = vmatpush.msra.mxu0 %v570
    %648 = vmatpush.msra.mxu0 %v566
    %649 = vmatpush.msra.mxu0 %v562
    %650 = vmatpush.msra.mxu0 %v558
    %651 = vmatpush.msra.mxu0 %v554
    %652 = vmatpush.msra.mxu0 %v550
    %653 = vmatpush.msra.mxu0 %v546
    %654 = vmatpush.msra.mxu0 %v542
    %655 = vmatpush.msra.mxu0 %v538
    %656 = vmatmul.f32.gmra.mxu0 %v535
    %v657 = vpop.f32.mrf.mxu0
    %v658 = vadd.f32 0.0, %v657
    %659 = vdwg.mxu0
    %660 = vmatpush.msra.mxu0 %v599
    %661 = vmatpush.msra.mxu0 %v595
    %662 = vmatpush.msra.mxu0 %v591
    %663 = vmatpush.msra.mxu0 %v587
    %664 = vmatpush.msra.mxu0 %v583
    %665 = vmatpush.msra.mxu0 %v579
    %666 = vmatpush.msra.mxu0 %v575
    %667 = vmatpush.msra.mxu0 %v571
    %668 = vmatpush.msra.mxu0 %v567
    %669 = vmatpush.msra.mxu0 %v563
    %670 = vmatpush.msra.mxu0 %v559
    %671 = vmatpush.msra.mxu0 %v555
    %672 = vmatpush.msra.mxu0 %v551
    %673 = vmatpush.msra.mxu0 %v547
    %674 = vmatpush.msra.mxu0 %v543
    %675 = vmatpush.msra.mxu0 %v539
    %676 = vmatmul.f32.gmra.mxu0 %v535
    %v677 = vpop.f32.mrf.mxu0
    %v678 = vadd.f32 0.0, %v677
    %679 = vdwg.mxu0
    %v680 = vadd.f32 %v531, %v618
    %v681 = vadd.f32 %v532, %v638
    %v682 = vadd.f32 %v533, %v658
    %v683 = vadd.f32 %v534, %v678
    %v684 = vxor.u32 %v680, 2147483648
    %v685 = vmul.f32 %v684, 1.442695
    %v686 = vpow.pop %v685
    %v687 = vadd.f32 %v686, 1.0
    %v688 = vrcp.pop %v687
    %v689 = vmul.f32 %v687, %v688
    %v690 = vsub.f32 1.0, %v689
    %v691 = vmul.f32 %v688, %v690
    %v692 = vadd.f32 %v688, %v691
    %vm693 = vweird.f32 %v687
    %vm694 = vweird.f32 %v688
    %vm695 = vmor %vm693, %vm694
    %v696 = vsel %vm695, %v688, %v692
    %v697 = vand.u32 2147483647, %v687
    %vm698 = vcmp.eq.f32.partialorder %v697, 8.507059e+37
    %v699 = vand.u32 %v687, 2147483648
    %v700 = vor.u32 1.1754944e-38, %v699
    %v701 = vsel %vm698, %v700, %v696
    %v702 = vmul.f32 1.0, %v701
    %v703 = vxor.u32 %v681, 2147483648
    %v704 = vmul.f32 %v703, 1.442695
    %v705 = vpow.pop %v704
    %v706 = vadd.f32 %v705, 1.0
    %v707 = vrcp.pop %v706
    %v708 = vmul.f32 %v706, %v707
    %v709 = vsub.f32 1.0, %v708
    %v710 = vmul.f32 %v707, %v709
    %v711 = vadd.f32 %v707, %v710
    %vm712 = vweird.f32 %v706
    %vm713 = vweird.f32 %v707
    %vm714 = vmor %vm712, %vm713
    %v715 = vsel %vm714, %v707, %v711
    %v716 = vand.u32 2147483647, %v706
    %vm717 = vcmp.eq.f32.partialorder %v716, 8.507059e+37
    %v718 = vand.u32 %v706, 2147483648
    %v719 = vor.u32 1.1754944e-38, %v718
    %v720 = vsel %vm717, %v719, %v715
    %v721 = vmul.f32 1.0, %v720
    %v722 = vtanh.pop %v682
    %v723 = vxor.u32 %v683, 2147483648
    %v724 = vmul.f32 %v723, 1.442695
    %v725 = vpow.pop %v724
    %v726 = vadd.f32 %v725, 1.0
    %v727 = vrcp.pop %v726
    %v728 = vmul.f32 %v726, %v727
    %v729 = vsub.f32 1.0, %v728
    %v730 = vmul.f32 %v727, %v729
    %v731 = vadd.f32 %v727, %v730
    %vm732 = vweird.f32 %v726
    %vm733 = vweird.f32 %v727
    %vm734 = vmor %vm732, %vm733
    %v735 = vsel %vm734, %v727, %v731
    %v736 = vand.u32 2147483647, %v726
    %vm737 = vcmp.eq.f32.partialorder %v736, 8.507059e+37
    %v738 = vand.u32 %v726, 2147483648
    %v739 = vor.u32 1.1754944e-38, %v738
    %v740 = vsel %vm737, %v739, %v735
    %v741 = vmul.f32 1.0, %v740
    %v742 = vld [vmem:[#allocation3] sm:$0xff]
    %v743 = vmul.f32 %v721, %v742
    %v744 = vmul.f32 %v702, %v722
    %v745 = vadd.f32 %v743, %v744
    %v746 = vtanh.pop %v745
    %v747 = vmul.f32 %v741, %v746
    %748 = vst [vmem:[#allocation2] sm:$0xff] %v747
    %749 = vst [vmem:[#allocation3] sm:$0xff] %v745
    %s750 = scalar_lea.vmem [#allocation12], 16
    %751 = vst [vmem:[%s750] sm:$0xff] %v747
    %s752 = scalar_lea.vmem [#allocation4], 96
    %v753 = vld [vmem:[%s752] sm:$0xff]
    %v754 = vld [vmem:[%s752 + $0x8] sm:$0xff]
    %v755 = vld [vmem:[%s752 + $0x10] sm:$0xff]
    %v756 = vld [vmem:[%s752 + $0x18] sm:$0xff]
    %v757 = vld [vmem:[#allocation2] sm:$0xff]
    %v758 = vld [vmem:[#allocation10] sm:$0xff]
    %v759 = vld [vmem:[#allocation10 + $0x8] sm:$0xff]
    %v760 = vld [vmem:[#allocation10 + $0x10] sm:$0xff]
    %v761 = vld [vmem:[#allocation10 + $0x18] sm:$0xff]
    %v762 = vld [vmem:[#allocation10 + $0x20] sm:$0xff]
    %v763 = vld [vmem:[#allocation10 + $0x28] sm:$0xff]
    %v764 = vld [vmem:[#allocation10 + $0x30] sm:$0xff]
    %v765 = vld [vmem:[#allocation10 + $0x38] sm:$0xff]
    %v766 = vld [vmem:[#allocation10 + $0x40] sm:$0xff]
    %v767 = vld [vmem:[#allocation10 + $0x48] sm:$0xff]
    %v768 = vld [vmem:[#allocation10 + $0x50] sm:$0xff]
    %v769 = vld [vmem:[#allocation10 + $0x58] sm:$0xff]
    %v770 = vld [vmem:[#allocation10 + $0x60] sm:$0xff]
    %v771 = vld [vmem:[#allocation10 + $0x68] sm:$0xff]
    %v772 = vld [vmem:[#allocation10 + $0x70] sm:$0xff]
    %v773 = vld [vmem:[#allocation10 + $0x78] sm:$0xff]
    %v774 = vld [vmem:[#allocation10 + $0x80] sm:$0xff]
    %v775 = vld [vmem:[#allocation10 + $0x88] sm:$0xff]
    %v776 = vld [vmem:[#allocation10 + $0x90] sm:$0xff]
    %v777 = vld [vmem:[#allocation10 + $0x98] sm:$0xff]
    %v778 = vld [vmem:[#allocation10 + $0xa0] sm:$0xff]
    %v779 = vld [vmem:[#allocation10 + $0xa8] sm:$0xff]
    %v780 = vld [vmem:[#allocation10 + $0xb0] sm:$0xff]
    %v781 = vld [vmem:[#allocation10 + $0xb8] sm:$0xff]
    %v782 = vld [vmem:[#allocation10 + $0xc0] sm:$0xff]
    %v783 = vld [vmem:[#allocation10 + $0xc8] sm:$0xff]
    %v784 = vld [vmem:[#allocation10 + $0xd0] sm:$0xff]
    %v785 = vld [vmem:[#allocation10 + $0xd8] sm:$0xff]
    %v786 = vld [vmem:[#allocation10 + $0xe0] sm:$0xff]
    %v787 = vld [vmem:[#allocation10 + $0xe8] sm:$0xff]
    %v788 = vld [vmem:[#allocation10 + $0xf0] sm:$0xff]
    %v789 = vld [vmem:[#allocation10 + $0xf8] sm:$0xff]
    %v790 = vld [vmem:[#allocation10 + $0x100] sm:$0xff]
    %v791 = vld [vmem:[#allocation10 + $0x108] sm:$0xff]
    %v792 = vld [vmem:[#allocation10 + $0x110] sm:$0xff]
    %v793 = vld [vmem:[#allocation10 + $0x118] sm:$0xff]
    %v794 = vld [vmem:[#allocation10 + $0x120] sm:$0xff]
    %v795 = vld [vmem:[#allocation10 + $0x128] sm:$0xff]
    %v796 = vld [vmem:[#allocation10 + $0x130] sm:$0xff]
    %v797 = vld [vmem:[#allocation10 + $0x138] sm:$0xff]
    %v798 = vld [vmem:[#allocation10 + $0x140] sm:$0xff]
    %v799 = vld [vmem:[#allocation10 + $0x148] sm:$0xff]
    %v800 = vld [vmem:[#allocation10 + $0x150] sm:$0xff]
    %v801 = vld [vmem:[#allocation10 + $0x158] sm:$0xff]
    %v802 = vld [vmem:[#allocation10 + $0x160] sm:$0xff]
    %v803 = vld [vmem:[#allocation10 + $0x168] sm:$0xff]
    %v804 = vld [vmem:[#allocation10 + $0x170] sm:$0xff]
    %v805 = vld [vmem:[#allocation10 + $0x178] sm:$0xff]
    %v806 = vld [vmem:[#allocation10 + $0x180] sm:$0xff]
    %v807 = vld [vmem:[#allocation10 + $0x188] sm:$0xff]
    %v808 = vld [vmem:[#allocation10 + $0x190] sm:$0xff]
    %v809 = vld [vmem:[#allocation10 + $0x198] sm:$0xff]
    %v810 = vld [vmem:[#allocation10 + $0x1a0] sm:$0xff]
    %v811 = vld [vmem:[#allocation10 + $0x1a8] sm:$0xff]
    %v812 = vld [vmem:[#allocation10 + $0x1b0] sm:$0xff]
    %v813 = vld [vmem:[#allocation10 + $0x1b8] sm:$0xff]
    %v814 = vld [vmem:[#allocation10 + $0x1c0] sm:$0xff]
    %v815 = vld [vmem:[#allocation10 + $0x1c8] sm:$0xff]
    %v816 = vld [vmem:[#allocation10 + $0x1d0] sm:$0xff]
    %v817 = vld [vmem:[#allocation10 + $0x1d8] sm:$0xff]
    %v818 = vld [vmem:[#allocation10 + $0x1e0] sm:$0xff]
    %v819 = vld [vmem:[#allocation10 + $0x1e8] sm:$0xff]
    %v820 = vld [vmem:[#allocation10 + $0x1f0] sm:$0xff]
    %v821 = vld [vmem:[#allocation10 + $0x1f8] sm:$0xff]
    %822 = vmatpush.msra.mxu0 %v818
    %823 = vmatpush.msra.mxu0 %v814
    %824 = vmatpush.msra.mxu0 %v810
    %825 = vmatpush.msra.mxu0 %v806
    %826 = vmatpush.msra.mxu0 %v802
    %827 = vmatpush.msra.mxu0 %v798
    %828 = vmatpush.msra.mxu0 %v794
    %829 = vmatpush.msra.mxu0 %v790
    %830 = vmatpush.msra.mxu0 %v786
    %831 = vmatpush.msra.mxu0 %v782
    %832 = vmatpush.msra.mxu0 %v778
    %833 = vmatpush.msra.mxu0 %v774
    %834 = vmatpush.msra.mxu0 %v770
    %835 = vmatpush.msra.mxu0 %v766
    %836 = vmatpush.msra.mxu0 %v762
    %837 = vmatpush.msra.mxu0 %v758
    %838 = vmatmul.f32.gmra.mxu0 %v757
    %v839 = vpop.f32.mrf.mxu0
    %v840 = vadd.f32 0.0, %v839
    %841 = vdwg.mxu0
    %842 = vmatpush.msra.mxu0 %v819
    %843 = vmatpush.msra.mxu0 %v815
    %844 = vmatpush.msra.mxu0 %v811
    %845 = vmatpush.msra.mxu0 %v807
    %846 = vmatpush.msra.mxu0 %v803
    %847 = vmatpush.msra.mxu0 %v799
    %848 = vmatpush.msra.mxu0 %v795
    %849 = vmatpush.msra.mxu0 %v791
    %850 = vmatpush.msra.mxu0 %v787
    %851 = vmatpush.msra.mxu0 %v783
    %852 = vmatpush.msra.mxu0 %v779
    %853 = vmatpush.msra.mxu0 %v775
    %854 = vmatpush.msra.mxu0 %v771
    %855 = vmatpush.msra.mxu0 %v767
    %856 = vmatpush.msra.mxu0 %v763
    %857 = vmatpush.msra.mxu0 %v759
    %858 = vmatmul.f32.gmra.mxu0 %v757
    %v859 = vpop.f32.mrf.mxu0
    %v860 = vadd.f32 0.0, %v859
    %861 = vdwg.mxu0
    %862 = vmatpush.msra.mxu0 %v820
    %863 = vmatpush.msra.mxu0 %v816
    %864 = vmatpush.msra.mxu0 %v812
    %865 = vmatpush.msra.mxu0 %v808
    %866 = vmatpush.msra.mxu0 %v804
    %867 = vmatpush.msra.mxu0 %v800
    %868 = vmatpush.msra.mxu0 %v796
    %869 = vmatpush.msra.mxu0 %v792
    %870 = vmatpush.msra.mxu0 %v788
    %871 = vmatpush.msra.mxu0 %v784
    %872 = vmatpush.msra.mxu0 %v780
    %873 = vmatpush.msra.mxu0 %v776
    %874 = vmatpush.msra.mxu0 %v772
    %875 = vmatpush.msra.mxu0 %v768
    %876 = vmatpush.msra.mxu0 %v764
    %877 = vmatpush.msra.mxu0 %v760
    %878 = vmatmul.f32.gmra.mxu0 %v757
    %v879 = vpop.f32.mrf.mxu0
    %v880 = vadd.f32 0.0, %v879
    %881 = vdwg.mxu0
    %882 = vmatpush.msra.mxu0 %v821
    %883 = vmatpush.msra.mxu0 %v817
    %884 = vmatpush.msra.mxu0 %v813
    %885 = vmatpush.msra.mxu0 %v809
    %886 = vmatpush.msra.mxu0 %v805
    %887 = vmatpush.msra.mxu0 %v801
    %888 = vmatpush.msra.mxu0 %v797
    %889 = vmatpush.msra.mxu0 %v793
    %890 = vmatpush.msra.mxu0 %v789
    %891 = vmatpush.msra.mxu0 %v785
    %892 = vmatpush.msra.mxu0 %v781
    %893 = vmatpush.msra.mxu0 %v777
    %894 = vmatpush.msra.mxu0 %v773
    %895 = vmatpush.msra.mxu0 %v769
    %896 = vmatpush.msra.mxu0 %v765
    %897 = vmatpush.msra.mxu0 %v761
    %898 = vmatmul.f32.gmra.mxu0 %v757
    %v899 = vpop.f32.mrf.mxu0
    %v900 = vadd.f32 0.0, %v899
    %901 = vdwg.mxu0
    %v902 = vadd.f32 %v753, %v840
    %v903 = vadd.f32 %v754, %v860
    %v904 = vadd.f32 %v755, %v880
    %v905 = vadd.f32 %v756, %v900
    %v906 = vxor.u32 %v902, 2147483648
    %v907 = vmul.f32 %v906, 1.442695
    %v908 = vpow.pop %v907
    %v909 = vadd.f32 %v908, 1.0
    %v910 = vrcp.pop %v909
    %v911 = vmul.f32 %v909, %v910
    %v912 = vsub.f32 1.0, %v911
    %v913 = vmul.f32 %v910, %v912
    %v914 = vadd.f32 %v910, %v913
    %vm915 = vweird.f32 %v909
    %vm916 = vweird.f32 %v910
    %vm917 = vmor %vm915, %vm916
    %v918 = vsel %vm917, %v910, %v914
    %v919 = vand.u32 2147483647, %v909
    %vm920 = vcmp.eq.f32.partialorder %v919, 8.507059e+37
    %v921 = vand.u32 %v909, 2147483648
    %v922 = vor.u32 1.1754944e-38, %v921
    %v923 = vsel %vm920, %v922, %v918
    %v924 = vmul.f32 1.0, %v923
    %v925 = vxor.u32 %v903, 2147483648
    %v926 = vmul.f32 %v925, 1.442695
    %v927 = vpow.pop %v926
    %v928 = vadd.f32 %v927, 1.0
    %v929 = vrcp.pop %v928
    %v930 = vmul.f32 %v928, %v929
    %v931 = vsub.f32 1.0, %v930
    %v932 = vmul.f32 %v929, %v931
    %v933 = vadd.f32 %v929, %v932
    %vm934 = vweird.f32 %v928
    %vm935 = vweird.f32 %v929
    %vm936 = vmor %vm934, %vm935
    %v937 = vsel %vm936, %v929, %v933
    %v938 = vand.u32 2147483647, %v928
    %vm939 = vcmp.eq.f32.partialorder %v938, 8.507059e+37
    %v940 = vand.u32 %v928, 2147483648
    %v941 = vor.u32 1.1754944e-38, %v940
    %v942 = vsel %vm939, %v941, %v937
    %v943 = vmul.f32 1.0, %v942
    %v944 = vtanh.pop %v904
    %v945 = vxor.u32 %v905, 2147483648
    %v946 = vmul.f32 %v945, 1.442695
    %v947 = vpow.pop %v946
    %v948 = vadd.f32 %v947, 1.0
    %v949 = vrcp.pop %v948
    %v950 = vmul.f32 %v948, %v949
    %v951 = vsub.f32 1.0, %v950
    %v952 = vmul.f32 %v949, %v951
    %v953 = vadd.f32 %v949, %v952
    %vm954 = vweird.f32 %v948
    %vm955 = vweird.f32 %v949
    %vm956 = vmor %vm954, %vm955
    %v957 = vsel %vm956, %v949, %v953
    %v958 = vand.u32 2147483647, %v948
    %vm959 = vcmp.eq.f32.partialorder %v958, 8.507059e+37
    %v960 = vand.u32 %v948, 2147483648
    %v961 = vor.u32 1.1754944e-38, %v960
    %v962 = vsel %vm959, %v961, %v957
    %v963 = vmul.f32 1.0, %v962
    %v964 = vld [vmem:[#allocation3] sm:$0xff]
    %v965 = vmul.f32 %v943, %v964
    %v966 = vmul.f32 %v924, %v944
    %v967 = vadd.f32 %v965, %v966
    %v968 = vtanh.pop %v967
    %v969 = vmul.f32 %v963, %v968
    %970 = vst [vmem:[#allocation2] sm:$0xff] %v969
    %971 = vst [vmem:[#allocation3] sm:$0xff] %v967
    %s972 = scalar_lea.vmem [#allocation12], 24
    %973 = vst [vmem:[%s972] sm:$0xff] %v969
    %s974 = scalar_lea.vmem [#allocation4], 128
    %v975 = vld [vmem:[%s974] sm:$0xff]
    %v976 = vld [vmem:[%s974 + $0x8] sm:$0xff]
    %v977 = vld [vmem:[%s974 + $0x10] sm:$0xff]
    %v978 = vld [vmem:[%s974 + $0x18] sm:$0xff]
    %v979 = vld [vmem:[#allocation2] sm:$0xff]
    %v980 = vld [vmem:[#allocation10] sm:$0xff]
    %v981 = vld [vmem:[#allocation10 + $0x8] sm:$0xff]
    %v982 = vld [vmem:[#allocation10 + $0x10] sm:$0xff]
    %v983 = vld [vmem:[#allocation10 + $0x18] sm:$0xff]
    %v984 = vld [vmem:[#allocation10 + $0x20] sm:$0xff]
    %v985 = vld [vmem:[#allocation10 + $0x28] sm:$0xff]
    %v986 = vld [vmem:[#allocation10 + $0x30] sm:$0xff]
    %v987 = vld [vmem:[#allocation10 + $0x38] sm:$0xff]
    %v988 = vld [vmem:[#allocation10 + $0x40] sm:$0xff]
    %v989 = vld [vmem:[#allocation10 + $0x48] sm:$0xff]
    %v990 = vld [vmem:[#allocation10 + $0x50] sm:$0xff]
    %v991 = vld [vmem:[#allocation10 + $0x58] sm:$0xff]
    %v992 = vld [vmem:[#allocation10 + $0x60] sm:$0xff]
    %v993 = vld [vmem:[#allocation10 + $0x68] sm:$0xff]
    %v994 = vld [vmem:[#allocation10 + $0x70] sm:$0xff]
    %v995 = vld [vmem:[#allocation10 + $0x78] sm:$0xff]
    %v996 = vld [vmem:[#allocation10 + $0x80] sm:$0xff]
    %v997 = vld [vmem:[#allocation10 + $0x88] sm:$0xff]
    %v998 = vld [vmem:[#allocation10 + $0x90] sm:$0xff]
    %v999 = vld [vmem:[#allocation10 + $0x98] sm:$0xff]
    %v1000 = vld [vmem:[#allocation10 + $0xa0] sm:$0xff]
    %v1001 = vld [vmem:[#allocation10 + $0xa8] sm:$0xff]
    %v1002 = vld [vmem:[#allocation10 + $0xb0] sm:$0xff]
    %v1003 = vld [vmem:[#allocation10 + $0xb8] sm:$0xff]
    %v1004 = vld [vmem:[#allocation10 + $0xc0] sm:$0xff]
    %v1005 = vld [vmem:[#allocation10 + $0xc8] sm:$0xff]
    %v1006 = vld [vmem:[#allocation10 + $0xd0] sm:$0xff]
    %v1007 = vld [vmem:[#allocation10 + $0xd8] sm:$0xff]
    %v1008 = vld [vmem:[#allocation10 + $0xe0] sm:$0xff]
    %v1009 = vld [vmem:[#allocation10 + $0xe8] sm:$0xff]
    %v1010 = vld [vmem:[#allocation10 + $0xf0] sm:$0xff]
    %v1011 = vld [vmem:[#allocation10 + $0xf8] sm:$0xff]
    %v1012 = vld [vmem:[#allocation10 + $0x100] sm:$0xff]
    %v1013 = vld [vmem:[#allocation10 + $0x108] sm:$0xff]
    %v1014 = vld [vmem:[#allocation10 + $0x110] sm:$0xff]
    %v1015 = vld [vmem:[#allocation10 + $0x118] sm:$0xff]
    %v1016 = vld [vmem:[#allocation10 + $0x120] sm:$0xff]
    %v1017 = vld [vmem:[#allocation10 + $0x128] sm:$0xff]
    %v1018 = vld [vmem:[#allocation10 + $0x130] sm:$0xff]
    %v1019 = vld [vmem:[#allocation10 + $0x138] sm:$0xff]
    %v1020 = vld [vmem:[#allocation10 + $0x140] sm:$0xff]
    %v1021 = vld [vmem:[#allocation10 + $0x148] sm:$0xff]
    %v1022 = vld [vmem:[#allocation10 + $0x150] sm:$0xff]
    %v1023 = vld [vmem:[#allocation10 + $0x158] sm:$0xff]
    %v1024 = vld [vmem:[#allocation10 + $0x160] sm:$0xff]
    %v1025 = vld [vmem:[#allocation10 + $0x168] sm:$0xff]
    %v1026 = vld [vmem:[#allocation10 + $0x170] sm:$0xff]
    %v1027 = vld [vmem:[#allocation10 + $0x178] sm:$0xff]
    %v1028 = vld [vmem:[#allocation10 + $0x180] sm:$0xff]
    %v1029 = vld [vmem:[#allocation10 + $0x188] sm:$0xff]
    %v1030 = vld [vmem:[#allocation10 + $0x190] sm:$0xff]
    %v1031 = vld [vmem:[#allocation10 + $0x198] sm:$0xff]
    %v1032 = vld [vmem:[#allocation10 + $0x1a0] sm:$0xff]
    %v1033 = vld [vmem:[#allocation10 + $0x1a8] sm:$0xff]
    %v1034 = vld [vmem:[#allocation10 + $0x1b0] sm:$0xff]
    %v1035 = vld [vmem:[#allocation10 + $0x1b8] sm:$0xff]
    %v1036 = vld [vmem:[#allocation10 + $0x1c0] sm:$0xff]
    %v1037 = vld [vmem:[#allocation10 + $0x1c8] sm:$0xff]
    %v1038 = vld [vmem:[#allocation10 + $0x1d0] sm:$0xff]
    %v1039 = vld [vmem:[#allocation10 + $0x1d8] sm:$0xff]
    %v1040 = vld [vmem:[#allocation10 + $0x1e0] sm:$0xff]
    %v1041 = vld [vmem:[#allocation10 + $0x1e8] sm:$0xff]
    %v1042 = vld [vmem:[#allocation10 + $0x1f0] sm:$0xff]
    %v1043 = vld [vmem:[#allocation10 + $0x1f8] sm:$0xff]
    %1044 = vmatpush.msra.mxu0 %v1040
    %1045 = vmatpush.msra.mxu0 %v1036
    %1046 = vmatpush.msra.mxu0 %v1032
    %1047 = vmatpush.msra.mxu0 %v1028
    %1048 = vmatpush.msra.mxu0 %v1024
    %1049 = vmatpush.msra.mxu0 %v1020
    %1050 = vmatpush.msra.mxu0 %v1016
    %1051 = vmatpush.msra.mxu0 %v1012
    %1052 = vmatpush.msra.mxu0 %v1008
    %1053 = vmatpush.msra.mxu0 %v1004
    %1054 = vmatpush.msra.mxu0 %v1000
    %1055 = vmatpush.msra.mxu0 %v996
    %1056 = vmatpush.msra.mxu0 %v992
    %1057 = vmatpush.msra.mxu0 %v988
    %1058 = vmatpush.msra.mxu0 %v984
    %1059 = vmatpush.msra.mxu0 %v980
    %1060 = vmatmul.f32.gmra.mxu0 %v979
    %v1061 = vpop.f32.mrf.mxu0
    %v1062 = vadd.f32 0.0, %v1061
    %1063 = vdwg.mxu0
    %1064 = vmatpush.msra.mxu0 %v1041
    %1065 = vmatpush.msra.mxu0 %v1037
    %1066 = vmatpush.msra.mxu0 %v1033
    %1067 = vmatpush.msra.mxu0 %v1029
    %1068 = vmatpush.msra.mxu0 %v1025
    %1069 = vmatpush.msra.mxu0 %v1021
    %1070 = vmatpush.msra.mxu0 %v1017
    %1071 = vmatpush.msra.mxu0 %v1013
    %1072 = vmatpush.msra.mxu0 %v1009
    %1073 = vmatpush.msra.mxu0 %v1005
    %1074 = vmatpush.msra.mxu0 %v1001
    %1075 = vmatpush.msra.mxu0 %v997
    %1076 = vmatpush.msra.mxu0 %v993
    %1077 = vmatpush.msra.mxu0 %v989
    %1078 = vmatpush.msra.mxu0 %v985
    %1079 = vmatpush.msra.mxu0 %v981
    %1080 = vmatmul.f32.gmra.mxu0 %v979
    %v1081 = vpop.f32.mrf.mxu0
    %v1082 = vadd.f32 0.0, %v1081
    %1083 = vdwg.mxu0
    %1084 = vmatpush.msra.mxu0 %v1042
    %1085 = vmatpush.msra.mxu0 %v1038
    %1086 = vmatpush.msra.mxu0 %v1034
    %1087 = vmatpush.msra.mxu0 %v1030
    %1088 = vmatpush.msra.mxu0 %v1026
    %1089 = vmatpush.msra.mxu0 %v1022
    %1090 = vmatpush.msra.mxu0 %v1018
    %1091 = vmatpush.msra.mxu0 %v1014
    %1092 = vmatpush.msra.mxu0 %v1010
    %1093 = vmatpush.msra.mxu0 %v1006
    %1094 = vmatpush.msra.mxu0 %v1002
    %1095 = vmatpush.msra.mxu0 %v998
    %1096 = vmatpush.msra.mxu0 %v994
    %1097 = vmatpush.msra.mxu0 %v990
    %1098 = vmatpush.msra.mxu0 %v986
    %1099 = vmatpush.msra.mxu0 %v982
    %1100 = vmatmul.f32.gmra.mxu0 %v979
    %v1101 = vpop.f32.mrf.mxu0
    %v1102 = vadd.f32 0.0, %v1101
    %1103 = vdwg.mxu0
    %1104 = vmatpush.msra.mxu0 %v1043
    %1105 = vmatpush.msra.mxu0 %v1039
    %1106 = vmatpush.msra.mxu0 %v1035
    %1107 = vmatpush.msra.mxu0 %v1031
    %1108 = vmatpush.msra.mxu0 %v1027
    %1109 = vmatpush.msra.mxu0 %v1023
    %1110 = vmatpush.msra.mxu0 %v1019
    %1111 = vmatpush.msra.mxu0 %v1015
    %1112 = vmatpush.msra.mxu0 %v1011
    %1113 = vmatpush.msra.mxu0 %v1007
    %1114 = vmatpush.msra.mxu0 %v1003
    %1115 = vmatpush.msra.mxu0 %v999
    %1116 = vmatpush.msra.mxu0 %v995
    %1117 = vmatpush.msra.mxu0 %v991
    %1118 = vmatpush.msra.mxu0 %v987
    %1119 = vmatpush.msra.mxu0 %v983
    %1120 = vmatmul.f32.gmra.mxu0 %v979
    %v1121 = vpop.f32.mrf.mxu0
    %v1122 = vadd.f32 0.0, %v1121
    %1123 = vdwg.mxu0
    %v1124 = vadd.f32 %v975, %v1062
    %v1125 = vadd.f32 %v976, %v1082
    %v1126 = vadd.f32 %v977, %v1102
    %v1127 = vadd.f32 %v978, %v1122
    %v1128 = vxor.u32 %v1124, 2147483648
    %v1129 = vmul.f32 %v1128, 1.442695
    %v1130 = vpow.pop %v1129
    %v1131 = vadd.f32 %v1130, 1.0
    %v1132 = vrcp.pop %v1131
    %v1133 = vmul.f32 %v1131, %v1132
    %v1134 = vsub.f32 1.0, %v1133
    %v1135 = vmul.f32 %v1132, %v1134
    %v1136 = vadd.f32 %v1132, %v1135
    %vm1137 = vweird.f32 %v1131
    %vm1138 = vweird.f32 %v1132
    %vm1139 = vmor %vm1137, %vm1138
    %v1140 = vsel %vm1139, %v1132, %v1136
    %v1141 = vand.u32 2147483647, %v1131
    %vm1142 = vcmp.eq.f32.partialorder %v1141, 8.507059e+37
    %v1143 = vand.u32 %v1131, 2147483648
    %v1144 = vor.u32 1.1754944e-38, %v1143
    %v1145 = vsel %vm1142, %v1144, %v1140
    %v1146 = vmul.f32 1.0, %v1145
    %v1147 = vxor.u32 %v1125, 2147483648
    %v1148 = vmul.f32 %v1147, 1.442695
    %v1149 = vpow.pop %v1148
    %v1150 = vadd.f32 %v1149, 1.0
    %v1151 = vrcp.pop %v1150
    %v1152 = vmul.f32 %v1150, %v1151
    %v1153 = vsub.f32 1.0, %v1152
    %v1154 = vmul.f32 %v1151, %v1153
    %v1155 = vadd.f32 %v1151, %v1154
    %vm1156 = vweird.f32 %v1150
    %vm1157 = vweird.f32 %v1151
    %vm1158 = vmor %vm1156, %vm1157
    %v1159 = vsel %vm1158, %v1151, %v1155
    %v1160 = vand.u32 2147483647, %v1150
    %vm1161 = vcmp.eq.f32.partialorder %v1160, 8.507059e+37
    %v1162 = vand.u32 %v1150, 2147483648
    %v1163 = vor.u32 1.1754944e-38, %v1162
    %v1164 = vsel %vm1161, %v1163, %v1159
    %v1165 = vmul.f32 1.0, %v1164
    %v1166 = vtanh.pop %v1126
    %v1167 = vxor.u32 %v1127, 2147483648
    %v1168 = vmul.f32 %v1167, 1.442695
    %v1169 = vpow.pop %v1168
    %v1170 = vadd.f32 %v1169, 1.0
    %v1171 = vrcp.pop %v1170
    %v1172 = vmul.f32 %v1170, %v1171
    %v1173 = vsub.f32 1.0, %v1172
    %v1174 = vmul.f32 %v1171, %v1173
    %v1175 = vadd.f32 %v1171, %v1174
    %vm1176 = vweird.f32 %v1170
    %vm1177 = vweird.f32 %v1171
    %vm1178 = vmor %vm1176, %vm1177
    %v1179 = vsel %vm1178, %v1171, %v1175
    %v1180 = vand.u32 2147483647, %v1170
    %vm1181 = vcmp.eq.f32.partialorder %v1180, 8.507059e+37
    %v1182 = vand.u32 %v1170, 2147483648
    %v1183 = vor.u32 1.1754944e-38, %v1182
    %v1184 = vsel %vm1181, %v1183, %v1179
    %v1185 = vmul.f32 1.0, %v1184
    %v1186 = vld [vmem:[#allocation3] sm:$0xff]
    %v1187 = vmul.f32 %v1165, %v1186
    %v1188 = vmul.f32 %v1146, %v1166
    %v1189 = vadd.f32 %v1187, %v1188
    %v1190 = vtanh.pop %v1189
    %v1191 = vmul.f32 %v1185, %v1190
    %1192 = vst [vmem:[#allocation2] sm:$0xff] %v1191
    %1193 = vst [vmem:[#allocation3] sm:$0xff] %v1189
    %s1194 = scalar_lea.vmem [#allocation12], 32
    %1195 = vst [vmem:[%s1194] sm:$0xff] %v1191
    %s1196 = scalar_lea.vmem [#allocation4], 160
    %v1197 = vld [vmem:[%s1196] sm:$0xff]
    %v1198 = vld [vmem:[%s1196 + $0x8] sm:$0xff]
    %v1199 = vld [vmem:[%s1196 + $0x10] sm:$0xff]
    %v1200 = vld [vmem:[%s1196 + $0x18] sm:$0xff]
    %v1201 = vld [vmem:[#allocation2] sm:$0xff]
    %v1202 = vld [vmem:[#allocation10] sm:$0xff]
    %v1203 = vld [vmem:[#allocation10 + $0x8] sm:$0xff]
    %v1204 = vld [vmem:[#allocation10 + $0x10] sm:$0xff]
    %v1205 = vld [vmem:[#allocation10 + $0x18] sm:$0xff]
    %v1206 = vld [vmem:[#allocation10 + $0x20] sm:$0xff]
    %v1207 = vld [vmem:[#allocation10 + $0x28] sm:$0xff]
    %v1208 = vld [vmem:[#allocation10 + $0x30] sm:$0xff]
    %v1209 = vld [vmem:[#allocation10 + $0x38] sm:$0xff]
    %v1210 = vld [vmem:[#allocation10 + $0x40] sm:$0xff]
    %v1211 = vld [vmem:[#allocation10 + $0x48] sm:$0xff]
    %v1212 = vld [vmem:[#allocation10 + $0x50] sm:$0xff]
    %v1213 = vld [vmem:[#allocation10 + $0x58] sm:$0xff]
    %v1214 = vld [vmem:[#allocation10 + $0x60] sm:$0xff]
    %v1215 = vld [vmem:[#allocation10 + $0x68] sm:$0xff]
    %v1216 = vld [vmem:[#allocation10 + $0x70] sm:$0xff]
    %v1217 = vld [vmem:[#allocation10 + $0x78] sm:$0xff]
    %v1218 = vld [vmem:[#allocation10 + $0x80] sm:$0xff]
    %v1219 = vld [vmem:[#allocation10 + $0x88] sm:$0xff]
    %v1220 = vld [vmem:[#allocation10 + $0x90] sm:$0xff]
    %v1221 = vld [vmem:[#allocation10 + $0x98] sm:$0xff]
    %v1222 = vld [vmem:[#allocation10 + $0xa0] sm:$0xff]
    %v1223 = vld [vmem:[#allocation10 + $0xa8] sm:$0xff]
    %v1224 = vld [vmem:[#allocation10 + $0xb0] sm:$0xff]
    %v1225 = vld [vmem:[#allocation10 + $0xb8] sm:$0xff]
    %v1226 = vld [vmem:[#allocation10 + $0xc0] sm:$0xff]
    %v1227 = vld [vmem:[#allocation10 + $0xc8] sm:$0xff]
    %v1228 = vld [vmem:[#allocation10 + $0xd0] sm:$0xff]
    %v1229 = vld [vmem:[#allocation10 + $0xd8] sm:$0xff]
    %v1230 = vld [vmem:[#allocation10 + $0xe0] sm:$0xff]
    %v1231 = vld [vmem:[#allocation10 + $0xe8] sm:$0xff]
    %v1232 = vld [vmem:[#allocation10 + $0xf0] sm:$0xff]
    %v1233 = vld [vmem:[#allocation10 + $0xf8] sm:$0xff]
    %v1234 = vld [vmem:[#allocation10 + $0x100] sm:$0xff]
    %v1235 = vld [vmem:[#allocation10 + $0x108] sm:$0xff]
    %v1236 = vld [vmem:[#allocation10 + $0x110] sm:$0xff]
    %v1237 = vld [vmem:[#allocation10 + $0x118] sm:$0xff]
    %v1238 = vld [vmem:[#allocation10 + $0x120] sm:$0xff]
    %v1239 = vld [vmem:[#allocation10 + $0x128] sm:$0xff]
    %v1240 = vld [vmem:[#allocation10 + $0x130] sm:$0xff]
    %v1241 = vld [vmem:[#allocation10 + $0x138] sm:$0xff]
    %v1242 = vld [vmem:[#allocation10 + $0x140] sm:$0xff]
    %v1243 = vld [vmem:[#allocation10 + $0x148] sm:$0xff]
    %v1244 = vld [vmem:[#allocation10 + $0x150] sm:$0xff]
    %v1245 = vld [vmem:[#allocation10 + $0x158] sm:$0xff]
    %v1246 = vld [vmem:[#allocation10 + $0x160] sm:$0xff]
    %v1247 = vld [vmem:[#allocation10 + $0x168] sm:$0xff]
    %v1248 = vld [vmem:[#allocation10 + $0x170] sm:$0xff]
    %v1249 = vld [vmem:[#allocation10 + $0x178] sm:$0xff]
    %v1250 = vld [vmem:[#allocation10 + $0x180] sm:$0xff]
    %v1251 = vld [vmem:[#allocation10 + $0x188] sm:$0xff]
    %v1252 = vld [vmem:[#allocation10 + $0x190] sm:$0xff]
    %v1253 = vld [vmem:[#allocation10 + $0x198] sm:$0xff]
    %v1254 = vld [vmem:[#allocation10 + $0x1a0] sm:$0xff]
    %v1255 = vld [vmem:[#allocation10 + $0x1a8] sm:$0xff]
    %v1256 = vld [vmem:[#allocation10 + $0x1b0] sm:$0xff]
    %v1257 = vld [vmem:[#allocation10 + $0x1b8] sm:$0xff]
    %v1258 = vld [vmem:[#allocation10 + $0x1c0] sm:$0xff]
    %v1259 = vld [vmem:[#allocation10 + $0x1c8] sm:$0xff]
    %v1260 = vld [vmem:[#allocation10 + $0x1d0] sm:$0xff]
    %v1261 = vld [vmem:[#allocation10 + $0x1d8] sm:$0xff]
    %v1262 = vld [vmem:[#allocation10 + $0x1e0] sm:$0xff]
    %v1263 = vld [vmem:[#allocation10 + $0x1e8] sm:$0xff]
    %v1264 = vld [vmem:[#allocation10 + $0x1f0] sm:$0xff]
    %v1265 = vld [vmem:[#allocation10 + $0x1f8] sm:$0xff]
    %1266 = vmatpush.msra.mxu0 %v1262
    %1267 = vmatpush.msra.mxu0 %v1258
    %1268 = vmatpush.msra.mxu0 %v1254
    %1269 = vmatpush.msra.mxu0 %v1250
    %1270 = vmatpush.msra.mxu0 %v1246
    %1271 = vmatpush.msra.mxu0 %v1242
    %1272 = vmatpush.msra.mxu0 %v1238
    %1273 = vmatpush.msra.mxu0 %v1234
    %1274 = vmatpush.msra.mxu0 %v1230
    %1275 = vmatpush.msra.mxu0 %v1226
    %1276 = vmatpush.msra.mxu0 %v1222
    %1277 = vmatpush.msra.mxu0 %v1218
    %1278 = vmatpush.msra.mxu0 %v1214
    %1279 = vmatpush.msra.mxu0 %v1210
    %1280 = vmatpush.msra.mxu0 %v1206
    %1281 = vmatpush.msra.mxu0 %v1202
    %1282 = vmatmul.f32.gmra.mxu0 %v1201
    %v1283 = vpop.f32.mrf.mxu0
    %v1284 = vadd.f32 0.0, %v1283
    %1285 = vdwg.mxu0
    %1286 = vmatpush.msra.mxu0 %v1263
    %1287 = vmatpush.msra.mxu0 %v1259
    %1288 = vmatpush.msra.mxu0 %v1255
    %1289 = vmatpush.msra.mxu0 %v1251
    %1290 = vmatpush.msra.mxu0 %v1247
    %1291 = vmatpush.msra.mxu0 %v1243
    %1292 = vmatpush.msra.mxu0 %v1239
    %1293 = vmatpush.msra.mxu0 %v1235
    %1294 = vmatpush.msra.mxu0 %v1231
    %1295 = vmatpush.msra.mxu0 %v1227
    %1296 = vmatpush.msra.mxu0 %v1223
    %1297 = vmatpush.msra.mxu0 %v1219
    %1298 = vmatpush.msra.mxu0 %v1215
    %1299 = vmatpush.msra.mxu0 %v1211
    %1300 = vmatpush.msra.mxu0 %v1207
    %1301 = vmatpush.msra.mxu0 %v1203
    %1302 = vmatmul.f32.gmra.mxu0 %v1201
    %v1303 = vpop.f32.mrf.mxu0
    %v1304 = vadd.f32 0.0, %v1303
    %1305 = vdwg.mxu0
    %1306 = vmatpush.msra.mxu0 %v1264
    %1307 = vmatpush.msra.mxu0 %v1260
    %1308 = vmatpush.msra.mxu0 %v1256
    %1309 = vmatpush.msra.mxu0 %v1252
    %1310 = vmatpush.msra.mxu0 %v1248
    %1311 = vmatpush.msra.mxu0 %v1244
    %1312 = vmatpush.msra.mxu0 %v1240
    %1313 = vmatpush.msra.mxu0 %v1236
    %1314 = vmatpush.msra.mxu0 %v1232
    %1315 = vmatpush.msra.mxu0 %v1228
    %1316 = vmatpush.msra.mxu0 %v1224
    %1317 = vmatpush.msra.mxu0 %v1220
    %1318 = vmatpush.msra.mxu0 %v1216
    %1319 = vmatpush.msra.mxu0 %v1212
    %1320 = vmatpush.msra.mxu0 %v1208
    %1321 = vmatpush.msra.mxu0 %v1204
    %1322 = vmatmul.f32.gmra.mxu0 %v1201
    %v1323 = vpop.f32.mrf.mxu0
    %v1324 = vadd.f32 0.0, %v1323
    %1325 = vdwg.mxu0
    %1326 = vmatpush.msra.mxu0 %v1265
    %1327 = vmatpush.msra.mxu0 %v1261
    %1328 = vmatpush.msra.mxu0 %v1257
    %1329 = vmatpush.msra.mxu0 %v1253
    %1330 = vmatpush.msra.mxu0 %v1249
    %1331 = vmatpush.msra.mxu0 %v1245
    %1332 = vmatpush.msra.mxu0 %v1241
    %1333 = vmatpush.msra.mxu0 %v1237
    %1334 = vmatpush.msra.mxu0 %v1233
    %1335 = vmatpush.msra.mxu0 %v1229
    %1336 = vmatpush.msra.mxu0 %v1225
    %1337 = vmatpush.msra.mxu0 %v1221
    %1338 = vmatpush.msra.mxu0 %v1217
    %1339 = vmatpush.msra.mxu0 %v1213
    %1340 = vmatpush.msra.mxu0 %v1209
    %1341 = vmatpush.msra.mxu0 %v1205
    %1342 = vmatmul.f32.gmra.mxu0 %v1201
    %v1343 = vpop.f32.mrf.mxu0
    %v1344 = vadd.f32 0.0, %v1343
    %1345 = vdwg.mxu0
    %v1346 = vadd.f32 %v1197, %v1284
    %v1347 = vadd.f32 %v1198, %v1304
    %v1348 = vadd.f32 %v1199, %v1324
    %v1349 = vadd.f32 %v1200, %v1344
    %v1350 = vxor.u32 %v1346, 2147483648
    %v1351 = vmul.f32 %v1350, 1.442695
    %v1352 = vpow.pop %v1351
    %v1353 = vadd.f32 %v1352, 1.0
    %v1354 = vrcp.pop %v1353
    %v1355 = vmul.f32 %v1353, %v1354
    %v1356 = vsub.f32 1.0, %v1355
    %v1357 = vmul.f32 %v1354, %v1356
    %v1358 = vadd.f32 %v1354, %v1357
    %vm1359 = vweird.f32 %v1353
    %vm1360 = vweird.f32 %v1354
    %vm1361 = vmor %vm1359, %vm1360
    %v1362 = vsel %vm1361, %v1354, %v1358
    %v1363 = vand.u32 2147483647, %v1353
    %vm1364 = vcmp.eq.f32.partialorder %v1363, 8.507059e+37
    %v1365 = vand.u32 %v1353, 2147483648
    %v1366 = vor.u32 1.1754944e-38, %v1365
    %v1367 = vsel %vm1364, %v1366, %v1362
    %v1368 = vmul.f32 1.0, %v1367
    %v1369 = vxor.u32 %v1347, 2147483648
    %v1370 = vmul.f32 %v1369, 1.442695
    %v1371 = vpow.pop %v1370
    %v1372 = vadd.f32 %v1371, 1.0
    %v1373 = vrcp.pop %v1372
    %v1374 = vmul.f32 %v1372, %v1373
    %v1375 = vsub.f32 1.0, %v1374
    %v1376 = vmul.f32 %v1373, %v1375
    %v1377 = vadd.f32 %v1373, %v1376
    %vm1378 = vweird.f32 %v1372
    %vm1379 = vweird.f32 %v1373
    %vm1380 = vmor %vm1378, %vm1379
    %v1381 = vsel %vm1380, %v1373, %v1377
    %v1382 = vand.u32 2147483647, %v1372
    %vm1383 = vcmp.eq.f32.partialorder %v1382, 8.507059e+37
    %v1384 = vand.u32 %v1372, 2147483648
    %v1385 = vor.u32 1.1754944e-38, %v1384
    %v1386 = vsel %vm1383, %v1385, %v1381
    %v1387 = vmul.f32 1.0, %v1386
    %v1388 = vtanh.pop %v1348
    %v1389 = vxor.u32 %v1349, 2147483648
    %v1390 = vmul.f32 %v1389, 1.442695
    %v1391 = vpow.pop %v1390
    %v1392 = vadd.f32 %v1391, 1.0
    %v1393 = vrcp.pop %v1392
    %v1394 = vmul.f32 %v1392, %v1393
    %v1395 = vsub.f32 1.0, %v1394
    %v1396 = vmul.f32 %v1393, %v1395
    %v1397 = vadd.f32 %v1393, %v1396
    %vm1398 = vweird.f32 %v1392
    %vm1399 = vweird.f32 %v1393
    %vm1400 = vmor %vm1398, %vm1399
    %v1401 = vsel %vm1400, %v1393, %v1397
    %v1402 = vand.u32 2147483647, %v1392
    %vm1403 = vcmp.eq.f32.partialorder %v1402, 8.507059e+37
    %v1404 = vand.u32 %v1392, 2147483648
    %v1405 = vor.u32 1.1754944e-38, %v1404
    %v1406 = vsel %vm1403, %v1405, %v1401
    %v1407 = vmul.f32 1.0, %v1406
    %v1408 = vld [vmem:[#allocation3] sm:$0xff]
    %v1409 = vmul.f32 %v1387, %v1408
    %v1410 = vmul.f32 %v1368, %v1388
    %v1411 = vadd.f32 %v1409, %v1410
    %v1412 = vtanh.pop %v1411
    %v1413 = vmul.f32 %v1407, %v1412
    %1414 = vst [vmem:[#allocation2] sm:$0xff] %v1413
    %1415 = vst [vmem:[#allocation3] sm:$0xff] %v1411
    %s1416 = scalar_lea.vmem [#allocation12], 40
    %1417 = vst [vmem:[%s1416] sm:$0xff] %v1413
    %s1418 = scalar_lea.vmem [#allocation4], 192
    %v1419 = vld [vmem:[%s1418] sm:$0xff]
    %v1420 = vld [vmem:[%s1418 + $0x8] sm:$0xff]
    %v1421 = vld [vmem:[%s1418 + $0x10] sm:$0xff]
    %v1422 = vld [vmem:[%s1418 + $0x18] sm:$0xff]
    %v1423 = vld [vmem:[#allocation2] sm:$0xff]
    %v1424 = vld [vmem:[#allocation10] sm:$0xff]
    %v1425 = vld [vmem:[#allocation10 + $0x8] sm:$0xff]
    %v1426 = vld [vmem:[#allocation10 + $0x10] sm:$0xff]
    %v1427 = vld [vmem:[#allocation10 + $0x18] sm:$0xff]
    %v1428 = vld [vmem:[#allocation10 + $0x20] sm:$0xff]
    %v1429 = vld [vmem:[#allocation10 + $0x28] sm:$0xff]
    %v1430 = vld [vmem:[#allocation10 + $0x30] sm:$0xff]
    %v1431 = vld [vmem:[#allocation10 + $0x38] sm:$0xff]
    %v1432 = vld [vmem:[#allocation10 + $0x40] sm:$0xff]
    %v1433 = vld [vmem:[#allocation10 + $0x48] sm:$0xff]
    %v1434 = vld [vmem:[#allocation10 + $0x50] sm:$0xff]
    %v1435 = vld [vmem:[#allocation10 + $0x58] sm:$0xff]
    %v1436 = vld [vmem:[#allocation10 + $0x60] sm:$0xff]
    %v1437 = vld [vmem:[#allocation10 + $0x68] sm:$0xff]
    %v1438 = vld [vmem:[#allocation10 + $0x70] sm:$0xff]
    %v1439 = vld [vmem:[#allocation10 + $0x78] sm:$0xff]
    %v1440 = vld [vmem:[#allocation10 + $0x80] sm:$0xff]
    %v1441 = vld [vmem:[#allocation10 + $0x88] sm:$0xff]
    %v1442 = vld [vmem:[#allocation10 + $0x90] sm:$0xff]
    %v1443 = vld [vmem:[#allocation10 + $0x98] sm:$0xff]
    %v1444 = vld [vmem:[#allocation10 + $0xa0] sm:$0xff]
    %v1445 = vld [vmem:[#allocation10 + $0xa8] sm:$0xff]
    %v1446 = vld [vmem:[#allocation10 + $0xb0] sm:$0xff]
    %v1447 = vld [vmem:[#allocation10 + $0xb8] sm:$0xff]
    %v1448 = vld [vmem:[#allocation10 + $0xc0] sm:$0xff]
    %v1449 = vld [vmem:[#allocation10 + $0xc8] sm:$0xff]
    %v1450 = vld [vmem:[#allocation10 + $0xd0] sm:$0xff]
    %v1451 = vld [vmem:[#allocation10 + $0xd8] sm:$0xff]
    %v1452 = vld [vmem:[#allocation10 + $0xe0] sm:$0xff]
    %v1453 = vld [vmem:[#allocation10 + $0xe8] sm:$0xff]
    %v1454 = vld [vmem:[#allocation10 + $0xf0] sm:$0xff]
    %v1455 = vld [vmem:[#allocation10 + $0xf8] sm:$0xff]
    %v1456 = vld [vmem:[#allocation10 + $0x100] sm:$0xff]
    %v1457 = vld [vmem:[#allocation10 + $0x108] sm:$0xff]
    %v1458 = vld [vmem:[#allocation10 + $0x110] sm:$0xff]
    %v1459 = vld [vmem:[#allocation10 + $0x118] sm:$0xff]
    %v1460 = vld [vmem:[#allocation10 + $0x120] sm:$0xff]
    %v1461 = vld [vmem:[#allocation10 + $0x128] sm:$0xff]
    %v1462 = vld [vmem:[#allocation10 + $0x130] sm:$0xff]
    %v1463 = vld [vmem:[#allocation10 + $0x138] sm:$0xff]
    %v1464 = vld [vmem:[#allocation10 + $0x140] sm:$0xff]
    %v1465 = vld [vmem:[#allocation10 + $0x148] sm:$0xff]
    %v1466 = vld [vmem:[#allocation10 + $0x150] sm:$0xff]
    %v1467 = vld [vmem:[#allocation10 + $0x158] sm:$0xff]
    %v1468 = vld [vmem:[#allocation10 + $0x160] sm:$0xff]
    %v1469 = vld [vmem:[#allocation10 + $0x168] sm:$0xff]
    %v1470 = vld [vmem:[#allocation10 + $0x170] sm:$0xff]
    %v1471 = vld [vmem:[#allocation10 + $0x178] sm:$0xff]
    %v1472 = vld [vmem:[#allocation10 + $0x180] sm:$0xff]
    %v1473 = vld [vmem:[#allocation10 + $0x188] sm:$0xff]
    %v1474 = vld [vmem:[#allocation10 + $0x190] sm:$0xff]
    %v1475 = vld [vmem:[#allocation10 + $0x198] sm:$0xff]
    %v1476 = vld [vmem:[#allocation10 + $0x1a0] sm:$0xff]
    %v1477 = vld [vmem:[#allocation10 + $0x1a8] sm:$0xff]
    %v1478 = vld [vmem:[#allocation10 + $0x1b0] sm:$0xff]
    %v1479 = vld [vmem:[#allocation10 + $0x1b8] sm:$0xff]
    %v1480 = vld [vmem:[#allocation10 + $0x1c0] sm:$0xff]
    %v1481 = vld [vmem:[#allocation10 + $0x1c8] sm:$0xff]
    %v1482 = vld [vmem:[#allocation10 + $0x1d0] sm:$0xff]
    %v1483 = vld [vmem:[#allocation10 + $0x1d8] sm:$0xff]
    %v1484 = vld [vmem:[#allocation10 + $0x1e0] sm:$0xff]
    %v1485 = vld [vmem:[#allocation10 + $0x1e8] sm:$0xff]
    %v1486 = vld [vmem:[#allocation10 + $0x1f0] sm:$0xff]
    %v1487 = vld [vmem:[#allocation10 + $0x1f8] sm:$0xff]
    %1488 = vmatpush.msra.mxu0 %v1484
    %1489 = vmatpush.msra.mxu0 %v1480
    %1490 = vmatpush.msra.mxu0 %v1476
    %1491 = vmatpush.msra.mxu0 %v1472
    %1492 = vmatpush.msra.mxu0 %v1468
    %1493 = vmatpush.msra.mxu0 %v1464
    %1494 = vmatpush.msra.mxu0 %v1460
    %1495 = vmatpush.msra.mxu0 %v1456
    %1496 = vmatpush.msra.mxu0 %v1452
    %1497 = vmatpush.msra.mxu0 %v1448
    %1498 = vmatpush.msra.mxu0 %v1444
    %1499 = vmatpush.msra.mxu0 %v1440
    %1500 = vmatpush.msra.mxu0 %v1436
    %1501 = vmatpush.msra.mxu0 %v1432
    %1502 = vmatpush.msra.mxu0 %v1428
    %1503 = vmatpush.msra.mxu0 %v1424
    %1504 = vmatmul.f32.gmra.mxu0 %v1423
    %v1505 = vpop.f32.mrf.mxu0
    %v1506 = vadd.f32 0.0, %v1505
    %1507 = vdwg.mxu0
    %1508 = vmatpush.msra.mxu0 %v1485
    %1509 = vmatpush.msra.mxu0 %v1481
    %1510 = vmatpush.msra.mxu0 %v1477
    %1511 = vmatpush.msra.mxu0 %v1473
    %1512 = vmatpush.msra.mxu0 %v1469
    %1513 = vmatpush.msra.mxu0 %v1465
    %1514 = vmatpush.msra.mxu0 %v1461
    %1515 = vmatpush.msra.mxu0 %v1457
    %1516 = vmatpush.msra.mxu0 %v1453
    %1517 = vmatpush.msra.mxu0 %v1449
    %1518 = vmatpush.msra.mxu0 %v1445
    %1519 = vmatpush.msra.mxu0 %v1441
    %1520 = vmatpush.msra.mxu0 %v1437
    %1521 = vmatpush.msra.mxu0 %v1433
    %1522 = vmatpush.msra.mxu0 %v1429
    %1523 = vmatpush.msra.mxu0 %v1425
    %1524 = vmatmul.f32.gmra.mxu0 %v1423
    %v1525 = vpop.f32.mrf.mxu0
    %v1526 = vadd.f32 0.0, %v1525
    %1527 = vdwg.mxu0
    %1528 = vmatpush.msra.mxu0 %v1486
    %1529 = vmatpush.msra.mxu0 %v1482
    %1530 = vmatpush.msra.mxu0 %v1478
    %1531 = vmatpush.msra.mxu0 %v1474
    %1532 = vmatpush.msra.mxu0 %v1470
    %1533 = vmatpush.msra.mxu0 %v1466
    %1534 = vmatpush.msra.mxu0 %v1462
    %1535 = vmatpush.msra.mxu0 %v1458
    %1536 = vmatpush.msra.mxu0 %v1454
    %1537 = vmatpush.msra.mxu0 %v1450
    %1538 = vmatpush.msra.mxu0 %v1446
    %1539 = vmatpush.msra.mxu0 %v1442
    %1540 = vmatpush.msra.mxu0 %v1438
    %1541 = vmatpush.msra.mxu0 %v1434
    %1542 = vmatpush.msra.mxu0 %v1430
    %1543 = vmatpush.msra.mxu0 %v1426
    %1544 = vmatmul.f32.gmra.mxu0 %v1423
    %v1545 = vpop.f32.mrf.mxu0
    %v1546 = vadd.f32 0.0, %v1545
    %1547 = vdwg.mxu0
    %1548 = vmatpush.msra.mxu0 %v1487
    %1549 = vmatpush.msra.mxu0 %v1483
    %1550 = vmatpush.msra.mxu0 %v1479
    %1551 = vmatpush.msra.mxu0 %v1475
    %1552 = vmatpush.msra.mxu0 %v1471
    %1553 = vmatpush.msra.mxu0 %v1467
    %1554 = vmatpush.msra.mxu0 %v1463
    %1555 = vmatpush.msra.mxu0 %v1459
    %1556 = vmatpush.msra.mxu0 %v1455
    %1557 = vmatpush.msra.mxu0 %v1451
    %1558 = vmatpush.msra.mxu0 %v1447
    %1559 = vmatpush.msra.mxu0 %v1443
    %1560 = vmatpush.msra.mxu0 %v1439
    %1561 = vmatpush.msra.mxu0 %v1435
    %1562 = vmatpush.msra.mxu0 %v1431
    %1563 = vmatpush.msra.mxu0 %v1427
    %1564 = vmatmul.f32.gmra.mxu0 %v1423
    %v1565 = vpop.f32.mrf.mxu0
    %v1566 = vadd.f32 0.0, %v1565
    %1567 = vdwg.mxu0
    %v1568 = vadd.f32 %v1419, %v1506
    %v1569 = vadd.f32 %v1420, %v1526
    %v1570 = vadd.f32 %v1421, %v1546
    %v1571 = vadd.f32 %v1422, %v1566
    %v1572 = vxor.u32 %v1568, 2147483648
    %v1573 = vmul.f32 %v1572, 1.442695
    %v1574 = vpow.pop %v1573
    %v1575 = vadd.f32 %v1574, 1.0
    %v1576 = vrcp.pop %v1575
    %v1577 = vmul.f32 %v1575, %v1576
    %v1578 = vsub.f32 1.0, %v1577
    %v1579 = vmul.f32 %v1576, %v1578
    %v1580 = vadd.f32 %v1576, %v1579
    %vm1581 = vweird.f32 %v1575
    %vm1582 = vweird.f32 %v1576
    %vm1583 = vmor %vm1581, %vm1582
    %v1584 = vsel %vm1583, %v1576, %v1580
    %v1585 = vand.u32 2147483647, %v1575
    %vm1586 = vcmp.eq.f32.partialorder %v1585, 8.507059e+37
    %v1587 = vand.u32 %v1575, 2147483648
    %v1588 = vor.u32 1.1754944e-38, %v1587
    %v1589 = vsel %vm1586, %v1588, %v1584
    %v1590 = vmul.f32 1.0, %v1589
    %v1591 = vxor.u32 %v1569, 2147483648
    %v1592 = vmul.f32 %v1591, 1.442695
    %v1593 = vpow.pop %v1592
    %v1594 = vadd.f32 %v1593, 1.0
    %v1595 = vrcp.pop %v1594
    %v1596 = vmul.f32 %v1594, %v1595
    %v1597 = vsub.f32 1.0, %v1596
    %v1598 = vmul.f32 %v1595, %v1597
    %v1599 = vadd.f32 %v1595, %v1598
    %vm1600 = vweird.f32 %v1594
    %vm1601 = vweird.f32 %v1595
    %vm1602 = vmor %vm1600, %vm1601
    %v1603 = vsel %vm1602, %v1595, %v1599
    %v1604 = vand.u32 2147483647, %v1594
    %vm1605 = vcmp.eq.f32.partialorder %v1604, 8.507059e+37
    %v1606 = vand.u32 %v1594, 2147483648
    %v1607 = vor.u32 1.1754944e-38, %v1606
    %v1608 = vsel %vm1605, %v1607, %v1603
    %v1609 = vmul.f32 1.0, %v1608
    %v1610 = vtanh.pop %v1570
    %v1611 = vxor.u32 %v1571, 2147483648
    %v1612 = vmul.f32 %v1611, 1.442695
    %v1613 = vpow.pop %v1612
    %v1614 = vadd.f32 %v1613, 1.0
    %v1615 = vrcp.pop %v1614
    %v1616 = vmul.f32 %v1614, %v1615
    %v1617 = vsub.f32 1.0, %v1616
    %v1618 = vmul.f32 %v1615, %v1617
    %v1619 = vadd.f32 %v1615, %v1618
    %vm1620 = vweird.f32 %v1614
    %vm1621 = vweird.f32 %v1615
    %vm1622 = vmor %vm1620, %vm1621
    %v1623 = vsel %vm1622, %v1615, %v1619
    %v1624 = vand.u32 2147483647, %v1614
    %vm1625 = vcmp.eq.f32.partialorder %v1624, 8.507059e+37
    %v1626 = vand.u32 %v1614, 2147483648
    %v1627 = vor.u32 1.1754944e-38, %v1626
    %v1628 = vsel %vm1625, %v1627, %v1623
    %v1629 = vmul.f32 1.0, %v1628
    %v1630 = vld [vmem:[#allocation3] sm:$0xff]
    %v1631 = vmul.f32 %v1609, %v1630
    %v1632 = vmul.f32 %v1590, %v1610
    %v1633 = vadd.f32 %v1631, %v1632
    %v1634 = vtanh.pop %v1633
    %v1635 = vmul.f32 %v1629, %v1634
    %1636 = vst [vmem:[#allocation2] sm:$0xff] %v1635
    %1637 = vst [vmem:[#allocation3] sm:$0xff] %v1633
    %s1638 = scalar_lea.vmem [#allocation12], 48
    %1639 = vst [vmem:[%s1638] sm:$0xff] %v1635
    %s1640 = scalar_lea.vmem [#allocation4], 224
    %v1641 = vld [vmem:[%s1640] sm:$0xff]
    %v1642 = vld [vmem:[%s1640 + $0x8] sm:$0xff]
    %v1643 = vld [vmem:[%s1640 + $0x10] sm:$0xff]
    %v1644 = vld [vmem:[%s1640 + $0x18] sm:$0xff]
    %v1645 = vld [vmem:[#allocation2] sm:$0xff]
    %v1646 = vld [vmem:[#allocation10] sm:$0xff]
    %v1647 = vld [vmem:[#allocation10 + $0x8] sm:$0xff]
    %v1648 = vld [vmem:[#allocation10 + $0x10] sm:$0xff]
    %v1649 = vld [vmem:[#allocation10 + $0x18] sm:$0xff]
    %v1650 = vld [vmem:[#allocation10 + $0x20] sm:$0xff]
    %v1651 = vld [vmem:[#allocation10 + $0x28] sm:$0xff]
    %v1652 = vld [vmem:[#allocation10 + $0x30] sm:$0xff]
    %v1653 = vld [vmem:[#allocation10 + $0x38] sm:$0xff]
    %v1654 = vld [vmem:[#allocation10 + $0x40] sm:$0xff]
    %v1655 = vld [vmem:[#allocation10 + $0x48] sm:$0xff]
    %v1656 = vld [vmem:[#allocation10 + $0x50] sm:$0xff]
    %v1657 = vld [vmem:[#allocation10 + $0x58] sm:$0xff]
    %v1658 = vld [vmem:[#allocation10 + $0x60] sm:$0xff]
    %v1659 = vld [vmem:[#allocation10 + $0x68] sm:$0xff]
    %v1660 = vld [vmem:[#allocation10 + $0x70] sm:$0xff]
    %v1661 = vld [vmem:[#allocation10 + $0x78] sm:$0xff]
    %v1662 = vld [vmem:[#allocation10 + $0x80] sm:$0xff]
    %v1663 = vld [vmem:[#allocation10 + $0x88] sm:$0xff]
    %v1664 = vld [vmem:[#allocation10 + $0x90] sm:$0xff]
    %v1665 = vld [vmem:[#allocation10 + $0x98] sm:$0xff]
    %v1666 = vld [vmem:[#allocation10 + $0xa0] sm:$0xff]
    %v1667 = vld [vmem:[#allocation10 + $0xa8] sm:$0xff]
    %v1668 = vld [vmem:[#allocation10 + $0xb0] sm:$0xff]
    %v1669 = vld [vmem:[#allocation10 + $0xb8] sm:$0xff]
    %v1670 = vld [vmem:[#allocation10 + $0xc0] sm:$0xff]
    %v1671 = vld [vmem:[#allocation10 + $0xc8] sm:$0xff]
    %v1672 = vld [vmem:[#allocation10 + $0xd0] sm:$0xff]
    %v1673 = vld [vmem:[#allocation10 + $0xd8] sm:$0xff]
    %v1674 = vld [vmem:[#allocation10 + $0xe0] sm:$0xff]
    %v1675 = vld [vmem:[#allocation10 + $0xe8] sm:$0xff]
    %v1676 = vld [vmem:[#allocation10 + $0xf0] sm:$0xff]
    %v1677 = vld [vmem:[#allocation10 + $0xf8] sm:$0xff]
    %v1678 = vld [vmem:[#allocation10 + $0x100] sm:$0xff]
    %v1679 = vld [vmem:[#allocation10 + $0x108] sm:$0xff]
    %v1680 = vld [vmem:[#allocation10 + $0x110] sm:$0xff]
    %v1681 = vld [vmem:[#allocation10 + $0x118] sm:$0xff]
    %v1682 = vld [vmem:[#allocation10 + $0x120] sm:$0xff]
    %v1683 = vld [vmem:[#allocation10 + $0x128] sm:$0xff]
    %v1684 = vld [vmem:[#allocation10 + $0x130] sm:$0xff]
    %v1685 = vld [vmem:[#allocation10 + $0x138] sm:$0xff]
    %v1686 = vld [vmem:[#allocation10 + $0x140] sm:$0xff]
    %v1687 = vld [vmem:[#allocation10 + $0x148] sm:$0xff]
    %v1688 = vld [vmem:[#allocation10 + $0x150] sm:$0xff]
    %v1689 = vld [vmem:[#allocation10 + $0x158] sm:$0xff]
    %v1690 = vld [vmem:[#allocation10 + $0x160] sm:$0xff]
    %v1691 = vld [vmem:[#allocation10 + $0x168] sm:$0xff]
    %v1692 = vld [vmem:[#allocation10 + $0x170] sm:$0xff]
    %v1693 = vld [vmem:[#allocation10 + $0x178] sm:$0xff]
    %v1694 = vld [vmem:[#allocation10 + $0x180] sm:$0xff]
    %v1695 = vld [vmem:[#allocation10 + $0x188] sm:$0xff]
    %v1696 = vld [vmem:[#allocation10 + $0x190] sm:$0xff]
    %v1697 = vld [vmem:[#allocation10 + $0x198] sm:$0xff]
    %v1698 = vld [vmem:[#allocation10 + $0x1a0] sm:$0xff]
    %v1699 = vld [vmem:[#allocation10 + $0x1a8] sm:$0xff]
    %v1700 = vld [vmem:[#allocation10 + $0x1b0] sm:$0xff]
    %v1701 = vld [vmem:[#allocation10 + $0x1b8] sm:$0xff]
    %v1702 = vld [vmem:[#allocation10 + $0x1c0] sm:$0xff]
    %v1703 = vld [vmem:[#allocation10 + $0x1c8] sm:$0xff]
    %v1704 = vld [vmem:[#allocation10 + $0x1d0] sm:$0xff]
    %v1705 = vld [vmem:[#allocation10 + $0x1d8] sm:$0xff]
    %v1706 = vld [vmem:[#allocation10 + $0x1e0] sm:$0xff]
    %v1707 = vld [vmem:[#allocation10 + $0x1e8] sm:$0xff]
    %v1708 = vld [vmem:[#allocation10 + $0x1f0] sm:$0xff]
    %v1709 = vld [vmem:[#allocation10 + $0x1f8] sm:$0xff]
    %1710 = vmatpush.msra.mxu0 %v1706
    %1711 = vmatpush.msra.mxu0 %v1702
    %1712 = vmatpush.msra.mxu0 %v1698
    %1713 = vmatpush.msra.mxu0 %v1694
    %1714 = vmatpush.msra.mxu0 %v1690
    %1715 = vmatpush.msra.mxu0 %v1686
    %1716 = vmatpush.msra.mxu0 %v1682
    %1717 = vmatpush.msra.mxu0 %v1678
    %1718 = vmatpush.msra.mxu0 %v1674
    %1719 = vmatpush.msra.mxu0 %v1670
    %1720 = vmatpush.msra.mxu0 %v1666
    %1721 = vmatpush.msra.mxu0 %v1662
    %1722 = vmatpush.msra.mxu0 %v1658
    %1723 = vmatpush.msra.mxu0 %v1654
    %1724 = vmatpush.msra.mxu0 %v1650
    %1725 = vmatpush.msra.mxu0 %v1646
    %1726 = vmatmul.f32.gmra.mxu0 %v1645
    %v1727 = vpop.f32.mrf.mxu0
    %v1728 = vadd.f32 0.0, %v1727
    %1729 = vdwg.mxu0
    %1730 = vmatpush.msra.mxu0 %v1707
    %1731 = vmatpush.msra.mxu0 %v1703
    %1732 = vmatpush.msra.mxu0 %v1699
    %1733 = vmatpush.msra.mxu0 %v1695
    %1734 = vmatpush.msra.mxu0 %v1691
    %1735 = vmatpush.msra.mxu0 %v1687
    %1736 = vmatpush.msra.mxu0 %v1683
    %1737 = vmatpush.msra.mxu0 %v1679
    %1738 = vmatpush.msra.mxu0 %v1675
    %1739 = vmatpush.msra.mxu0 %v1671
    %1740 = vmatpush.msra.mxu0 %v1667
    %1741 = vmatpush.msra.mxu0 %v1663
    %1742 = vmatpush.msra.mxu0 %v1659
    %1743 = vmatpush.msra.mxu0 %v1655
    %1744 = vmatpush.msra.mxu0 %v1651
    %1745 = vmatpush.msra.mxu0 %v1647
    %1746 = vmatmul.f32.gmra.mxu0 %v1645
    %v1747 = vpop.f32.mrf.mxu0
    %v1748 = vadd.f32 0.0, %v1747
    %1749 = vdwg.mxu0
    %1750 = vmatpush.msra.mxu0 %v1708
    %1751 = vmatpush.msra.mxu0 %v1704
    %1752 = vmatpush.msra.mxu0 %v1700
    %1753 = vmatpush.msra.mxu0 %v1696
    %1754 = vmatpush.msra.mxu0 %v1692
    %1755 = vmatpush.msra.mxu0 %v1688
    %1756 = vmatpush.msra.mxu0 %v1684
    %1757 = vmatpush.msra.mxu0 %v1680
    %1758 = vmatpush.msra.mxu0 %v1676
    %1759 = vmatpush.msra.mxu0 %v1672
    %1760 = vmatpush.msra.mxu0 %v1668
    %1761 = vmatpush.msra.mxu0 %v1664
    %1762 = vmatpush.msra.mxu0 %v1660
    %1763 = vmatpush.msra.mxu0 %v1656
    %1764 = vmatpush.msra.mxu0 %v1652
    %1765 = vmatpush.msra.mxu0 %v1648
    %1766 = vmatmul.f32.gmra.mxu0 %v1645
    %v1767 = vpop.f32.mrf.mxu0
    %v1768 = vadd.f32 0.0, %v1767
    %1769 = vdwg.mxu0
    %1770 = vmatpush.msra.mxu0 %v1709
    %1771 = vmatpush.msra.mxu0 %v1705
    %1772 = vmatpush.msra.mxu0 %v1701
    %1773 = vmatpush.msra.mxu0 %v1697
    %1774 = vmatpush.msra.mxu0 %v1693
    %1775 = vmatpush.msra.mxu0 %v1689
    %1776 = vmatpush.msra.mxu0 %v1685
    %1777 = vmatpush.msra.mxu0 %v1681
    %1778 = vmatpush.msra.mxu0 %v1677
    %1779 = vmatpush.msra.mxu0 %v1673
    %1780 = vmatpush.msra.mxu0 %v1669
    %1781 = vmatpush.msra.mxu0 %v1665
    %1782 = vmatpush.msra.mxu0 %v1661
    %1783 = vmatpush.msra.mxu0 %v1657
    %1784 = vmatpush.msra.mxu0 %v1653
    %1785 = vmatpush.msra.mxu0 %v1649
    %1786 = vmatmul.f32.gmra.mxu0 %v1645
    %v1787 = vpop.f32.mrf.mxu0
    %v1788 = vadd.f32 0.0, %v1787
    %1789 = vdwg.mxu0
    %v1790 = vadd.f32 %v1641, %v1728
    %v1791 = vadd.f32 %v1642, %v1748
    %v1792 = vadd.f32 %v1643, %v1768
    %v1793 = vadd.f32 %v1644, %v1788
    %v1794 = vxor.u32 %v1790, 2147483648
    %v1795 = vmul.f32 %v1794, 1.442695
    %v1796 = vpow.pop %v1795
    %v1797 = vadd.f32 %v1796, 1.0
    %v1798 = vrcp.pop %v1797
    %v1799 = vmul.f32 %v1797, %v1798
    %v1800 = vsub.f32 1.0, %v1799
    %v1801 = vmul.f32 %v1798, %v1800
    %v1802 = vadd.f32 %v1798, %v1801
    %vm1803 = vweird.f32 %v1797
    %vm1804 = vweird.f32 %v1798
    %vm1805 = vmor %vm1803, %vm1804
    %v1806 = vsel %vm1805, %v1798, %v1802
    %v1807 = vand.u32 2147483647, %v1797
    %vm1808 = vcmp.eq.f32.partialorder %v1807, 8.507059e+37
    %v1809 = vand.u32 %v1797, 2147483648
    %v1810 = vor.u32 1.1754944e-38, %v1809
    %v1811 = vsel %vm1808, %v1810, %v1806
    %v1812 = vmul.f32 1.0, %v1811
    %v1813 = vxor.u32 %v1791, 2147483648
    %v1814 = vmul.f32 %v1813, 1.442695
    %v1815 = vpow.pop %v1814
    %v1816 = vadd.f32 %v1815, 1.0
    %v1817 = vrcp.pop %v1816
    %v1818 = vmul.f32 %v1816, %v1817
    %v1819 = vsub.f32 1.0, %v1818
    %v1820 = vmul.f32 %v1817, %v1819
    %v1821 = vadd.f32 %v1817, %v1820
    %vm1822 = vweird.f32 %v1816
    %vm1823 = vweird.f32 %v1817
    %vm1824 = vmor %vm1822, %vm1823
    %v1825 = vsel %vm1824, %v1817, %v1821
    %v1826 = vand.u32 2147483647, %v1816
    %vm1827 = vcmp.eq.f32.partialorder %v1826, 8.507059e+37
    %v1828 = vand.u32 %v1816, 2147483648
    %v1829 = vor.u32 1.1754944e-38, %v1828
    %v1830 = vsel %vm1827, %v1829, %v1825
    %v1831 = vmul.f32 1.0, %v1830
    %v1832 = vtanh.pop %v1792
    %v1833 = vxor.u32 %v1793, 2147483648
    %v1834 = vmul.f32 %v1833, 1.442695
    %v1835 = vpow.pop %v1834
    %v1836 = vadd.f32 %v1835, 1.0
    %v1837 = vrcp.pop %v1836
    %v1838 = vmul.f32 %v1836, %v1837
    %v1839 = vsub.f32 1.0, %v1838
    %v1840 = vmul.f32 %v1837, %v1839
    %v1841 = vadd.f32 %v1837, %v1840
    %vm1842 = vweird.f32 %v1836
    %vm1843 = vweird.f32 %v1837
    %vm1844 = vmor %vm1842, %vm1843
    %v1845 = vsel %vm1844, %v1837, %v1841
    %v1846 = vand.u32 2147483647, %v1836
    %vm1847 = vcmp.eq.f32.partialorder %v1846, 8.507059e+37
    %v1848 = vand.u32 %v1836, 2147483648
    %v1849 = vor.u32 1.1754944e-38, %v1848
    %v1850 = vsel %vm1847, %v1849, %v1845
    %v1851 = vmul.f32 1.0, %v1850
    %v1852 = vld [vmem:[#allocation3] sm:$0xff]
    %v1853 = vmul.f32 %v1831, %v1852
    %v1854 = vmul.f32 %v1812, %v1832
    %v1855 = vadd.f32 %v1853, %v1854
    %v1856 = vtanh.pop %v1855
    %v1857 = vmul.f32 %v1851, %v1856
    %1858 = vst [vmem:[#allocation2] sm:$0xff] %v1857
    %1859 = vst [vmem:[#allocation3] sm:$0xff] %v1855
    %s1860 = scalar_lea.vmem [#allocation12], 56
    %1861 = vst [vmem:[%s1860] sm:$0xff] %v1857
    // Predicated region
    $region38: #{tpu_custom_call.1} parent=1 // pred_check
      %p1862 = pneg %p80
    $region39: #{tpu_custom_call.1} parent=1 // pred_check_branch
      %1864 = sbr.rel (%p1862) target = $region41
    $region40: #{tpu_custom_call.1} parent=1 // pred_region
      %v1865 = vld [vmem:[#allocation3] sm:$0xff]
      %1866 = vst [vmem:[#allocation13] sm:$0xff] %v1865
    $region41: #{tpu_custom_call.1} parent=1 // pred_fallthru
      _
    // Predicated region
    $region42: #{tpu_custom_call.1} parent=1 // pred_check
      _
    $region43: #{tpu_custom_call.1} parent=1 // pred_check_branch
      %1868 = sbr.rel (0) target = $region45
    $region44: #{tpu_custom_call.1} parent=1 // pred_region
      %1870 = vsyncadd [#allocation6], 0
      %s1871 = sshll.u32 [#allocation12], 4
      %s1872 = int_to_ptr.vmem [resolvable:$true] %s1871
      %s1873 = sshll.u32 %s4, 4
      %s1874 = int_to_ptr.hbm [resolvable:$true] %s1873
      %1879 = dma.vmem_to_hbm [thread:$0]  %s1872, 1024, %s1874, [#allocation6], 128, 128, 8
    $region45: #{tpu_custom_call.1} parent=1 // pred_fallthru
      _
    // Predicated region
    $region46: #{tpu_custom_call.1} parent=1 // pred_check
      _
    $region47: #{tpu_custom_call.1} parent=1 // pred_check_branch
      %1881 = sbr.rel (0) target = $region49
    $region48: #{tpu_custom_call.1} parent=1 // pred_region
      %1883 = vsyncadd [#allocation14], 0
      %s1885 = sshll.u32 [#allocation13], 4
      %s1886 = int_to_ptr.vmem [resolvable:$true] %s1885
      %s1887 = sshll.u32 %s5, 4
      %s1888 = int_to_ptr.hbm [resolvable:$true] %s1887
      %1890 = dma.vmem_to_hbm [thread:$0]  %s1886, 128, %s1888, [#allocation14]
    $region49: #{tpu_custom_call.1} parent=1 // pred_fallthru
      _
    // Predicated region
    $region50: #{tpu_custom_call.1} parent=1 // pred_check
      _
    $region51: #{tpu_custom_call.1} parent=1 // pred_check_branch
      %1892 = sbr.rel (0) target = $region53
    $region52: #{tpu_custom_call.1} parent=1 // pred_region
      %1894 = dma.done [#allocation6], 1024
    $region53: #{tpu_custom_call.1} parent=1 // pred_fallthru
      _
    // Predicated region
    $region54: #{tpu_custom_call.1} parent=1 // pred_check
      _
    $region55: #{tpu_custom_call.1} parent=1 // pred_check_branch
      %1896 = sbr.rel (0) target = $region57
    $region56: #{tpu_custom_call.1} parent=1 // pred_region
      %1898 = dma.done [#allocation14], 128
    $region57: #{tpu_custom_call.1} parent=1 // pred_fallthru
      _
    %1899 = vsyncpa [#allocation5], 1
    %1900 = vsyncpa [#allocation8], 1
    %1901 = vsyncpa [#allocation11], 1
    %1902 = vsyncpa [#allocation6], 1
    %1903 = vsyncpa [#allocation14], 1

</llo_original>
